<compile_context>
chip_gen: v5e
topology: v5e:2x2
jax: 0.10.0
libtpu: 0.0.40
codegen_flags: <defaults>
</compile_context>

<pallas_src>
import math
import jax
import jax.numpy as jnp
from jax import lax
from jax.experimental import pallas as pl
from jax.experimental.pallas import tpu as pltpu

# ---- synthetic stand-in for the external `pragmas` module ----
CATEGORICAL_SPACE = ["PIPELINE", "PARALLEL"]
INTEGER_SPACE = ["TILE", "UNROLL"]
MX_RANGE = {"TILE": 16, "UNROLL": 8}

# ---- small-but-consistent hyperparameters (defaults scaled down) ----
EMBED = 128            # embed_size            (768 in the module)
KEY_EMBED = 64         # key_embed_size        (512)
VAL_EMBED = 64         # val_embed_size        (256); KEY_EMBED + VAL_EMBED == EMBED
N_HEADS = 4            # n_heads               (8)
HEAD_DIM = EMBED // N_HEADS
FFN = 256              # hidden_size / dim_feedforward (512)
N_LAYERS = 2           # num_layers            (4)
N_OUT = 7              # n_outputs
LN_EPS = 1e-5
NEG_INF = -1e30

BATCH_TILE = 16        # sequences per grid step (multiple of 8; TB*S >= 128 rows)
DEC_LANES = 128        # lane-dense decoder output width (sliced to N_OUT outside)


# ======================= fused Pallas kernel =======================

def fused_encoder_decoder_kernel(
        x_ref, mask_ref,
        wqkv_ref, bqkv_ref, wo_ref, bo_ref, g1_ref, be1_ref,
        w1_ref, bf1_ref, w2_ref, bf2_ref, g2_ref, be2_ref,
        decw_ref, decb_ref,
        dec_ref,
        h_ref):
    """grid = (batch_tile, layer).  One TransformerEncoderLayer over a
    (TB*S, E) activation slab per step; the activation is resident in VMEM
    scratch `h_ref`; the token-0 Linear decoder runs under
    pl.when(layer == last) (output block index is constant across the layer
    axis, so only the final write is flushed to HBM)."""
    l = pl.program_id(1)
    n_layers = pl.num_programs(1)

    # ---- load the input slab into the resident activation at layer 0 ----
    @pl.when(l == 0)
    def _():
        h_ref[...] = x_ref[...]

    M, E = h_ref.shape                 # M = TB * S
    TB = dec_ref.shape[0]
    S = M // TB
    H, D = N_HEADS, HEAD_DIM

    x = h_ref[...]                     # (M, E) f32
    x_bf = x.astype(jnp.bfloat16)

    # ---- fused QKV projection: one lane-dense (M,E)x(E,3E) matmul ----
    # wqkv / bqkv already carry the 1/sqrt(head_dim) scale on the q columns.
    qkv = jnp.dot(x_bf, wqkv_ref[0],
                  preferred_element_type=jnp.float32) + bqkv_ref[0]   # (M, 3E) f32
    qkv_bf = qkv.astype(jnp.bfloat16)                                 # single cast

    # Block-diagonal (same-sequence) + key-padding additive mask, (M, M).
    mask = mask_ref[0]

    # ---- per-head attention over the flattened slab (tiny compute; the big
    #      matmuls stay lane/row dense).  approx reciprocal: ~2^-12 rel err,
    #      fine for inference vs the PyTorch softmax. ----
    ctx_parts = []
    for h in range(H):
        qh = qkv_bf[:, h * D:(h + 1) * D]                  # (M, D)
        kh = qkv_bf[:, E + h * D:E + (h + 1) * D]
        vh = qkv_bf[:, 2 * E + h * D:2 * E + (h + 1) * D]
        s = jnp.einsum('md,nd->mn', qh, kh,
                       preferred_element_type=jnp.float32)            # (M, M) f32
        s = s + mask
        s = s - jnp.max(s, axis=-1, keepdims=True)
        p = jnp.exp(s)
        p = p * pl.reciprocal(jnp.sum(p, axis=-1, keepdims=True), approx=True)
        ctx_parts.append(jnp.dot(p.astype(jnp.bfloat16), vh,
                                 preferred_element_type=jnp.float32))  # (M, D)
    ctx = jnp.concatenate(ctx_parts, axis=-1)              # (M, E), head-major lanes

    # ---- fused out-projection: one K=128 matmul (wo rows are head-major) ----
    attn = jnp.dot(ctx.astype(jnp.bfloat16), wo_ref[0],
                   preferred_element_type=jnp.float32) + bo_ref[0]     # (M, E)

    # ---- residual + LayerNorm1 (post-norm, f32) ----
    h1 = x + attn
    mu1 = jnp.mean(h1, axis=-1, keepdims=True)
    var1 = jnp.mean(jnp.square(h1 - mu1), axis=-1, keepdims=True)
    h1 = (h1 - mu1) * lax.rsqrt(var1 + LN_EPS) * g1_ref[0] + be1_ref[0]

    # ---- feed-forward (Linear -> ReLU -> Linear), bf16 on the MXU ----
    f = jnp.dot(h1.astype(jnp.bfloat16), w1_ref[0],
                preferred_element_type=jnp.float32) + bf1_ref[0]
    f = jnp.maximum(f, 0.0)
    f = jnp.dot(f.astype(jnp.bfloat16), w2_ref[0],
                preferred_element_type=jnp.float32) + bf2_ref[0]

    # ---- residual + LayerNorm2 ----
    h2 = h1 + f
    mu2 = jnp.mean(h2, axis=-1, keepdims=True)
    var2 = jnp.mean(jnp.square(h2 - mu2), axis=-1, keepdims=True)
    h2 = (h2 - mu2) * lax.rsqrt(var2 + LN_EPS) * g2_ref[0] + be2_ref[0]

    h_ref[...] = h2

    # ---- fused decoder: gather token-0 rows (strided load), one (TB,128)x
    #      (128,128) matmul, one sublane-/lane-dense (TB,128) store ----
    @pl.when(l == n_layers - 1)
    def _():
        tok0 = h_ref[pl.ds(0, TB, stride=S), :]            # (TB, E) token-0 rows
        dec = jnp.dot(tok0.astype(jnp.bfloat16), decw_ref[...],
                      preferred_element_type=jnp.float32) + decb_ref[...]
        dec_ref[...] = dec


# ======================= pallas_call wrapper =======================

def run_fused_model(x_flat, mask_blk, fp, *, batch_tile=BATCH_TILE):
    NB, M, _ = mask_blk.shape          # NB batch tiles, M = TB * S rows per tile
    TB = batch_tile
    E = EMBED
    L = fp["wqkv"].shape[0]
    F = fp["w1"].shape[2]

    def per_layer(shape):              # weights streamed once per (tile, layer)
        return pl.BlockSpec(shape, lambda b, l: (l,) + (0,) * (len(shape) - 1))

    def shared(shape):                 # layer-independent (decoder)
        return pl.BlockSpec(shape, lambda b, l: (0,) * len(shape))

    in_specs = [
        pl.BlockSpec((M, E), lambda b, l: (b, 0)),        # x slab for batch tile b
        pl.BlockSpec((1, M, M), lambda b, l: (b, 0, 0)),  # block-diag + padding mask
        per_layer((1, E, 3 * E)),   # wqkv (q columns pre-scaled), bf16
        per_layer((1, 1, 3 * E)),   # bqkv (q part pre-scaled)
        per_layer((1, E, E)),       # wo (rows head-major)
        per_layer((1, 1, E)),       # bo
        per_layer((1, 1, E)),       # ln1 gamma
        per_layer((1, 1, E)),       # ln1 beta
        per_layer((1, E, F)),       # ffn w1
        per_layer((1, 1, F)),       # ffn b1
        per_layer((1, F, E)),       # ffn w2
        per_layer((1, 1, E)),       # ffn b2
        per_layer((1, 1, E)),       # ln2 gamma
        per_layer((1, 1, E)),       # ln2 beta
        shared((E, DEC_LANES)),     # decoder weight (lane-padded)
        shared((1, DEC_LANES)),     # decoder bias   (lane-padded)
    ]

    out = pl.pallas_call(
        fused_encoder_decoder_kernel,
        out_shape=jax.ShapeDtypeStruct((NB * TB, DEC_LANES), jnp.float32),
        grid_spec=pltpu.PrefetchScalarGridSpec(
            num_scalar_prefetch=0,
            grid=(NB, L),
            in_specs=in_specs,
            out_specs=pl.BlockSpec((TB, DEC_LANES), lambda b, l: (b, 0)),
            scratch_shapes=[pltpu.VMEM((M, E), jnp.float32)],
        ),
        # Batch axis "parallel": with >=2 batch tiles this shards across the
        # two v7x TensorCores; layer axis is a sequential reduction-like carry.
        compiler_params=pltpu.CompilerParams(
            dimension_semantics=("parallel", "arbitrary")),
    )(x_flat, mask_blk,
      fp["wqkv"], fp["bqkv"], fp["wo"], fp["bo"], fp["g1"], fp["be1"],
      fp["w1"], fp["bf1"], fp["w2"], fp["bf2"], fp["g2"], fp["be2"],
      fp["dec_w"], fp["dec_b"])

    return out


# ======================= deterministic parameter init =======================

def init_params(key):
    ks = iter(jax.random.split(key, 64))
    scale = 0.02

    def nrm(shape):
        return jax.random.normal(next(ks), shape, jnp.float32) * scale

    layers = []
    for _ in range(N_LAYERS):
        layers.append({
            "wqkv": nrm((EMBED, 3 * EMBED)),   # columns = [q | k | v], head-major
            "bqkv": jnp.zeros((1, 3 * EMBED), jnp.float32),
            "wo":   nrm((EMBED, EMBED)),       # rows head-major (out_proj.weight.T)
            "bo":   jnp.zeros((1, EMBED), jnp.float32),
            "g1":   jnp.ones((1, EMBED), jnp.float32),
            "be1":  jnp.zeros((1, EMBED), jnp.float32),
            "w1":   nrm((EMBED, FFN)),
            "bf1":  jnp.zeros((1, FFN), jnp.float32),
            "w2":   nrm((FFN, EMBED)),
            "bf2":  jnp.zeros((1, EMBED), jnp.float32),
            "g2":   jnp.ones((1, EMBED), jnp.float32),
            "be2":  jnp.zeros((1, EMBED), jnp.float32),
        })

    # kaiming_uniform_ on an (n,1) tensor with a=sqrt(5) -> U(-1, 1)
    def kaiming_emb(size):
        return jax.random.uniform(next(ks), (size,), jnp.float32, -1.0, 1.0)

    cat_table = {f"{label}_{value}": kaiming_emb(EMBED)
                 for label in CATEGORICAL_SPACE for value in ["", "off", "flatten"]}
    reg_table = {label: kaiming_emb(KEY_EMBED) for label in INTEGER_SPACE}
    # Periodic(1, n=VAL_EMBED//2) coefficients (module uses sigma=0.0; small
    # nonzero normal init keeps the encoder non-degenerate).
    periodic = {label: jax.random.normal(next(ks), (VAL_EMBED // 2,), jnp.float32)
                for label in INTEGER_SPACE}

    return {
        "layers": layers,
        "dec_w": nrm((EMBED, N_OUT)),
        "dec_b": jnp.zeros((1, N_OUT), jnp.float32),
        "cat_table": cat_table,
        "reg_table": reg_table,
        "periodic": periodic,
    }


def prepare_fused_params(params):
    """One-time weight repack: stack layers, keep QKV fused as (E, 3E), fold the
    1/sqrt(head_dim) scale into the q columns/bias, cast matmul weights to bf16,
    lane-pad the decoder to 128 output lanes."""
    scale = 1.0 / math.sqrt(HEAD_DIM)
    bf16 = jnp.bfloat16

    def stack(name):
        return jnp.stack([lp[name] for lp in params["layers"]])

    wqkv = stack("wqkv")                  # (L, E, 3E)
    bqkv = stack("bqkv")                  # (L, 1, 3E)
    q_scale = jnp.concatenate([jnp.full((EMBED,), scale, jnp.float32),
                               jnp.ones((2 * EMBED,), jnp.float32)])
    wqkv = wqkv * q_scale[None, None, :]
    bqkv = bqkv * q_scale[None, None, :]

    dec_w = jnp.zeros((EMBED, DEC_LANES), jnp.float32).at[:, :N_OUT].set(params["dec_w"])
    dec_b = jnp.zeros((1, DEC_LANES), jnp.float32).at[:, :N_OUT].set(params["dec_b"])

    return {
        "wqkv": wqkv.astype(bf16), "bqkv": bqkv,
        "wo": stack("wo").astype(bf16), "bo": stack("bo"),
        "g1": stack("g1"), "be1": stack("be1"),
        "w1": stack("w1").astype(bf16), "bf1": stack("bf1"),
        "w2": stack("w2").astype(bf16), "bf2": stack("bf2"),
        "g2": stack("g2"), "be2": stack("be2"),
        "dec_w": dec_w.astype(bf16), "dec_b": dec_b,
    }


# ======================= plain-JAX glue (embedding build / padding / masks) =======================

def build_embeddings(X_batch, params):
    embeddings_batch = []
    for X in X_batch:
        embeddings = []
        for key, item in X.items():
            if item == "" or item is None:
                continue
            if item == "NA":
                item = ""
            if key in CATEGORICAL_SPACE and item in ["off", "flatten", ""]:
                embeddings.append(params["cat_table"][f"{key}_{item}"])
            elif key in INTEGER_SPACE:
                scaled_value = (int(item) - 1) / MX_RANGE[key]
                xval = float(int(scaled_value))          # mirrors torch.tensor(int(...))
                c = params["periodic"][key]
                v = 2.0 * math.pi * c * xval
                value_embedding = jnp.concatenate([jnp.cos(v), jnp.sin(v)])  # (VAL_EMBED,)
                embeddings.append(jnp.concatenate([params["reg_table"][key],
                                                   value_embedding]))
            else:
                raise ValueError(f"Unknown Target {key} value: {item}")
        if len(embeddings) > 0:
            embeddings_batch.append(jnp.stack(embeddings))
    return embeddings_batch


def pad_and_mask(batch, max_len, batch_tile=BATCH_TILE):
    """Pad sequences to S (multiple of 8), pad the batch to a multiple of the
    batch tile, flatten to a (B_pad*S, E) slab and build the per-tile
    (M, M) additive mask = block-diagonal (same sequence) AND valid key.
    Padded rows/sequences are fully masked as keys and only token 0 of each
    real sequence is ever read, so results are unchanged."""
    B = len(batch)
    S = max(8, ((max_len + 7) // 8) * 8)
    TB = batch_tile
    NB = -(-B // TB)
    B_pad = NB * TB
    M = TB * S

    x = jnp.zeros((B_pad, S, EMBED), jnp.float32)
    key_valid = jnp.zeros((B_pad, S), bool)
    for i, emb in enumerate(batch):
        Lr = emb.shape[0]
        x = x.at[i, :Lr].set(emb)
        key_valid = key_valid.at[i, :Lr].set(True)

    x_flat = x.reshape(B_pad * S, EMBED)

    seq_id = jnp.arange(M) // S
    same_seq = seq_id[:, None] == seq_id[None, :]                     # (M, M)
    kv = key_valid.reshape(NB, M)                                     # (NB, M)
    mask_blk = jnp.where(same_seq[None, :, :] & kv[:, None, :],
                         0.0, NEG_INF).astype(jnp.float32)            # (NB, M, M)
    return x_flat, mask_blk, B


def forward(X_batch, params, fused, batch_tile=BATCH_TILE):
    embeddings_batch = build_embeddings(X_batch, params)
    max_len = max(e.shape[0] for e in embeddings_batch)
    x_flat, mask_blk, B = pad_and_mask(embeddings_batch, max_len, batch_tile)
    dec_out = run_fused_model(x_flat, mask_blk, fused, batch_tile=batch_tile)
    dec_out = dec_out[:B, :N_OUT]
    # torch.squeeze(dec_out, 0) — only squeezes if batch == 1
    if dec_out.shape[0] == 1:
        dec_out = jnp.squeeze(dec_out, 0)
    return dec_out


# ======================= demo =======================

if __name__ == "__main__":
    params = init_params(jax.random.PRNGKey(0))
    fused = prepare_fused_params(params)

    # TODO(synk): dropout inside TransformerEncoderLayer is treated as identity (inference mode).
    X_batch = [
        {"PIPELINE": "off", "TILE": 4, "UNROLL": 2},
        {"PIPELINE": "flatten", "PARALLEL": "NA", "TILE": 8, "UNROLL": ""},
    ]

    pred = forward(X_batch, params, fused)
    pred = jax.block_until_ready(pred)
    assert pred.shape == (2, N_OUT)
    assert bool(jnp.all(jnp.isfinite(pred)))
    print("KERNEL_OK")
</pallas_src>

<mosaic_0001>
module attributes {stable_mosaic.version = 11 : i64} {
  func.func @fused_encoder_decoder_kernel(%arg0: i32, %arg1: i32, %arg2: memref<128x128xf32, #tpu.memory_space<vmem>>, %arg3: memref<1x128x128xf32, #tpu.memory_space<vmem>>, %arg4: memref<1x128x384xbf16, #tpu.memory_space<vmem>>, %arg5: memref<1x1x384xf32, #tpu.memory_space<vmem>>, %arg6: memref<1x128x128xbf16, #tpu.memory_space<vmem>>, %arg7: memref<1x1x128xf32, #tpu.memory_space<vmem>>, %arg8: memref<1x1x128xf32, #tpu.memory_space<vmem>>, %arg9: memref<1x1x128xf32, #tpu.memory_space<vmem>>, %arg10: memref<1x128x256xbf16, #tpu.memory_space<vmem>>, %arg11: memref<1x1x256xf32, #tpu.memory_space<vmem>>, %arg12: memref<1x256x128xbf16, #tpu.memory_space<vmem>>, %arg13: memref<1x1x128xf32, #tpu.memory_space<vmem>>, %arg14: memref<1x1x128xf32, #tpu.memory_space<vmem>>, %arg15: memref<1x1x128xf32, #tpu.memory_space<vmem>>, %arg16: memref<128x128xbf16, #tpu.memory_space<vmem>>, %arg17: memref<1x128xf32, #tpu.memory_space<vmem>>, %arg18: memref<16x128xf32, #tpu.memory_space<vmem>>, %arg19: memref<128x128xf32, #tpu.memory_space<vmem>>) attributes {dimension_semantics = [#tpu.dimension_semantics<parallel>, #tpu.dimension_semantics<arbitrary>], iteration_bounds = array<i64: 1, 2>, scalar_prefetch = 0 : i64, scratch_operands = 1 : i64, tpu.core_type = #tpu.core_type<tc>, window_params = [{transform_indices = @transform_0, window_bounds = array<i64: 128, 128>}, {transform_indices = @transform_1, window_bounds = array<i64: 1, 128, 128>}, {transform_indices = @transform_2, window_bounds = array<i64: 1, 128, 384>}, {transform_indices = @transform_3, window_bounds = array<i64: 1, 1, 384>}, {transform_indices = @transform_4, window_bounds = array<i64: 1, 128, 128>}, {transform_indices = @transform_5, window_bounds = array<i64: 1, 1, 128>}, {transform_indices = @transform_6, window_bounds = array<i64: 1, 1, 128>}, {transform_indices = @transform_7, window_bounds = array<i64: 1, 1, 128>}, {transform_indices = @transform_8, window_bounds = array<i64: 1, 128, 256>}, {transform_indices = @transform_9, window_bounds = array<i64: 1, 1, 256>}, {transform_indices = @transform_10, window_bounds = array<i64: 1, 256, 128>}, {transform_indices = @transform_11, window_bounds = array<i64: 1, 1, 128>}, {transform_indices = @transform_12, window_bounds = array<i64: 1, 1, 128>}, {transform_indices = @transform_13, window_bounds = array<i64: 1, 1, 128>}, {pipeline_mode = #tpu.pipeline_mode<synchronous>, transform_indices = @transform_14, window_bounds = array<i64: 128, 128>}, {pipeline_mode = #tpu.pipeline_mode<synchronous>, transform_indices = @transform_15, window_bounds = array<i64: 1, 128>}, {transform_indices = @transform_16, window_bounds = array<i64: 16, 128>}]} {
    %c0_i32 = arith.constant 0 : i32
    %0 = arith.cmpi eq, %arg1, %c0_i32 : i32
    %1 = arith.extui %0 : i1 to i32
    %c0_i32_0 = arith.constant 0 : i32
    %2 = arith.cmpi ne, %1, %c0_i32_0 : i32
    scf.if %2 {
      %c0_74 = arith.constant 0 : index
      %c0_75 = arith.constant 0 : index
      %168 = vector.load %arg2[%c0_74, %c0_75] : memref<128x128xf32, #tpu.memory_space<vmem>>, vector<128x128xf32>
      %c0_76 = arith.constant 0 : index
      %c0_77 = arith.constant 0 : index
      %169 = vector.load %arg19[%c0_76, %c0_77] : memref<128x128xf32, #tpu.memory_space<vmem>>, vector<128x128xf32>
      tpu.vector_store %arg19[%c0_76, %c0_77], %168 {strides = array<i32>} : memref<128x128xf32, #tpu.memory_space<vmem>>, vector<128x128xf32>,
    } else {
    }
    %c0 = arith.constant 0 : index
    %c0_1 = arith.constant 0 : index
    %3 = vector.load %arg19[%c0, %c0_1] : memref<128x128xf32, #tpu.memory_space<vmem>>, vector<128x128xf32>
    %4 = arith.truncf %3 : vector<128x128xf32> to vector<128x128xbf16>
    %c0_2 = arith.constant 0 : index
    %c0_3 = arith.constant 0 : index
    %c0_4 = arith.constant 0 : index
    %5 = vector.load %arg4[%c0_2, %c0_3, %c0_4] : memref<1x128x384xbf16, #tpu.memory_space<vmem>>, vector<1x128x384xbf16>
    %6 = vector.shape_cast %5 : vector<1x128x384xbf16> to vector<128x384xbf16>
    %cst = arith.constant dense<0.000000e+00> : vector<128x384xf32>
    %7 = tpu.matmul %4, %6, %cst {dimension_numbers = #tpu.dot_dimension_numbers<[1], [0], [0], [1], [0, 0, 1, 1], [], []>} : vector<128x128xbf16>, vector<128x384xbf16>, vector<128x384xf32> -> vector<128x384xf32>
    %c0_5 = arith.constant 0 : index
    %c0_6 = arith.constant 0 : index
    %c0_7 = arith.constant 0 : index
    %8 = vector.load %arg5[%c0_5, %c0_6, %c0_7] : memref<1x1x384xf32, #tpu.memory_space<vmem>>, vector<1x1x384xf32>
    %9 = vector.shape_cast %8 : vector<1x1x384xf32> to vector<1x384xf32>
    %10 = vector.broadcast %9 : vector<1x384xf32> to vector<128x384xf32>
    %11 = arith.addf %7, %10 : vector<128x384xf32>
    %12 = arith.truncf %11 : vector<128x384xf32> to vector<128x384xbf16>
    %c0_8 = arith.constant 0 : index
    %c0_9 = arith.constant 0 : index
    %c0_10 = arith.constant 0 : index
    %13 = vector.load %arg3[%c0_8, %c0_9, %c0_10] : memref<1x128x128xf32, #tpu.memory_space<vmem>>, vector<1x128x128xf32>
    %14 = vector.shape_cast %13 : vector<1x128x128xf32> to vector<128x128xf32>
    %15 = vector.extract_strided_slice %12 {offsets = [0, 0], sizes = [128, 32], strides = [1, 1]} : vector<128x384xbf16> to vector<128x32xbf16>
    %16 = vector.extract_strided_slice %12 {offsets = [0, 128], sizes = [128, 32], strides = [1, 1]} : vector<128x384xbf16> to vector<128x32xbf16>
    %17 = vector.extract_strided_slice %12 {offsets = [0, 256], sizes = [128, 32], strides = [1, 1]} : vector<128x384xbf16> to vector<128x32xbf16>
    "tpu.trace_start"() <{level = 10 : i32, message = "md,nd->mn"}> : () -> ()
    %cst_11 = arith.constant dense<0.000000e+00> : vector<128x128xf32>
    %18 = tpu.matmul %15, %16, %cst_11 {dimension_numbers = #tpu.dot_dimension_numbers<[1], [1], [0], [0], [0, 0, 1, 0], [], []>} : vector<128x32xbf16>, vector<128x32xbf16>, vector<128x128xf32> -> vector<128x128xf32>
    "tpu.trace_stop"() : () -> ()
    %19 = arith.addf %18, %14 : vector<128x128xf32>
    %cst_12 = arith.constant dense<0xFF800000> : vector<128xf32>
    %20 = vector.multi_reduction <maximumf>, %19, %cst_12 [1] : vector<128x128xf32> to vector<128xf32>
    %21 = vector.shape_cast %20 : vector<128xf32> to vector<128x1xf32>
    %22 = vector.broadcast %21 : vector<128x1xf32> to vector<128x128xf32>
    %23 = arith.subf %19, %22 : vector<128x128xf32>
    %24 = math.exp %23 : vector<128x128xf32>
    %cst_13 = arith.constant dense<0.000000e+00> : vector<128xf32>
    %25 = vector.multi_reduction <add>, %24, %cst_13 [1] : vector<128x128xf32> to vector<128xf32>
    %26 = vector.shape_cast %25 : vector<128xf32> to vector<128x1xf32>
    %27 = tpu.reciprocal %26 {approx = true} : vector<128x1xf32> -> vector<128x1xf32>
    %28 = vector.broadcast %27 : vector<128x1xf32> to vector<128x128xf32>
    %29 = arith.mulf %24, %28 : vector<128x128xf32>
    %30 = arith.truncf %29 : vector<128x128xf32> to vector<128x128xbf16>
    %cst_14 = arith.constant dense<0.000000e+00> : vector<128x32xf32>
    %31 = tpu.matmul %30, %17, %cst_14 {dimension_numbers = #tpu.dot_dimension_numbers<[1], [0], [0], [1], [0, 0, 1, 1], [], []>} : vector<128x128xbf16>, vector<128x32xbf16>, vector<128x32xf32> -> vector<128x32xf32>
    %32 = vector.extract_strided_slice %12 {offsets = [0, 32], sizes = [128, 32], strides = [1, 1]} : vector<128x384xbf16> to vector<128x32xbf16>
    %33 = vector.extract_strided_slice %12 {offsets = [0, 160], sizes = [128, 32], strides = [1, 1]} : vector<128x384xbf16> to vector<128x32xbf16>
    %34 = vector.extract_strided_slice %12 {offsets = [0, 288], sizes = [128, 32], strides = [1, 1]} : vector<128x384xbf16> to vector<128x32xbf16>
    "tpu.trace_start"() <{level = 10 : i32, message = "md,nd->mn"}> : () -> ()
    %cst_15 = arith.constant dense<0.000000e+00> : vector<128x128xf32>
    %35 = tpu.matmul %32, %33, %cst_15 {dimension_numbers = #tpu.dot_dimension_numbers<[1], [1], [0], [0], [0, 0, 1, 0], [], []>} : vector<128x32xbf16>, vector<128x32xbf16>, vector<128x128xf32> -> vector<128x128xf32>
    "tpu.trace_stop"() : () -> ()
    %36 = arith.addf %35, %14 : vector<128x128xf32>
    %cst_16 = arith.constant dense<0xFF800000> : vector<128xf32>
    %37 = vector.multi_reduction <maximumf>, %36, %cst_16 [1] : vector<128x128xf32> to vector<128xf32>
    %38 = vector.shape_cast %37 : vector<128xf32> to vector<128x1xf32>
    %39 = vector.broadcast %38 : vector<128x1xf32> to vector<128x128xf32>
    %40 = arith.subf %36, %39 : vector<128x128xf32>
    %41 = math.exp %40 : vector<128x128xf32>
    %cst_17 = arith.constant dense<0.000000e+00> : vector<128xf32>
    %42 = vector.multi_reduction <add>, %41, %cst_17 [1] : vector<128x128xf32> to vector<128xf32>
    %43 = vector.shape_cast %42 : vector<128xf32> to vector<128x1xf32>
    %44 = tpu.reciprocal %43 {approx = true} : vector<128x1xf32> -> vector<128x1xf32>
    %45 = vector.broadcast %44 : vector<128x1xf32> to vector<128x128xf32>
    %46 = arith.mulf %41, %45 : vector<128x128xf32>
    %47 = arith.truncf %46 : vector<128x128xf32> to vector<128x128xbf16>
    %cst_18 = arith.constant dense<0.000000e+00> : vector<128x32xf32>
    %48 = tpu.matmul %47, %34, %cst_18 {dimension_numbers = #tpu.dot_dimension_numbers<[1], [0], [0], [1], [0, 0, 1, 1], [], []>} : vector<128x128xbf16>, vector<128x32xbf16>, vector<128x32xf32> -> vector<128x32xf32>
    %49 = vector.extract_strided_slice %12 {offsets = [0, 64], sizes = [128, 32], strides = [1, 1]} : vector<128x384xbf16> to vector<128x32xbf16>
    %50 = vector.extract_strided_slice %12 {offsets = [0, 192], sizes = [128, 32], strides = [1, 1]} : vector<128x384xbf16> to vector<128x32xbf16>
    %51 = vector.extract_strided_slice %12 {offsets = [0, 320], sizes = [128, 32], strides = [1, 1]} : vector<128x384xbf16> to vector<128x32xbf16>
    "tpu.trace_start"() <{level = 10 : i32, message = "md,nd->mn"}> : () -> ()
    %cst_19 = arith.constant dense<0.000000e+00> : vector<128x128xf32>
    %52 = tpu.matmul %49, %50, %cst_19 {dimension_numbers = #tpu.dot_dimension_numbers<[1], [1], [0], [0], [0, 0, 1, 0], [], []>} : vector<128x32xbf16>, vector<128x32xbf16>, vector<128x128xf32> -> vector<128x128xf32>
    "tpu.trace_stop"() : () -> ()
    %53 = arith.addf %52, %14 : vector<128x128xf32>
    %cst_20 = arith.constant dense<0xFF800000> : vector<128xf32>
    %54 = vector.multi_reduction <maximumf>, %53, %cst_20 [1] : vector<128x128xf32> to vector<128xf32>
    %55 = vector.shape_cast %54 : vector<128xf32> to vector<128x1xf32>
    %56 = vector.broadcast %55 : vector<128x1xf32> to vector<128x128xf32>
    %57 = arith.subf %53, %56 : vector<128x128xf32>
    %58 = math.exp %57 : vector<128x128xf32>
    %cst_21 = arith.constant dense<0.000000e+00> : vector<128xf32>
    %59 = vector.multi_reduction <add>, %58, %cst_21 [1] : vector<128x128xf32> to vector<128xf32>
    %60 = vector.shape_cast %59 : vector<128xf32> to vector<128x1xf32>
    %61 = tpu.reciprocal %60 {approx = true} : vector<128x1xf32> -> vector<128x1xf32>
    %62 = vector.broadcast %61 : vector<128x1xf32> to vector<128x128xf32>
    %63 = arith.mulf %58, %62 : vector<128x128xf32>
    %64 = arith.truncf %63 : vector<128x128xf32> to vector<128x128xbf16>
    %cst_22 = arith.constant dense<0.000000e+00> : vector<128x32xf32>
    %65 = tpu.matmul %64, %51, %cst_22 {dimension_numbers = #tpu.dot_dimension_numbers<[1], [0], [0], [1], [0, 0, 1, 1], [], []>} : vector<128x128xbf16>, vector<128x32xbf16>, vector<128x32xf32> -> vector<128x32xf32>
    %66 = vector.extract_strided_slice %12 {offsets = [0, 96], sizes = [128, 32], strides = [1, 1]} : vector<128x384xbf16> to vector<128x32xbf16>
    %67 = vector.extract_strided_slice %12 {offsets = [0, 224], sizes = [128, 32], strides = [1, 1]} : vector<128x384xbf16> to vector<128x32xbf16>
    %68 = vector.extract_strided_slice %12 {offsets = [0, 352], sizes = [128, 32], strides = [1, 1]} : vector<128x384xbf16> to vector<128x32xbf16>
    "tpu.trace_start"() <{level = 10 : i32, message = "md,nd->mn"}> : () -> ()
    %cst_23 = arith.constant dense<0.000000e+00> : vector<128x128xf32>
    %69 = tpu.matmul %66, %67, %cst_23 {dimension_numbers = #tpu.dot_dimension_numbers<[1], [1], [0], [0], [0, 0, 1, 0], [], []>} : vector<128x32xbf16>, vector<128x32xbf16>, vector<128x128xf32> -> vector<128x128xf32>
    "tpu.trace_stop"() : () -> ()
    %70 = arith.addf %69, %14 : vector<128x128xf32>
    %cst_24 = arith.constant dense<0xFF800000> : vector<128xf32>
    %71 = vector.multi_reduction <maximumf>, %70, %cst_24 [1] : vector<128x128xf32> to vector<128xf32>
    %72 = vector.shape_cast %71 : vector<128xf32> to vector<128x1xf32>
    %73 = vector.broadcast %72 : vector<128x1xf32> to vector<128x128xf32>
    %74 = arith.subf %70, %73 : vector<128x128xf32>
    %75 = math.exp %74 : vector<128x128xf32>
    %cst_25 = arith.constant dense<0.000000e+00> : vector<128xf32>
    %76 = vector.multi_reduction <add>, %75, %cst_25 [1] : vector<128x128xf32> to vector<128xf32>
    %77 = vector.shape_cast %76 : vector<128xf32> to vector<128x1xf32>
    %78 = tpu.reciprocal %77 {approx = true} : vector<128x1xf32> -> vector<128x1xf32>
    %79 = vector.broadcast %78 : vector<128x1xf32> to vector<128x128xf32>
    %80 = arith.mulf %75, %79 : vector<128x128xf32>
    %81 = arith.truncf %80 : vector<128x128xf32> to vector<128x128xbf16>
    %cst_26 = arith.constant dense<0.000000e+00> : vector<128x32xf32>
    %82 = tpu.matmul %81, %68, %cst_26 {dimension_numbers = #tpu.dot_dimension_numbers<[1], [0], [0], [1], [0, 0, 1, 1], [], []>} : vector<128x128xbf16>, vector<128x32xbf16>, vector<128x32xf32> -> vector<128x32xf32>
    %83 = tpu.concatenate %31, %48, %65, %82 in 1 : vector<128x32xf32>, vector<128x32xf32>, vector<128x32xf32>, vector<128x32xf32> -> vector<128x128xf32>
    %84 = arith.truncf %83 : vector<128x128xf32> to vector<128x128xbf16>
    %c0_27 = arith.constant 0 : index
    %c0_28 = arith.constant 0 : index
    %c0_29 = arith.constant 0 : index
    %85 = vector.load %arg6[%c0_27, %c0_28, %c0_29] : memref<1x128x128xbf16, #tpu.memory_space<vmem>>, vector<1x128x128xbf16>
    %86 = vector.shape_cast %85 : vector<1x128x128xbf16> to vector<128x128xbf16>
    %cst_30 = arith.constant dense<0.000000e+00> : vector<128x128xf32>
    %87 = tpu.matmul %84, %86, %cst_30 {dimension_numbers = #tpu.dot_dimension_numbers<[1], [0], [0], [1], [0, 0, 1, 1], [], []>} : vector<128x128xbf16>, vector<128x128xbf16>, vector<128x128xf32> -> vector<128x128xf32>
    %c0_31 = arith.constant 0 : index
    %c0_32 = arith.constant 0 : index
    %c0_33 = arith.constant 0 : index
    %88 = vector.load %arg7[%c0_31, %c0_32, %c0_33] : memref<1x1x128xf32, #tpu.memory_space<vmem>>, vector<1x1x128xf32>
    %89 = vector.shape_cast %88 : vector<1x1x128xf32> to vector<1x128xf32>
    %90 = vector.broadcast %89 : vector<1x128xf32> to vector<128x128xf32>
    %91 = arith.addf %87, %90 : vector<128x128xf32>
    %92 = arith.addf %3, %91 : vector<128x128xf32>
    %cst_34 = arith.constant dense<0.000000e+00> : vector<128xf32>
    %93 = vector.multi_reduction <add>, %92, %cst_34 [1] : vector<128x128xf32> to vector<128xf32>
    %94 = vector.shape_cast %93 : vector<128xf32> to vector<128x1xf32>
    %cst_35 = arith.constant 1.280000e+02 : f32
    %95 = vector.broadcast %cst_35 : f32 to vector<128x1xf32>
    %96 = arith.divf %94, %95 : vector<128x1xf32>
    %97 = vector.broadcast %96 : vector<128x1xf32> to vector<128x128xf32>
    %98 = arith.subf %92, %97 : vector<128x128xf32>
    %99 = arith.mulf %98, %98 : vector<128x128xf32>
    %cst_36 = arith.constant dense<0.000000e+00> : vector<128xf32>
    %100 = vector.multi_reduction <add>, %99, %cst_36 [1] : vector<128x128xf32> to vector<128xf32>
    %101 = vector.shape_cast %100 : vector<128xf32> to vector<128x1xf32>
    %cst_37 = arith.constant 1.280000e+02 : f32
    %102 = vector.broadcast %cst_37 : f32 to vector<128x1xf32>
    %103 = arith.divf %101, %102 : vector<128x1xf32>
    %104 = vector.broadcast %96 : vector<128x1xf32> to vector<128x128xf32>
    %105 = arith.subf %92, %104 : vector<128x128xf32>
    %cst_38 = arith.constant 9.99999974E-6 : f32
    %106 = vector.broadcast %cst_38 : f32 to vector<128x1xf32>
    %107 = arith.addf %103, %106 : vector<128x1xf32>
    %108 = math.rsqrt %107 : vector<128x1xf32>
    %109 = vector.broadcast %108 : vector<128x1xf32> to vector<128x128xf32>
    %110 = arith.mulf %105, %109 : vector<128x128xf32>
    %c0_39 = arith.constant 0 : index
    %c0_40 = arith.constant 0 : index
    %c0_41 = arith.constant 0 : index
    %111 = vector.load %arg8[%c0_39, %c0_40, %c0_41] : memref<1x1x128xf32, #tpu.memory_space<vmem>>, vector<1x1x128xf32>
    %112 = vector.shape_cast %111 : vector<1x1x128xf32> to vector<1x128xf32>
    %113 = vector.broadcast %112 : vector<1x128xf32> to vector<128x128xf32>
    %114 = arith.mulf %110, %113 : vector<128x128xf32>
    %c0_42 = arith.constant 0 : index
    %c0_43 = arith.constant 0 : index
    %c0_44 = arith.constant 0 : index
    %115 = vector.load %arg9[%c0_42, %c0_43, %c0_44] : memref<1x1x128xf32, #tpu.memory_space<vmem>>, vector<1x1x128xf32>
    %116 = vector.shape_cast %115 : vector<1x1x128xf32> to vector<1x128xf32>
    %117 = vector.broadcast %116 : vector<1x128xf32> to vector<128x128xf32>
    %118 = arith.addf %114, %117 : vector<128x128xf32>
    %119 = arith.truncf %118 : vector<128x128xf32> to vector<128x128xbf16>
    %c0_45 = arith.constant 0 : index
    %c0_46 = arith.constant 0 : index
    %c0_47 = arith.constant 0 : index
    %120 = vector.load %arg10[%c0_45, %c0_46, %c0_47] : memref<1x128x256xbf16, #tpu.memory_space<vmem>>, vector<1x128x256xbf16>
    %121 = vector.shape_cast %120 : vector<1x128x256xbf16> to vector<128x256xbf16>
    %cst_48 = arith.constant dense<0.000000e+00> : vector<128x256xf32>
    %122 = tpu.matmul %119, %121, %cst_48 {dimension_numbers = #tpu.dot_dimension_numbers<[1], [0], [0], [1], [0, 0, 1, 1], [], []>} : vector<128x128xbf16>, vector<128x256xbf16>, vector<128x256xf32> -> vector<128x256xf32>
    %c0_49 = arith.constant 0 : index
    %c0_50 = arith.constant 0 : index
    %c0_51 = arith.constant 0 : index
    %123 = vector.load %arg11[%c0_49, %c0_50, %c0_51] : memref<1x1x256xf32, #tpu.memory_space<vmem>>, vector<1x1x256xf32>
    %124 = vector.shape_cast %123 : vector<1x1x256xf32> to vector<1x256xf32>
    %125 = vector.broadcast %124 : vector<1x256xf32> to vector<128x256xf32>
    %126 = arith.addf %122, %125 : vector<128x256xf32>
    %cst_52 = arith.constant 0.000000e+00 : f32
    %127 = vector.broadcast %cst_52 : f32 to vector<128x256xf32>
    %128 = arith.maximumf %126, %127 : vector<128x256xf32>
    %129 = arith.truncf %128 : vector<128x256xf32> to vector<128x256xbf16>
    %c0_53 = arith.constant 0 : index
    %c0_54 = arith.constant 0 : index
    %c0_55 = arith.constant 0 : index
    %130 = vector.load %arg12[%c0_53, %c0_54, %c0_55] : memref<1x256x128xbf16, #tpu.memory_space<vmem>>, vector<1x256x128xbf16>
    %131 = vector.shape_cast %130 : vector<1x256x128xbf16> to vector<256x128xbf16>
    %cst_56 = arith.constant dense<0.000000e+00> : vector<128x128xf32>
    %132 = tpu.matmul %129, %131, %cst_56 {dimension_numbers = #tpu.dot_dimension_numbers<[1], [0], [0], [1], [0, 0, 1, 1], [], []>} : vector<128x256xbf16>, vector<256x128xbf16>, vector<128x128xf32> -> vector<128x128xf32>
    %c0_57 = arith.constant 0 : index
    %c0_58 = arith.constant 0 : index
    %c0_59 = arith.constant 0 : index
    %133 = vector.load %arg13[%c0_57, %c0_58, %c0_59] : memref<1x1x128xf32, #tpu.memory_space<vmem>>, vector<1x1x128xf32>
    %134 = vector.shape_cast %133 : vector<1x1x128xf32> to vector<1x128xf32>
    %135 = vector.broadcast %134 : vector<1x128xf32> to vector<128x128xf32>
    %136 = arith.addf %132, %135 : vector<128x128xf32>
    %137 = arith.addf %118, %136 : vector<128x128xf32>
    %cst_60 = arith.constant dense<0.000000e+00> : vector<128xf32>
    %138 = vector.multi_reduction <add>, %137, %cst_60 [1] : vector<128x128xf32> to vector<128xf32>
    %139 = vector.shape_cast %138 : vector<128xf32> to vector<128x1xf32>
    %cst_61 = arith.constant 1.280000e+02 : f32
    %140 = vector.broadcast %cst_61 : f32 to vector<128x1xf32>
    %141 = arith.divf %139, %140 : vector<128x1xf32>
    %142 = vector.broadcast %141 : vector<128x1xf32> to vector<128x128xf32>
    %143 = arith.subf %137, %142 : vector<128x128xf32>
    %144 = arith.mulf %143, %143 : vector<128x128xf32>
    %cst_62 = arith.constant dense<0.000000e+00> : vector<128xf32>
    %145 = vector.multi_reduction <add>, %144, %cst_62 [1] : vector<128x128xf32> to vector<128xf32>
    %146 = vector.shape_cast %145 : vector<128xf32> to vector<128x1xf32>
    %cst_63 = arith.constant 1.280000e+02 : f32
    %147 = vector.broadcast %cst_63 : f32 to vector<128x1xf32>
    %148 = arith.divf %146, %147 : vector<128x1xf32>
    %149 = vector.broadcast %141 : vector<128x1xf32> to vector<128x128xf32>
    %150 = arith.subf %137, %149 : vector<128x128xf32>
    %cst_64 = arith.constant 9.99999974E-6 : f32
    %151 = vector.broadcast %cst_64 : f32 to vector<128x1xf32>
    %152 = arith.addf %148, %151 : vector<128x1xf32>
    %153 = math.rsqrt %152 : vector<128x1xf32>
    %154 = vector.broadcast %153 : vector<128x1xf32> to vector<128x128xf32>
    %155 = arith.mulf %150, %154 : vector<128x128xf32>
    %c0_65 = arith.constant 0 : index
    %c0_66 = arith.constant 0 : index
    %c0_67 = arith.constant 0 : index
    %156 = vector.load %arg14[%c0_65, %c0_66, %c0_67] : memref<1x1x128xf32, #tpu.memory_space<vmem>>, vector<1x1x128xf32>
    %157 = vector.shape_cast %156 : vector<1x1x128xf32> to vector<1x128xf32>
    %158 = vector.broadcast %157 : vector<1x128xf32> to vector<128x128xf32>
    %159 = arith.mulf %155, %158 : vector<128x128xf32>
    %c0_68 = arith.constant 0 : index
    %c0_69 = arith.constant 0 : index
    %c0_70 = arith.constant 0 : index
    %160 = vector.load %arg15[%c0_68, %c0_69, %c0_70] : memref<1x1x128xf32, #tpu.memory_space<vmem>>, vector<1x1x128xf32>
    %161 = vector.shape_cast %160 : vector<1x1x128xf32> to vector<1x128xf32>
    %162 = vector.broadcast %161 : vector<1x128xf32> to vector<128x128xf32>
    %163 = arith.addf %159, %162 : vector<128x128xf32>
    %c0_71 = arith.constant 0 : index
    %c0_72 = arith.constant 0 : index
    %164 = vector.load %arg19[%c0_71, %c0_72] : memref<128x128xf32, #tpu.memory_space<vmem>>, vector<128x128xf32>
    tpu.vector_store %arg19[%c0_71, %c0_72], %163 {strides = array<i32>} : memref<128x128xf32, #tpu.memory_space<vmem>>, vector<128x128xf32>,
    %c1_i32 = arith.constant 1 : i32
    %165 = arith.cmpi eq, %arg1, %c1_i32 : i32
    %166 = arith.extui %165 : i1 to i32
    %c0_i32_73 = arith.constant 0 : i32
    %167 = arith.cmpi ne, %166, %c0_i32_73 : i32
    scf.if %167 {
      %c0_74 = arith.constant 0 : index
      %c0_75 = arith.constant 0 : index
      %168 = tpu.strided_load %arg19[%c0_74, %c0_75] {strides = array<i32: 8, 1>} : memref<128x128xf32, #tpu.memory_space<vmem>>, vector<16x128xf32>
      %169 = arith.truncf %168 : vector<16x128xf32> to vector<16x128xbf16>
      %c0_76 = arith.constant 0 : index
      %c0_77 = arith.constant 0 : index
      %170 = vector.load %arg16[%c0_76, %c0_77] : memref<128x128xbf16, #tpu.memory_space<vmem>>, vector<128x128xbf16>
      %cst_78 = arith.constant dense<0.000000e+00> : vector<16x128xf32>
      %171 = tpu.matmul %169, %170, %cst_78 {dimension_numbers = #tpu.dot_dimension_numbers<[1], [0], [0], [1], [0, 0, 1, 1], [], []>} : vector<16x128xbf16>, vector<128x128xbf16>, vector<16x128xf32> -> vector<16x128xf32>
      %c0_79 = arith.constant 0 : index
      %c0_80 = arith.constant 0 : index
      %172 = vector.load %arg17[%c0_79, %c0_80] : memref<1x128xf32, #tpu.memory_space<vmem>>, vector<1x128xf32>
      %173 = vector.broadcast %172 : vector<1x128xf32> to vector<16x128xf32>
      %174 = arith.addf %171, %173 : vector<16x128xf32>
      %c0_81 = arith.constant 0 : index
      %c0_82 = arith.constant 0 : index
      %175 = vector.load %arg18[%c0_81, %c0_82] : memref<16x128xf32, #tpu.memory_space<vmem>>, vector<16x128xf32>
      tpu.vector_store %arg18[%c0_81, %c0_82], %174 {strides = array<i32>} : memref<16x128xf32, #tpu.memory_space<vmem>>, vector<16x128xf32>,
    } else {
    }
    return
  }
  func.func @transform_0(%arg0: i32, %arg1: i32) -> (i32, i32) {
    %c0_i32 = arith.constant 0 : i32
    %c0_i32_0 = arith.constant 0 : i32
    return %arg0, %c0_i32 : i32, i32
  }
  func.func @transform_1(%arg0: i32, %arg1: i32) -> (i32, i32, i32) {
    %c0_i32 = arith.constant 0 : i32
    %c0_i32_0 = arith.constant 0 : i32
    %c0_i32_1 = arith.constant 0 : i32
    return %arg0, %c0_i32, %c0_i32_0 : i32, i32, i32
  }
  func.func @transform_2(%arg0: i32, %arg1: i32) -> (i32, i32, i32) {
    %c0_i32 = arith.constant 0 : i32
    %c0_i32_0 = arith.constant 0 : i32
    %c0_i32_1 = arith.constant 0 : i32
    return %arg1, %c0_i32, %c0_i32_0 : i32, i32, i32
  }
  func.func @transform_3(%arg0: i32, %arg1: i32) -> (i32, i32, i32) {
    %c0_i32 = arith.constant 0 : i32
    %c0_i32_0 = arith.constant 0 : i32
    %c0_i32_1 = arith.constant 0 : i32
    return %arg1, %c0_i32, %c0_i32_0 : i32, i32, i32
  }
  func.func @transform_4(%arg0: i32, %arg1: i32) -> (i32, i32, i32) {
    %c0_i32 = arith.constant 0 : i32
    %c0_i32_0 = arith.constant 0 : i32
    %c0_i32_1 = arith.constant 0 : i32
    return %arg1, %c0_i32, %c0_i32_0 : i32, i32, i32
  }
  func.func @transform_5(%arg0: i32, %arg1: i32) -> (i32, i32, i32) {
    %c0_i32 = arith.constant 0 : i32
    %c0_i32_0 = arith.constant 0 : i32
    %c0_i32_1 = arith.constant 0 : i32
    return %arg1, %c0_i32, %c0_i32_0 : i32, i32, i32
  }
  func.func @transform_6(%arg0: i32, %arg1: i32) -> (i32, i32, i32) {
    %c0_i32 = arith.constant 0 : i32
    %c0_i32_0 = arith.constant 0 : i32
    %c0_i32_1 = arith.constant 0 : i32
    return %arg1, %c0_i32, %c0_i32_0 : i32, i32, i32
  }
  func.func @transform_7(%arg0: i32, %arg1: i32) -> (i32, i32, i32) {
    %c0_i32 = arith.constant 0 : i32
    %c0_i32_0 = arith.constant 0 : i32
    %c0_i32_1 = arith.constant 0 : i32
    return %arg1, %c0_i32, %c0_i32_0 : i32, i32, i32
  }
  func.func @transform_8(%arg0: i32, %arg1: i32) -> (i32, i32, i32) {
    %c0_i32 = arith.constant 0 : i32
    %c0_i32_0 = arith.constant 0 : i32
    %c0_i32_1 = arith.constant 0 : i32
    return %arg1, %c0_i32, %c0_i32_0 : i32, i32, i32
  }
  func.func @transform_9(%arg0: i32, %arg1: i32) -> (i32, i32, i32) {
    %c0_i32 = arith.constant 0 : i32
    %c0_i32_0 = arith.constant 0 : i32
    %c0_i32_1 = arith.constant 0 : i32
    return %arg1, %c0_i32, %c0_i32_0 : i32, i32, i32
  }
  func.func @transform_10(%arg0: i32, %arg1: i32) -> (i32, i32, i32) {
    %c0_i32 = arith.constant 0 : i32
    %c0_i32_0 = arith.constant 0 : i32
    %c0_i32_1 = arith.constant 0 : i32
    return %arg1, %c0_i32, %c0_i32_0 : i32, i32, i32
  }
  func.func @transform_11(%arg0: i32, %arg1: i32) -> (i32, i32, i32) {
    %c0_i32 = arith.constant 0 : i32
    %c0_i32_0 = arith.constant 0 : i32
    %c0_i32_1 = arith.constant 0 : i32
    return %arg1, %c0_i32, %c0_i32_0 : i32, i32, i32
  }
  func.func @transform_12(%arg0: i32, %arg1: i32) -> (i32, i32, i32) {
    %c0_i32 = arith.constant 0 : i32
    %c0_i32_0 = arith.constant 0 : i32
    %c0_i32_1 = arith.constant 0 : i32
    return %arg1, %c0_i32, %c0_i32_0 : i32, i32, i32
  }
  func.func @transform_13(%arg0: i32, %arg1: i32) -> (i32, i32, i32) {
    %c0_i32 = arith.constant 0 : i32
    %c0_i32_0 = arith.constant 0 : i32
    %c0_i32_1 = arith.constant 0 : i32
    return %arg1, %c0_i32, %c0_i32_0 : i32, i32, i32
  }
  func.func @transform_14(%arg0: i32, %arg1: i32) -> (i32, i32) {
    %c0_i32 = arith.constant 0 : i32
    %c0_i32_0 = arith.constant 0 : i32
    %c0_i32_1 = arith.constant 0 : i32
    return %c0_i32, %c0_i32_0 : i32, i32
  }
  func.func @transform_15(%arg0: i32, %arg1: i32) -> (i32, i32) {
    %c0_i32 = arith.constant 0 : i32
    %c0_i32_0 = arith.constant 0 : i32
    %c0_i32_1 = arith.constant 0 : i32
    return %c0_i32, %c0_i32_0 : i32, i32
  }
  func.func @transform_16(%arg0: i32, %arg1: i32) -> (i32, i32) {
    %c0_i32 = arith.constant 0 : i32
    %c0_i32_0 = arith.constant 0 : i32
    return %arg0, %c0_i32 : i32, i32
  }
}

</mosaic_0001>

<llo_original>
// kernel: tpu_custom_call.1
$region0: #{tpu_custom_call.1}
  #allocation0 [shape = 'u32[]', space=smem, size = 0x4, offset = 0x4, fixed_abs, tag = 'smem constant byte address 0x4 - core index']
  #allocation1 [shape = 'u32[72,128]{1,0:T(1,128)}', space=vmem, size = 0x9000, scoped, tag = 'internal scratch']
  #allocation2 [shape = 'f32[128,128]{1,0:T(8,128)}', space=vmem, size = 0x10000, scoped, tag = 'scratch operand']
  %s0 = inlined_call_operand.hbm [shape: f32[128,128], index: 0, kind: input, shape index: {}]
  %s1 = inlined_call_operand.hbm [shape: f32[1,128,128], index: 1, kind: input, shape index: {}]
  %s2 = inlined_call_operand.hbm [shape: bf16[2,128,384], index: 2, kind: input, shape index: {}]
  %s3 = inlined_call_operand.hbm [shape: f32[2,1,384], index: 3, kind: input, shape index: {}]
  %s4 = inlined_call_operand.hbm [shape: bf16[2,128,128], index: 4, kind: input, shape index: {}]
  %s5 = inlined_call_operand.vmem [shape: f32[2,1,128], index: 5, kind: input, shape index: {}]
  %s6 = inlined_call_operand.hbm [shape: f32[2,1,128], index: 6, kind: input, shape index: {}]
  %s7 = inlined_call_operand.hbm [shape: f32[2,1,128], index: 7, kind: input, shape index: {}]
  %s8 = inlined_call_operand.hbm [shape: bf16[2,128,256], index: 8, kind: input, shape index: {}]
  %s9 = inlined_call_operand.vmem [shape: f32[2,1,256], index: 9, kind: input, shape index: {}]
  %s10 = inlined_call_operand.hbm [shape: bf16[2,256,128], index: 10, kind: input, shape index: {}]
  %s11 = inlined_call_operand.vmem [shape: f32[2,1,128], index: 11, kind: input, shape index: {}]
  %s12 = inlined_call_operand.vmem [shape: f32[2,1,128], index: 12, kind: input, shape index: {}]
  %s13 = inlined_call_operand.vmem [shape: f32[2,1,128], index: 13, kind: input, shape index: {}]
  %s14 = inlined_call_operand.hbm [shape: bf16[128,128], index: 14, kind: input, shape index: {}]
  %s15 = inlined_call_operand.vmem [shape: f32[1,128], index: 15, kind: input, shape index: {}]
  %s16 = inlined_call_operand.hbm [shape: f32[16,128], index: 16, kind: output, shape index: {}]
  %s17 = sld [smem:[#allocation0]]
  $region145: #{tpu_custom_call.1} parent=0
    _
  %s19 = ssub.s32 1, %s17
  %s20 = scalar_select 0, %s19, %s17
  $region1: #{tpu_custom_call.1} parent=0
    #allocation3 [shape = 'u8[65536]{0}', space=vmem, size = 0x10000, scoped, tag = 'input window, operand 0, single buffered']
    #allocation4 [shape = 's32[2]{0}', space=sflag, size = 0x8, scoped, tag = 'scoped memory for tpu_custom_call.1']
    #allocation5 [shape = 's32[2]{0}', space=sflag, size = 0x8, scoped, tag = 'scoped memory for tpu_custom_call.1']
    #allocation6 [shape = 'u8[65536]{0}', space=vmem, size = 0x10000, scoped, tag = 'input window, operand 1, single buffered']
    #allocation7 [shape = 's32[1]{0}', space=sflag, size = 0x4, scoped, tag = 'scoped memory for tpu_custom_call.1']
    #allocation8 [shape = 'u8[196608]{0}', space=vmem, size = 0x30000, scoped, tag = 'input window, operand 2']
    #allocation9 [shape = 'u8[3072]{0}', space=vmem, size = 0xc00, scoped, tag = 'input window, operand 3']
    #allocation10 [shape = 'u8[65536]{0}', space=vmem, size = 0x10000, scoped, tag = 'input window, operand 4']
    #allocation11 [shape = 'u8[1024]{0}', space=vmem, size = 0x400, scoped, tag = 'input window, operand 6']
    #allocation12 [shape = 'u8[1024]{0}', space=vmem, size = 0x400, scoped, tag = 'input window, operand 7']
    #allocation13 [shape = 'u8[131072]{0}', space=vmem, size = 0x20000, scoped, tag = 'input window, operand 8']
    #allocation14 [shape = 'u8[131072]{0}', space=vmem, size = 0x20000, scoped, tag = 'input window, operand 10']
    #allocation15 [shape = 'u8[32768]{0}', space=vmem, size = 0x8000, scoped, tag = 'input window, operand 14, single buffered']
    #allocation16 [shape = 'u8[8192]{0}', space=vmem, size = 0x2000, scoped, tag = 'output window, operand 0, single buffered']
    %21 = vsyncpa [#allocation4], 0
    %22 = vsyncpa [#allocation7], 0
    %23 = vsyncpa [#allocation5], 0
    loop: start=0, step=1, limit=4
    $region2: #{tpu_custom_call.1} parent=1 // loop_pre_header
      _
    $region3: #{tpu_custom_call.1} parent=1 // loop_header
      %s25 = sphi 0, %s29
      %p26 = scmp.ge.s32.totalorder %s25, 4
      %s32 = sphi 0, %s44
      %s33 = sphi 0, %s40
      %s34 = sphi 0, %s32
      %s35 = sphi 0, %s33
      %s36 = sphi 0, %s34
      %s37 = sphi 0, %s35
      %s47 = sphi 0, %s49
      %s50 = sphi 0, %s47
      %s51 = sphi 0, %s50
      %s67 = sphi 0, %s51
      %s73 = sphi 0, %s75
      %s76 = sphi 0, %s73
      %s77 = sphi 0, %s76
      %s93 = sphi 0, %s77
      %s99 = sphi 0, %s101
      %s102 = sphi 0, %s99
      %s103 = sphi 0, %s102
      %s119 = sphi 0, %s103
      %s125 = sphi 0, %s127
      %s128 = sphi 0, %s125
      %s129 = sphi 0, %s128
      %s145 = sphi 0, %s129
      %s151 = sphi 0, %s153
      %s154 = sphi 0, %s151
      %s155 = sphi 0, %s154
      %s171 = sphi 0, %s155
      %s177 = sphi 0, %s179
      %s180 = sphi 0, %s177
      %s181 = sphi 0, %s180
      %s197 = sphi 0, %s181
      %s203 = sphi 0, %s205
      %s206 = sphi 0, %s203
      %s207 = sphi 0, %s206
      %s223 = sphi 0, %s207
      %s229 = sphi 0, %s231
      %s232 = sphi 0, %s229
      %s233 = sphi 0, %s232
      %s249 = sphi 0, %s233
      %s255 = sphi 0, %s257
      %s258 = sphi 0, %s255
      %s259 = sphi 0, %s258
      %s275 = sphi 0, %s259
      %s281 = sphi 0, %s283
      %s284 = sphi 0, %s281
      %s285 = sphi 0, %s284
      %s301 = sphi 0, %s285
      %s307 = sphi 0, %s309
      %s310 = sphi 0, %s307
      %s311 = sphi 0, %s310
      %s327 = sphi 0, %s311
      %s333 = sphi 0, %s335
      %s336 = sphi 0, %s333
      %s337 = sphi 0, %s336
      %s353 = sphi 0, %s337
      %s359 = sphi 0, %s361
      %s362 = sphi 0, %s359
      %s363 = sphi 0, %s362
      %s379 = sphi 0, %s363
      %s385 = sphi 0, %s387
      %s388 = sphi 0, %s385
      %s389 = sphi 0, %s388
      %s405 = sphi 0, %s389
      %s409 = sphi 0, %s409
      %s411 = sphi 0, %s409
      %s412 = sphi 0, %s411
      %s426 = sphi 0, %s412
      %s430 = sphi 0, %s430
      %s432 = sphi 0, %s430
      %s433 = sphi 0, %s432
      %s447 = sphi 0, %s433
      %s453 = sphi 0, %s455
      %s456 = sphi 0, %s453
      %s457 = sphi 0, %s456
      %s473 = sphi 0, %s457
    $region4: #{tpu_custom_call.1} parent=1 // loop_header_branch
      %28 = sbr.rel (%p26) target = $region8
    $region5: #{tpu_custom_call.1} parent=1 // loop_body
      %s30 = ssub.s32 %s25, 1
      %s31 = ssub.s32 %s25, 2
      %s38 = sadd.s32 1, %s33
      %p39 = scmp.ge.s32.totalorder %s38, 2
      %s40 = scalar_select %p39, 0, %s38
      %s41 = sadd.s32 1, %s32
      %s42 = scalar_select %p39, %s41, %s32
      %p43 = scmp.ge.s32.totalorder %s42, 1
      %s44 = scalar_select %p43, 0, %s42
      %s45 = ssub.s32 %s32, %s44
      %p46 = scmp.eq.s32.totalorder %s45, 0
      %s48 = sadd.s32 %s47, 1
      %s49 = scalar_select %p46, %s47, %s48
      %p52 = pneg %p46
      %p53 = scmp.eq.s32.totalorder %s25, 1
      %p54 = por %p52, %p53
      %p55 = scmp.ne.s32.totalorder %s47, %s50
      %p56 = scmp.eq.s32.totalorder %s25, 0
      %p57 = por %p55, %p56
      %p58 = scmp.ne.s32.totalorder %s47, %s50
      %p59 = scmp.eq.s32.totalorder %s30, 1
      %p60 = por %p58, %p59
      %p61 = scmp.ne.s32.totalorder %s50, %s51
      %p62 = scmp.eq.s32.totalorder %s30, 0
      %p63 = por %p61, %p62
      %p64 = scmp.ne.s32.totalorder %s50, %s51
      %p65 = scmp.eq.s32.totalorder %s31, 1
      %p66 = por %p64, %p65
      %p68 = scmp.ne.s32.totalorder %s51, %s67
      %p69 = scmp.eq.s32.totalorder %s31, 0
      %p70 = por %p68, %p69
      %s71 = ssub.s32 %s32, %s44
      %p72 = scmp.eq.s32.totalorder %s71, 0
      %s74 = sadd.s32 %s73, 1
      %s75 = scalar_select %p72, %s73, %s74
      %p78 = pneg %p72
      %p79 = scmp.eq.s32.totalorder %s25, 1
      %p80 = por %p78, %p79
      %p81 = scmp.ne.s32.totalorder %s73, %s76
      %p82 = scmp.eq.s32.totalorder %s25, 0
      %p83 = por %p81, %p82
      %p84 = scmp.ne.s32.totalorder %s73, %s76
      %p85 = scmp.eq.s32.totalorder %s30, 1
      %p86 = por %p84, %p85
      %p87 = scmp.ne.s32.totalorder %s76, %s77
      %p88 = scmp.eq.s32.totalorder %s30, 0
      %p89 = por %p87, %p88
      %p90 = scmp.ne.s32.totalorder %s76, %s77
      %p91 = scmp.eq.s32.totalorder %s31, 1
      %p92 = por %p90, %p91
      %p94 = scmp.ne.s32.totalorder %s77, %s93
      %p95 = scmp.eq.s32.totalorder %s31, 0
      %p96 = por %p94, %p95
      %s97 = ssub.s32 %s33, %s40
      %p98 = scmp.eq.s32.totalorder %s97, 0
      %s100 = sadd.s32 %s99, 1
      %s101 = scalar_select %p98, %s99, %s100
      %p104 = pneg %p98
      %p105 = scmp.eq.s32.totalorder %s25, 1
      %p106 = por %p104, %p105
      %p107 = scmp.ne.s32.totalorder %s99, %s102
      %p108 = scmp.eq.s32.totalorder %s25, 0
      %p109 = por %p107, %p108
      %p110 = scmp.ne.s32.totalorder %s99, %s102
      %p111 = scmp.eq.s32.totalorder %s30, 1
      %p112 = por %p110, %p111
      %p113 = scmp.ne.s32.totalorder %s102, %s103
      %p114 = scmp.eq.s32.totalorder %s30, 0
      %p115 = por %p113, %p114
      %p116 = scmp.ne.s32.totalorder %s102, %s103
      %p117 = scmp.eq.s32.totalorder %s31, 1
      %p118 = por %p116, %p117
      %p120 = scmp.ne.s32.totalorder %s103, %s119
      %p121 = scmp.eq.s32.totalorder %s31, 0
      %p122 = por %p120, %p121
      %s123 = ssub.s32 %s33, %s40
      %p124 = scmp.eq.s32.totalorder %s123, 0
      %s126 = sadd.s32 %s125, 1
      %s127 = scalar_select %p124, %s125, %s126
      %p130 = pneg %p124
      %p131 = scmp.eq.s32.totalorder %s25, 1
      %p132 = por %p130, %p131
      %p133 = scmp.ne.s32.totalorder %s125, %s128
      %p134 = scmp.eq.s32.totalorder %s25, 0
      %p135 = por %p133, %p134
      %p136 = scmp.ne.s32.totalorder %s125, %s128
      %p137 = scmp.eq.s32.totalorder %s30, 1
      %p138 = por %p136, %p137
      %p139 = scmp.ne.s32.totalorder %s128, %s129
      %p140 = scmp.eq.s32.totalorder %s30, 0
      %p141 = por %p139, %p140
      %p142 = scmp.ne.s32.totalorder %s128, %s129
      %p143 = scmp.eq.s32.totalorder %s31, 1
      %p144 = por %p142, %p143
      %p146 = scmp.ne.s32.totalorder %s129, %s145
      %p147 = scmp.eq.s32.totalorder %s31, 0
      %p148 = por %p146, %p147
      %s149 = ssub.s32 %s33, %s40
      %p150 = scmp.eq.s32.totalorder %s149, 0
      %s152 = sadd.s32 %s151, 1
      %s153 = scalar_select %p150, %s151, %s152
      %p156 = pneg %p150
      %p157 = scmp.eq.s32.totalorder %s25, 1
      %p158 = por %p156, %p157
      %p159 = scmp.ne.s32.totalorder %s151, %s154
      %p160 = scmp.eq.s32.totalorder %s25, 0
      %p161 = por %p159, %p160
      %p162 = scmp.ne.s32.totalorder %s151, %s154
      %p163 = scmp.eq.s32.totalorder %s30, 1
      %p164 = por %p162, %p163
      %p165 = scmp.ne.s32.totalorder %s154, %s155
      %p166 = scmp.eq.s32.totalorder %s30, 0
      %p167 = por %p165, %p166
      %p168 = scmp.ne.s32.totalorder %s154, %s155
      %p169 = scmp.eq.s32.totalorder %s31, 1
      %p170 = por %p168, %p169
      %p172 = scmp.ne.s32.totalorder %s155, %s171
      %p173 = scmp.eq.s32.totalorder %s31, 0
      %p174 = por %p172, %p173
      %s175 = ssub.s32 %s33, %s40
      %p176 = scmp.eq.s32.totalorder %s175, 0
      %s178 = sadd.s32 %s177, 1
      %s179 = scalar_select %p176, %s177, %s178
      %p182 = pneg %p176
      %p183 = scmp.eq.s32.totalorder %s25, 1
      %p184 = por %p182, %p183
      %p185 = scmp.ne.s32.totalorder %s177, %s180
      %p186 = scmp.eq.s32.totalorder %s25, 0
      %p187 = por %p185, %p186
      %p188 = scmp.ne.s32.totalorder %s177, %s180
      %p189 = scmp.eq.s32.totalorder %s30, 1
      %p190 = por %p188, %p189
      %p191 = scmp.ne.s32.totalorder %s180, %s181
      %p192 = scmp.eq.s32.totalorder %s30, 0
      %p193 = por %p191, %p192
      %p194 = scmp.ne.s32.totalorder %s180, %s181
      %p195 = scmp.eq.s32.totalorder %s31, 1
      %p196 = por %p194, %p195
      %p198 = scmp.ne.s32.totalorder %s181, %s197
      %p199 = scmp.eq.s32.totalorder %s31, 0
      %p200 = por %p198, %p199
      %s201 = ssub.s32 %s33, %s40
      %p202 = scmp.eq.s32.totalorder %s201, 0
      %s204 = sadd.s32 %s203, 1
      %s205 = scalar_select %p202, %s203, %s204
      %p208 = pneg %p202
      %p209 = scmp.eq.s32.totalorder %s25, 1
      %p210 = por %p208, %p209
      %p211 = scmp.ne.s32.totalorder %s203, %s206
      %p212 = scmp.eq.s32.totalorder %s25, 0
      %p213 = por %p211, %p212
      %p214 = scmp.ne.s32.totalorder %s203, %s206
      %p215 = scmp.eq.s32.totalorder %s30, 1
      %p216 = por %p214, %p215
      %p217 = scmp.ne.s32.totalorder %s206, %s207
      %p218 = scmp.eq.s32.totalorder %s30, 0
      %p219 = por %p217, %p218
      %p220 = scmp.ne.s32.totalorder %s206, %s207
      %p221 = scmp.eq.s32.totalorder %s31, 1
      %p222 = por %p220, %p221
      %p224 = scmp.ne.s32.totalorder %s207, %s223
      %p225 = scmp.eq.s32.totalorder %s31, 0
      %p226 = por %p224, %p225
      %s227 = ssub.s32 %s33, %s40
      %p228 = scmp.eq.s32.totalorder %s227, 0
      %s230 = sadd.s32 %s229, 1
      %s231 = scalar_select %p228, %s229, %s230
      %p234 = pneg %p228
      %p235 = scmp.eq.s32.totalorder %s25, 1
      %p236 = por %p234, %p235
      %p237 = scmp.ne.s32.totalorder %s229, %s232
      %p238 = scmp.eq.s32.totalorder %s25, 0
      %p239 = por %p237, %p238
      %p240 = scmp.ne.s32.totalorder %s229, %s232
      %p241 = scmp.eq.s32.totalorder %s30, 1
      %p242 = por %p240, %p241
      %p243 = scmp.ne.s32.totalorder %s232, %s233
      %p244 = scmp.eq.s32.totalorder %s30, 0
      %p245 = por %p243, %p244
      %p246 = scmp.ne.s32.totalorder %s232, %s233
      %p247 = scmp.eq.s32.totalorder %s31, 1
      %p248 = por %p246, %p247
      %p250 = scmp.ne.s32.totalorder %s233, %s249
      %p251 = scmp.eq.s32.totalorder %s31, 0
      %p252 = por %p250, %p251
      %s253 = ssub.s32 %s33, %s40
      %p254 = scmp.eq.s32.totalorder %s253, 0
      %s256 = sadd.s32 %s255, 1
      %s257 = scalar_select %p254, %s255, %s256
      %p260 = pneg %p254
      %p261 = scmp.eq.s32.totalorder %s25, 1
      %p262 = por %p260, %p261
      %p263 = scmp.ne.s32.totalorder %s255, %s258
      %p264 = scmp.eq.s32.totalorder %s25, 0
      %p265 = por %p263, %p264
      %p266 = scmp.ne.s32.totalorder %s255, %s258
      %p267 = scmp.eq.s32.totalorder %s30, 1
      %p268 = por %p266, %p267
      %p269 = scmp.ne.s32.totalorder %s258, %s259
      %p270 = scmp.eq.s32.totalorder %s30, 0
      %p271 = por %p269, %p270
      %p272 = scmp.ne.s32.totalorder %s258, %s259
      %p273 = scmp.eq.s32.totalorder %s31, 1
      %p274 = por %p272, %p273
      %p276 = scmp.ne.s32.totalorder %s259, %s275
      %p277 = scmp.eq.s32.totalorder %s31, 0
      %p278 = por %p276, %p277
      %s279 = ssub.s32 %s33, %s40
      %p280 = scmp.eq.s32.totalorder %s279, 0
      %s282 = sadd.s32 %s281, 1
      %s283 = scalar_select %p280, %s281, %s282
      %p286 = pneg %p280
      %p287 = scmp.eq.s32.totalorder %s25, 1
      %p288 = por %p286, %p287
      %p289 = scmp.ne.s32.totalorder %s281, %s284
      %p290 = scmp.eq.s32.totalorder %s25, 0
      %p291 = por %p289, %p290
      %p292 = scmp.ne.s32.totalorder %s281, %s284
      %p293 = scmp.eq.s32.totalorder %s30, 1
      %p294 = por %p292, %p293
      %p295 = scmp.ne.s32.totalorder %s284, %s285
      %p296 = scmp.eq.s32.totalorder %s30, 0
      %p297 = por %p295, %p296
      %p298 = scmp.ne.s32.totalorder %s284, %s285
      %p299 = scmp.eq.s32.totalorder %s31, 1
      %p300 = por %p298, %p299
      %p302 = scmp.ne.s32.totalorder %s285, %s301
      %p303 = scmp.eq.s32.totalorder %s31, 0
      %p304 = por %p302, %p303
      %s305 = ssub.s32 %s33, %s40
      %p306 = scmp.eq.s32.totalorder %s305, 0
      %s308 = sadd.s32 %s307, 1
      %s309 = scalar_select %p306, %s307, %s308
      %p312 = pneg %p306
      %p313 = scmp.eq.s32.totalorder %s25, 1
      %p314 = por %p312, %p313
      %p315 = scmp.ne.s32.totalorder %s307, %s310
      %p316 = scmp.eq.s32.totalorder %s25, 0
      %p317 = por %p315, %p316
      %p318 = scmp.ne.s32.totalorder %s307, %s310
      %p319 = scmp.eq.s32.totalorder %s30, 1
      %p320 = por %p318, %p319
      %p321 = scmp.ne.s32.totalorder %s310, %s311
      %p322 = scmp.eq.s32.totalorder %s30, 0
      %p323 = por %p321, %p322
      %p324 = scmp.ne.s32.totalorder %s310, %s311
      %p325 = scmp.eq.s32.totalorder %s31, 1
      %p326 = por %p324, %p325
      %p328 = scmp.ne.s32.totalorder %s311, %s327
      %p329 = scmp.eq.s32.totalorder %s31, 0
      %p330 = por %p328, %p329
      %s331 = ssub.s32 %s33, %s40
      %p332 = scmp.eq.s32.totalorder %s331, 0
      %s334 = sadd.s32 %s333, 1
      %s335 = scalar_select %p332, %s333, %s334
      %p338 = pneg %p332
      %p339 = scmp.eq.s32.totalorder %s25, 1
      %p340 = por %p338, %p339
      %p341 = scmp.ne.s32.totalorder %s333, %s336
      %p342 = scmp.eq.s32.totalorder %s25, 0
      %p343 = por %p341, %p342
      %p344 = scmp.ne.s32.totalorder %s333, %s336
      %p345 = scmp.eq.s32.totalorder %s30, 1
      %p346 = por %p344, %p345
      %p347 = scmp.ne.s32.totalorder %s336, %s337
      %p348 = scmp.eq.s32.totalorder %s30, 0
      %p349 = por %p347, %p348
      %p350 = scmp.ne.s32.totalorder %s336, %s337
      %p351 = scmp.eq.s32.totalorder %s31, 1
      %p352 = por %p350, %p351
      %p354 = scmp.ne.s32.totalorder %s337, %s353
      %p355 = scmp.eq.s32.totalorder %s31, 0
      %p356 = por %p354, %p355
      %s357 = ssub.s32 %s33, %s40
      %p358 = scmp.eq.s32.totalorder %s357, 0
      %s360 = sadd.s32 %s359, 1
      %s361 = scalar_select %p358, %s359, %s360
      %p364 = pneg %p358
      %p365 = scmp.eq.s32.totalorder %s25, 1
      %p366 = por %p364, %p365
      %p367 = scmp.ne.s32.totalorder %s359, %s362
      %p368 = scmp.eq.s32.totalorder %s25, 0
      %p369 = por %p367, %p368
      %p370 = scmp.ne.s32.totalorder %s359, %s362
      %p371 = scmp.eq.s32.totalorder %s30, 1
      %p372 = por %p370, %p371
      %p373 = scmp.ne.s32.totalorder %s362, %s363
      %p374 = scmp.eq.s32.totalorder %s30, 0
      %p375 = por %p373, %p374
      %p376 = scmp.ne.s32.totalorder %s362, %s363
      %p377 = scmp.eq.s32.totalorder %s31, 1
      %p378 = por %p376, %p377
      %p380 = scmp.ne.s32.totalorder %s363, %s379
      %p381 = scmp.eq.s32.totalorder %s31, 0
      %p382 = por %p380, %p381
      %s383 = ssub.s32 %s33, %s40
      %p384 = scmp.eq.s32.totalorder %s383, 0
      %s386 = sadd.s32 %s385, 1
      %s387 = scalar_select %p384, %s385, %s386
      %p390 = pneg %p384
      %p391 = scmp.eq.s32.totalorder %s25, 1
      %p392 = por %p390, %p391
      %p393 = scmp.ne.s32.totalorder %s385, %s388
      %p394 = scmp.eq.s32.totalorder %s25, 0
      %p395 = por %p393, %p394
      %p396 = scmp.ne.s32.totalorder %s385, %s388
      %p397 = scmp.eq.s32.totalorder %s30, 1
      %p398 = por %p396, %p397
      %p399 = scmp.ne.s32.totalorder %s388, %s389
      %p400 = scmp.eq.s32.totalorder %s30, 0
      %p401 = por %p399, %p400
      %p402 = scmp.ne.s32.totalorder %s388, %s389
      %p403 = scmp.eq.s32.totalorder %s31, 1
      %p404 = por %p402, %p403
      %p406 = scmp.ne.s32.totalorder %s389, %s405
      %p407 = scmp.eq.s32.totalorder %s31, 0
      %p408 = por %p406, %p407
      %s410 = sadd.s32 %s409, 1
      %p413 = scmp.eq.s32.totalorder %s25, 1
      %p414 = scmp.ne.s32.totalorder %s409, %s411
      %p415 = scmp.eq.s32.totalorder %s25, 0
      %p416 = por %p414, %p415
      %p417 = scmp.ne.s32.totalorder %s409, %s411
      %p418 = scmp.eq.s32.totalorder %s30, 1
      %p419 = por %p417, %p418
      %p420 = scmp.ne.s32.totalorder %s411, %s412
      %p421 = scmp.eq.s32.totalorder %s30, 0
      %p422 = por %p420, %p421
      %p423 = scmp.ne.s32.totalorder %s411, %s412
      %p424 = scmp.eq.s32.totalorder %s31, 1
      %p425 = por %p423, %p424
      %p427 = scmp.ne.s32.totalorder %s412, %s426
      %p428 = scmp.eq.s32.totalorder %s31, 0
      %p429 = por %p427, %p428
      %s431 = sadd.s32 %s430, 1
      %p434 = scmp.eq.s32.totalorder %s25, 1
      %p435 = scmp.ne.s32.totalorder %s430, %s432
      %p436 = scmp.eq.s32.totalorder %s25, 0
      %p437 = por %p435, %p436
      %p438 = scmp.ne.s32.totalorder %s430, %s432
      %p439 = scmp.eq.s32.totalorder %s30, 1
      %p440 = por %p438, %p439
      %p441 = scmp.ne.s32.totalorder %s432, %s433
      %p442 = scmp.eq.s32.totalorder %s30, 0
      %p443 = por %p441, %p442
      %p444 = scmp.ne.s32.totalorder %s432, %s433
      %p445 = scmp.eq.s32.totalorder %s31, 1
      %p446 = por %p444, %p445
      %p448 = scmp.ne.s32.totalorder %s433, %s447
      %p449 = scmp.eq.s32.totalorder %s31, 0
      %p450 = por %p448, %p449
      %s451 = ssub.s32 %s32, %s44
      %p452 = scmp.eq.s32.totalorder %s451, 0
      %s454 = sadd.s32 %s453, 1
      %s455 = scalar_select %p452, %s453, %s454
      %p458 = pneg %p452
      %p459 = scmp.eq.s32.totalorder %s25, 1
      %p460 = por %p458, %p459
      %p461 = scmp.ne.s32.totalorder %s453, %s456
      %p462 = scmp.eq.s32.totalorder %s25, 0
      %p463 = por %p461, %p462
      %p464 = scmp.ne.s32.totalorder %s453, %s456
      %p465 = scmp.eq.s32.totalorder %s30, 1
      %p466 = por %p464, %p465
      %p467 = scmp.ne.s32.totalorder %s456, %s457
      %p468 = scmp.eq.s32.totalorder %s30, 0
      %p469 = por %p467, %p468
      %p470 = scmp.ne.s32.totalorder %s456, %s457
      %p471 = scmp.eq.s32.totalorder %s31, 1
      %p472 = por %p470, %p471
      %p474 = scmp.ne.s32.totalorder %s457, %s473
      %p475 = scmp.eq.s32.totalorder %s31, 0
      %p476 = por %p474, %p475
      %p477 = scmp.le.s32.totalorder 1, %s25
      %p478 = scmp.lt.s32.totalorder %s25, 3
      %p479 = pnand %p477, %p478
      %p480 = pneg %p479
      // Predicated region
      $region9: #{tpu_custom_call.1} parent=5 // pred_check
        _
      $region10: #{tpu_custom_call.1} parent=5 // pred_check_branch
        %482 = sbr.rel (%p479) target = $region12
      $region11: #{tpu_custom_call.1} parent=5 // pred_region
        %s483 = ssub.s32 %s25, 1
        // Predicated region
        $region13: #{tpu_custom_call.1} parent=11 // pred_check
          %p484 = pneg %p63
        $region14: #{tpu_custom_call.1} parent=11 // pred_check_branch
          %486 = sbr.rel (%p484) target = $region16
        $region15: #{tpu_custom_call.1} parent=11 // pred_region
          %s487 = smul.u32 16, %s34
          %489 = vsyncadd [#allocation4], 0
          %s490 = smul.addr %s487, 8
          %s491 = scalar_lea.hbm %s0, %s490
          %s492 = sshll.u32 %s491, 4
          %s493 = int_to_ptr.hbm [resolvable:$true] %s492
          %s494 = sshll.u32 [#allocation3], 4
          %s495 = int_to_ptr.vmem [resolvable:$true] %s494
          %500 = dma.hbm_to_vmem [thread:$0]  %s493, 2048, %s495, [#allocation4], 128, 128, 8
        $region16: #{tpu_custom_call.1} parent=11 // pred_fallthru
          _
        // Predicated region
        $region17: #{tpu_custom_call.1} parent=11 // pred_check
          %p501 = pneg %p89
        $region18: #{tpu_custom_call.1} parent=11 // pred_check_branch
          %503 = sbr.rel (%p501) target = $region20
        $region19: #{tpu_custom_call.1} parent=11 // pred_region
          %505 = vsyncadd [#allocation7], 0
          %s506 = smul.addr %s34, 16
          %s507 = smul.addr %s506, 8
          %s508 = scalar_lea.hbm %s1, %s507
          %s509 = sshll.u32 %s508, 4
          %s510 = int_to_ptr.hbm [resolvable:$true] %s509
          %s511 = sshll.u32 [#allocation6], 4
          %s512 = int_to_ptr.vmem [resolvable:$true] %s511
          %517 = dma.hbm_to_vmem [thread:$0]  %s510, 2048, %s512, [#allocation7], 128, 128, 8
        $region20: #{tpu_custom_call.1} parent=11 // pred_fallthru
          _
        // Predicated region
        $region21: #{tpu_custom_call.1} parent=11 // pred_check
          %p518 = pneg %p422
        $region22: #{tpu_custom_call.1} parent=11 // pred_check_branch
          %520 = sbr.rel (%p518) target = $region24
        $region23: #{tpu_custom_call.1} parent=11 // pred_region
          %522 = vsyncadd [#allocation7], 0
          %s523 = sshll.u32 %s14, 4
          %s524 = int_to_ptr.hbm [resolvable:$true] %s523
          %s525 = sshll.u32 [#allocation15], 4
          %s526 = int_to_ptr.vmem [resolvable:$true] %s525
          %531 = dma.hbm_to_vmem [thread:$0]  %s524, 1024, %s526, [#allocation7], 64, 64, 4
        $region24: #{tpu_custom_call.1} parent=11 // pred_fallthru
          _
        // Predicated region
        $region25: #{tpu_custom_call.1} parent=11 // pred_check
          %p532 = pneg %p443
        $region26: #{tpu_custom_call.1} parent=11 // pred_check_branch
          %534 = sbr.rel (%p532) target = $region28
        $region27: #{tpu_custom_call.1} parent=11 // pred_region
          _
        $region28: #{tpu_custom_call.1} parent=11 // pred_fallthru
          _
      $region12: #{tpu_custom_call.1} parent=5 // pred_fallthru
        _
      %p535 = scmp.lt.s32.totalorder %s25, 2
      // Predicated region
      $region29: #{tpu_custom_call.1} parent=5 // pred_check
        %p536 = pneg %p535
      $region30: #{tpu_custom_call.1} parent=5 // pred_check_branch
        %538 = sbr.rel (%p536) target = $region32
      $region31: #{tpu_custom_call.1} parent=5 // pred_region
        // Predicated region
        $region33: #{tpu_custom_call.1} parent=31 // pred_check
          %p539 = pneg %p109
        $region34: #{tpu_custom_call.1} parent=31 // pred_check_branch
          %541 = sbr.rel (%p539) target = $region36
        $region35: #{tpu_custom_call.1} parent=31 // pred_region
          %s542 = sand.u32 %s25, 1
          %s543 = scalar_lea.sflag [#allocation4], %s542
          %s544 = sand.u32 %s99, 1
          %s545 = smul.addr %s544, 192
          %s546 = scalar_lea.vmem [#allocation8], %s545
          %548 = vsyncadd %s543, 0
          %s549 = smul.addr %s33, 48
          %s550 = smul.addr %s549, 4
          %s551 = scalar_lea.hbm %s2, %s550
          %s552 = sshll.u32 %s551, 4
          %s553 = int_to_ptr.hbm [resolvable:$true] %s552
          %s554 = sshll.u32 %s546, 4
          %s555 = int_to_ptr.vmem [resolvable:$true] %s554
          %560 = dma.hbm_to_vmem [thread:$0]  %s553, 3072, %s555, %s543, 192, 192, 12
        $region36: #{tpu_custom_call.1} parent=31 // pred_fallthru
          _
        // Predicated region
        $region37: #{tpu_custom_call.1} parent=31 // pred_check
          %p561 = pneg %p135
        $region38: #{tpu_custom_call.1} parent=31 // pred_check_branch
          %563 = sbr.rel (%p561) target = $region40
        $region39: #{tpu_custom_call.1} parent=31 // pred_region
          %s564 = sand.u32 %s25, 1
          %s565 = scalar_lea.sflag [#allocation4], %s564
          %s566 = sand.u32 %s125, 1
          %s567 = smul.addr %s566, 3
          %s568 = scalar_lea.vmem [#allocation9], %s567
          %570 = vsyncadd %s565, 0
          %s571 = smul.addr %s33, 3
          %s572 = scalar_lea.hbm %s3, %s571
          %s574 = sshll.u32 %s572, 4
          %s575 = int_to_ptr.hbm [resolvable:$true] %s574
          %s576 = sshll.u32 %s568, 4
          %s577 = int_to_ptr.vmem [resolvable:$true] %s576
          %579 = dma.hbm_to_vmem [thread:$0]  %s575, 48, %s577, %s565
        $region40: #{tpu_custom_call.1} parent=31 // pred_fallthru
          _
        // Predicated region
        $region41: #{tpu_custom_call.1} parent=31 // pred_check
          %p580 = pneg %p161
        $region42: #{tpu_custom_call.1} parent=31 // pred_check_branch
          %582 = sbr.rel (%p580) target = $region44
        $region43: #{tpu_custom_call.1} parent=31 // pred_region
          %s583 = sand.u32 %s25, 1
          %s584 = scalar_lea.sflag [#allocation4], %s583
          %s585 = sand.u32 %s151, 1
          %s586 = smul.addr %s585, 64
          %s587 = scalar_lea.vmem [#allocation10], %s586
          %589 = vsyncadd %s584, 0
          %s590 = smul.addr %s33, 16
          %s591 = smul.addr %s590, 4
          %s592 = scalar_lea.hbm %s4, %s591
          %s593 = sshll.u32 %s592, 4
          %s594 = int_to_ptr.hbm [resolvable:$true] %s593
          %s595 = sshll.u32 %s587, 4
          %s596 = int_to_ptr.vmem [resolvable:$true] %s595
          %601 = dma.hbm_to_vmem [thread:$0]  %s594, 1024, %s596, %s584, 64, 64, 4
        $region44: #{tpu_custom_call.1} parent=31 // pred_fallthru
          _
        // Predicated region
        $region45: #{tpu_custom_call.1} parent=31 // pred_check
          %p602 = pneg %p187
        $region46: #{tpu_custom_call.1} parent=31 // pred_check_branch
          %604 = sbr.rel (%p602) target = $region48
        $region47: #{tpu_custom_call.1} parent=31 // pred_region
          %p605 = scmp.lt.s32.totalorder %s33, 1
          %s606 = scalar_select %p605, %s33, 1
          %s607 = scalar_lea.vmem %s5, %s606
        $region48: #{tpu_custom_call.1} parent=31 // pred_fallthru
          _
        // Predicated region
        $region49: #{tpu_custom_call.1} parent=31 // pred_check
          %p608 = pneg %p213
        $region50: #{tpu_custom_call.1} parent=31 // pred_check_branch
          %610 = sbr.rel (%p608) target = $region52
        $region51: #{tpu_custom_call.1} parent=31 // pred_region
          %s611 = sand.u32 %s25, 1
          %s612 = scalar_lea.sflag [#allocation4], %s611
          %s613 = sand.u32 %s203, 1
          %s614 = scalar_lea.vmem [#allocation11], %s613
          %616 = vsyncadd %s612, 0
          %s617 = scalar_lea.hbm %s6, %s33
          %s619 = sshll.u32 %s617, 4
          %s620 = int_to_ptr.hbm [resolvable:$true] %s619
          %s621 = sshll.u32 %s614, 4
          %s622 = int_to_ptr.vmem [resolvable:$true] %s621
          %624 = dma.hbm_to_vmem [thread:$0]  %s620, 16, %s622, %s612
        $region52: #{tpu_custom_call.1} parent=31 // pred_fallthru
          _
        // Predicated region
        $region53: #{tpu_custom_call.1} parent=31 // pred_check
          %p625 = pneg %p239
        $region54: #{tpu_custom_call.1} parent=31 // pred_check_branch
          %627 = sbr.rel (%p625) target = $region56
        $region55: #{tpu_custom_call.1} parent=31 // pred_region
          %s628 = sand.u32 %s25, 1
          %s629 = scalar_lea.sflag [#allocation4], %s628
          %s630 = sand.u32 %s229, 1
          %s631 = scalar_lea.vmem [#allocation12], %s630
          %633 = vsyncadd %s629, 0
          %s634 = scalar_lea.hbm %s7, %s33
          %s636 = sshll.u32 %s634, 4
          %s637 = int_to_ptr.hbm [resolvable:$true] %s636
          %s638 = sshll.u32 %s631, 4
          %s639 = int_to_ptr.vmem [resolvable:$true] %s638
          %641 = dma.hbm_to_vmem [thread:$0]  %s637, 16, %s639, %s629
        $region56: #{tpu_custom_call.1} parent=31 // pred_fallthru
          _
        // Predicated region
        $region57: #{tpu_custom_call.1} parent=31 // pred_check
          %p642 = pneg %p265
        $region58: #{tpu_custom_call.1} parent=31 // pred_check_branch
          %644 = sbr.rel (%p642) target = $region60
        $region59: #{tpu_custom_call.1} parent=31 // pred_region
          %s645 = sand.u32 %s25, 1
          %s646 = scalar_lea.sflag [#allocation4], %s645
          %s647 = sand.u32 %s255, 1
          %s648 = smul.addr %s647, 128
          %s649 = scalar_lea.vmem [#allocation13], %s648
          %651 = vsyncadd %s646, 0
          %s652 = smul.addr %s33, 32
          %s653 = smul.addr %s652, 4
          %s654 = scalar_lea.hbm %s8, %s653
          %s655 = sshll.u32 %s654, 4
          %s656 = int_to_ptr.hbm [resolvable:$true] %s655
          %s657 = sshll.u32 %s649, 4
          %s658 = int_to_ptr.vmem [resolvable:$true] %s657
          %663 = dma.hbm_to_vmem [thread:$0]  %s656, 2048, %s658, %s646, 128, 128, 8
        $region60: #{tpu_custom_call.1} parent=31 // pred_fallthru
          _
        // Predicated region
        $region61: #{tpu_custom_call.1} parent=31 // pred_check
          %p664 = pneg %p291
        $region62: #{tpu_custom_call.1} parent=31 // pred_check_branch
          %666 = sbr.rel (%p664) target = $region64
        $region63: #{tpu_custom_call.1} parent=31 // pred_region
          %p667 = scmp.lt.s32.totalorder %s33, 1
          %s668 = scalar_select %p667, %s33, 1
          %s669 = smul.addr %s668, 2
          %s670 = scalar_lea.vmem %s9, %s669
        $region64: #{tpu_custom_call.1} parent=31 // pred_fallthru
          _
        // Predicated region
        $region65: #{tpu_custom_call.1} parent=31 // pred_check
          %p671 = pneg %p317
        $region66: #{tpu_custom_call.1} parent=31 // pred_check_branch
          %673 = sbr.rel (%p671) target = $region68
        $region67: #{tpu_custom_call.1} parent=31 // pred_region
          %s674 = sand.u32 %s25, 1
          %s675 = scalar_lea.sflag [#allocation4], %s674
          %s676 = sand.u32 %s307, 1
          %s677 = smul.addr %s676, 128
          %s678 = scalar_lea.vmem [#allocation14], %s677
          %680 = vsyncadd %s675, 0
          %s681 = smul.addr %s33, 32
          %s682 = smul.addr %s681, 4
          %s683 = scalar_lea.hbm %s10, %s682
          %s684 = sshll.u32 %s683, 4
          %s685 = int_to_ptr.hbm [resolvable:$true] %s684
          %s686 = sshll.u32 %s678, 4
          %s687 = int_to_ptr.vmem [resolvable:$true] %s686
          %692 = dma.hbm_to_vmem [thread:$0]  %s685, 2048, %s687, %s675, 64, 64, 4
        $region68: #{tpu_custom_call.1} parent=31 // pred_fallthru
          _
        // Predicated region
        $region69: #{tpu_custom_call.1} parent=31 // pred_check
          %p693 = pneg %p343
        $region70: #{tpu_custom_call.1} parent=31 // pred_check_branch
          %695 = sbr.rel (%p693) target = $region72
        $region71: #{tpu_custom_call.1} parent=31 // pred_region
          %p696 = scmp.lt.s32.totalorder %s33, 1
          %s697 = scalar_select %p696, %s33, 1
          %s698 = scalar_lea.vmem %s11, %s697
        $region72: #{tpu_custom_call.1} parent=31 // pred_fallthru
          _
        // Predicated region
        $region73: #{tpu_custom_call.1} parent=31 // pred_check
          %p699 = pneg %p369
        $region74: #{tpu_custom_call.1} parent=31 // pred_check_branch
          %701 = sbr.rel (%p699) target = $region76
        $region75: #{tpu_custom_call.1} parent=31 // pred_region
          %p702 = scmp.lt.s32.totalorder %s33, 1
          %s703 = scalar_select %p702, %s33, 1
          %s704 = scalar_lea.vmem %s12, %s703
        $region76: #{tpu_custom_call.1} parent=31 // pred_fallthru
          _
        // Predicated region
        $region77: #{tpu_custom_call.1} parent=31 // pred_check
          %p705 = pneg %p395
        $region78: #{tpu_custom_call.1} parent=31 // pred_check_branch
          %707 = sbr.rel (%p705) target = $region80
        $region79: #{tpu_custom_call.1} parent=31 // pred_region
          %p708 = scmp.lt.s32.totalorder %s33, 1
          %s709 = scalar_select %p708, %s33, 1
          %s710 = scalar_lea.vmem %s13, %s709
        $region80: #{tpu_custom_call.1} parent=31 // pred_fallthru
          _
      $region32: #{tpu_custom_call.1} parent=5 // pred_fallthru
        _
      %p711 = scmp.le.s32.totalorder 1, %s25
      %p712 = scmp.lt.s32.totalorder %s25, 3
      %p713 = pnand %p711, %p712
      %p714 = pneg %p713
      // Predicated region
      $region81: #{tpu_custom_call.1} parent=5 // pred_check
        _
      $region82: #{tpu_custom_call.1} parent=5 // pred_check_branch
        %716 = sbr.rel (%p713) target = $region84
      $region83: #{tpu_custom_call.1} parent=5 // pred_region
        %s717 = ssub.s32 %s25, 1
        // Predicated region
        $region85: #{tpu_custom_call.1} parent=83 // pred_check
          %p718 = pneg %p63
        $region86: #{tpu_custom_call.1} parent=83 // pred_check_branch
          %720 = sbr.rel (%p718) target = $region88
        $region87: #{tpu_custom_call.1} parent=83 // pred_region
          %722 = dma.done [#allocation4], 2048
        $region88: #{tpu_custom_call.1} parent=83 // pred_fallthru
          _
        // Predicated region
        $region89: #{tpu_custom_call.1} parent=83 // pred_check
          %p723 = pneg %p89
        $region90: #{tpu_custom_call.1} parent=83 // pred_check_branch
          %725 = sbr.rel (%p723) target = $region92
        $region91: #{tpu_custom_call.1} parent=83 // pred_region
          %727 = dma.done [#allocation7], 2048
        $region92: #{tpu_custom_call.1} parent=83 // pred_fallthru
          _
        %s728 = sand.u32 %s30, 1
        %s729 = scalar_lea.sflag [#allocation4], %s728
        %s730 = sand.u32 %s102, 1
        %s731 = smul.addr %s730, 192
        %s732 = scalar_lea.vmem [#allocation8], %s731
        // Predicated region
        $region93: #{tpu_custom_call.1} parent=83 // pred_check
          %p733 = pneg %p115
        $region94: #{tpu_custom_call.1} parent=83 // pred_check_branch
          %735 = sbr.rel (%p733) target = $region96
        $region95: #{tpu_custom_call.1} parent=83 // pred_region
          %737 = dma.done %s729, 3072
        $region96: #{tpu_custom_call.1} parent=83 // pred_fallthru
          _
        %s738 = sand.u32 %s30, 1
        %s739 = scalar_lea.sflag [#allocation4], %s738
        %s740 = sand.u32 %s128, 1
        %s741 = smul.addr %s740, 3
        %s742 = scalar_lea.vmem [#allocation9], %s741
        // Predicated region
        $region97: #{tpu_custom_call.1} parent=83 // pred_check
          %p743 = pneg %p141
        $region98: #{tpu_custom_call.1} parent=83 // pred_check_branch
          %745 = sbr.rel (%p743) target = $region100
        $region99: #{tpu_custom_call.1} parent=83 // pred_region
          %747 = dma.done %s739, 48
        $region100: #{tpu_custom_call.1} parent=83 // pred_fallthru
          _
        %s748 = sand.u32 %s30, 1
        %s749 = scalar_lea.sflag [#allocation4], %s748
        %s750 = sand.u32 %s154, 1
        %s751 = smul.addr %s750, 64
        %s752 = scalar_lea.vmem [#allocation10], %s751
        // Predicated region
        $region101: #{tpu_custom_call.1} parent=83 // pred_check
          %p753 = pneg %p167
        $region102: #{tpu_custom_call.1} parent=83 // pred_check_branch
          %755 = sbr.rel (%p753) target = $region104
        $region103: #{tpu_custom_call.1} parent=83 // pred_region
          %757 = dma.done %s749, 1024
        $region104: #{tpu_custom_call.1} parent=83 // pred_fallthru
          _
        %s758 = sand.u32 %s30, 1
        %s759 = scalar_lea.sflag [#allocation4], %s758
        %s760 = sand.u32 %s206, 1
        %s761 = scalar_lea.vmem [#allocation11], %s760
        // Predicated region
        $region105: #{tpu_custom_call.1} parent=83 // pred_check
          %p762 = pneg %p219
        $region106: #{tpu_custom_call.1} parent=83 // pred_check_branch
          %764 = sbr.rel (%p762) target = $region108
        $region107: #{tpu_custom_call.1} parent=83 // pred_region
          %766 = dma.done %s759, 16
        $region108: #{tpu_custom_call.1} parent=83 // pred_fallthru
          _
        %s767 = sand.u32 %s30, 1
        %s768 = scalar_lea.sflag [#allocation4], %s767
        %s769 = sand.u32 %s232, 1
        %s770 = scalar_lea.vmem [#allocation12], %s769
        // Predicated region
        $region109: #{tpu_custom_call.1} parent=83 // pred_check
          %p771 = pneg %p245
        $region110: #{tpu_custom_call.1} parent=83 // pred_check_branch
          %773 = sbr.rel (%p771) target = $region112
        $region111: #{tpu_custom_call.1} parent=83 // pred_region
          %775 = dma.done %s768, 16
        $region112: #{tpu_custom_call.1} parent=83 // pred_fallthru
          _
        %s776 = sand.u32 %s30, 1
        %s777 = scalar_lea.sflag [#allocation4], %s776
        %s778 = sand.u32 %s258, 1
        %s779 = smul.addr %s778, 128
        %s780 = scalar_lea.vmem [#allocation13], %s779
        // Predicated region
        $region113: #{tpu_custom_call.1} parent=83 // pred_check
          %p781 = pneg %p271
        $region114: #{tpu_custom_call.1} parent=83 // pred_check_branch
          %783 = sbr.rel (%p781) target = $region116
        $region115: #{tpu_custom_call.1} parent=83 // pred_region
          %785 = dma.done %s777, 2048
        $region116: #{tpu_custom_call.1} parent=83 // pred_fallthru
          _
        %s786 = sand.u32 %s30, 1
        %s787 = scalar_lea.sflag [#allocation4], %s786
        %s788 = sand.u32 %s310, 1
        %s789 = smul.addr %s788, 128
        %s790 = scalar_lea.vmem [#allocation14], %s789
        // Predicated region
        $region117: #{tpu_custom_call.1} parent=83 // pred_check
          %p791 = pneg %p323
        $region118: #{tpu_custom_call.1} parent=83 // pred_check_branch
          %793 = sbr.rel (%p791) target = $region120
        $region119: #{tpu_custom_call.1} parent=83 // pred_region
          %795 = dma.done %s787, 2048
        $region120: #{tpu_custom_call.1} parent=83 // pred_fallthru
          _
        // Predicated region
        $region121: #{tpu_custom_call.1} parent=83 // pred_check
          %p796 = pneg %p422
        $region122: #{tpu_custom_call.1} parent=83 // pred_check_branch
          %798 = sbr.rel (%p796) target = $region124
        $region123: #{tpu_custom_call.1} parent=83 // pred_region
          %800 = dma.done [#allocation7], 1024
        $region124: #{tpu_custom_call.1} parent=83 // pred_fallthru
          _
        %p801 = pneg %p63
        %p802 = pneg %p60
        %p803 = pneg %p89
        %p804 = pneg %p86
        %s805 = sand.u32 %s30, 1
        %s806 = scalar_lea.sflag [#allocation4], %s805
        %s807 = sand.u32 %s102, 1
        %s808 = smul.addr %s807, 192
        %s809 = scalar_lea.vmem [#allocation8], %s808
        %p810 = pneg %p115
        %p811 = pneg %p112
        %s812 = sand.u32 %s30, 1
        %s813 = scalar_lea.sflag [#allocation4], %s812
        %s814 = sand.u32 %s128, 1
        %s815 = smul.addr %s814, 3
        %s816 = scalar_lea.vmem [#allocation9], %s815
        %p817 = pneg %p141
        %p818 = pneg %p138
        %s819 = sand.u32 %s30, 1
        %s820 = scalar_lea.sflag [#allocation4], %s819
        %s821 = sand.u32 %s154, 1
        %s822 = smul.addr %s821, 64
        %s823 = scalar_lea.vmem [#allocation10], %s822
        %p824 = pneg %p167
        %p825 = pneg %p164
        %p826 = scmp.lt.s32.totalorder %s35, 1
        %s827 = scalar_select %p826, %s35, 1
        %s828 = scalar_lea.vmem %s5, %s827
        %p829 = pneg %p193
        %p830 = pneg %p190
        %s831 = sand.u32 %s30, 1
        %s832 = scalar_lea.sflag [#allocation4], %s831
        %s833 = sand.u32 %s206, 1
        %s834 = scalar_lea.vmem [#allocation11], %s833
        %p835 = pneg %p219
        %p836 = pneg %p216
        %s837 = sand.u32 %s30, 1
        %s838 = scalar_lea.sflag [#allocation4], %s837
        %s839 = sand.u32 %s232, 1
        %s840 = scalar_lea.vmem [#allocation12], %s839
        %p841 = pneg %p245
        %p842 = pneg %p242
        %s843 = sand.u32 %s30, 1
        %s844 = scalar_lea.sflag [#allocation4], %s843
        %s845 = sand.u32 %s258, 1
        %s846 = smul.addr %s845, 128
        %s847 = scalar_lea.vmem [#allocation13], %s846
        %p848 = pneg %p271
        %p849 = pneg %p268
        %p850 = scmp.lt.s32.totalorder %s35, 1
        %s851 = scalar_select %p850, %s35, 1
        %s852 = smul.addr %s851, 2
        %s853 = scalar_lea.vmem %s9, %s852
        %p854 = pneg %p297
        %p855 = pneg %p294
        %s856 = sand.u32 %s30, 1
        %s857 = scalar_lea.sflag [#allocation4], %s856
        %s858 = sand.u32 %s310, 1
        %s859 = smul.addr %s858, 128
        %s860 = scalar_lea.vmem [#allocation14], %s859
        %p861 = pneg %p323
        %p862 = pneg %p320
        %p863 = scmp.lt.s32.totalorder %s35, 1
        %s864 = scalar_select %p863, %s35, 1
        %s865 = scalar_lea.vmem %s11, %s864
        %p866 = pneg %p349
        %p867 = pneg %p346
        %p868 = scmp.lt.s32.totalorder %s35, 1
        %s869 = scalar_select %p868, %s35, 1
        %s870 = scalar_lea.vmem %s12, %s869
        %p871 = pneg %p375
        %p872 = pneg %p372
        %p873 = scmp.lt.s32.totalorder %s35, 1
        %s874 = scalar_select %p873, %s35, 1
        %s875 = scalar_lea.vmem %s13, %s874
        %p876 = pneg %p401
        %p877 = pneg %p398
        %p878 = pneg %p422
        %p879 = pneg %p419
        %p880 = pneg %p443
        %p881 = pneg %p440
        %p882 = pneg %p469
        %p883 = pneg %p466
        %s884 = smul.u32 16, %s34
        %p885 = scmp.lt.s32.totalorder %s35, 1
        %s886 = scalar_select %p885, %s35, 1
        %s887 = scalar_lea.vmem %s5, %s886
        %p888 = scmp.lt.s32.totalorder %s35, 1
        %s889 = scalar_select %p888, %s35, 1
        %s890 = smul.addr %s889, 2
        %s891 = scalar_lea.vmem %s9, %s890
        %p892 = scmp.lt.s32.totalorder %s35, 1
        %s893 = scalar_select %p892, %s35, 1
        %s894 = scalar_lea.vmem %s11, %s893
        %p895 = scmp.lt.s32.totalorder %s35, 1
        %s896 = scalar_select %p895, %s35, 1
        %s897 = scalar_lea.vmem %s12, %s896
        %p898 = scmp.lt.s32.totalorder %s35, 1
        %s899 = scalar_select %p898, %s35, 1
        %s900 = scalar_lea.vmem %s13, %s899
        %s901 = smul.u32 2, %s34
        %p902 = scmp.eq.s32.totalorder %s35, 0
        // Predicated region
        $region125: #{tpu_custom_call.1} parent=83 // pred_check
          %p903 = pneg %p902
        $region126: #{tpu_custom_call.1} parent=83 // pred_check_branch
          %905 = sbr.rel (%p903) target = $region128
        $region127: #{tpu_custom_call.1} parent=83 // pred_region
          %v906 = vld [vmem:[#allocation3] sm:$0xff]
          %v907 = vld [vmem:[#allocation3 + $0x8] sm:$0xff]
          %v908 = vld [vmem:[#allocation3 + $0x10] sm:$0xff]
          %v909 = vld [vmem:[#allocation3 + $0x18] sm:$0xff]
          %v910 = vld [vmem:[#allocation3 + $0x20] sm:$0xff]
          %v911 = vld [vmem:[#allocation3 + $0x28] sm:$0xff]
          %v912 = vld [vmem:[#allocation3 + $0x30] sm:$0xff]
          %v913 = vld [vmem:[#allocation3 + $0x38] sm:$0xff]
          %v914 = vld [vmem:[#allocation3 + $0x40] sm:$0xff]
          %v915 = vld [vmem:[#allocation3 + $0x48] sm:$0xff]
          %v916 = vld [vmem:[#allocation3 + $0x50] sm:$0xff]
          %v917 = vld [vmem:[#allocation3 + $0x58] sm:$0xff]
          %v918 = vld [vmem:[#allocation3 + $0x60] sm:$0xff]
          %v919 = vld [vmem:[#allocation3 + $0x68] sm:$0xff]
          %v920 = vld [vmem:[#allocation3 + $0x70] sm:$0xff]
          %v921 = vld [vmem:[#allocation3 + $0x78] sm:$0xff]
          %922 = vst [vmem:[#allocation2] sm:$0xff] %v906
          %923 = vst [vmem:[#allocation2 + $0x8] sm:$0xff] %v907
          %924 = vst [vmem:[#allocation2 + $0x10] sm:$0xff] %v908
          %925 = vst [vmem:[#allocation2 + $0x18] sm:$0xff] %v909
          %926 = vst [vmem:[#allocation2 + $0x20] sm:$0xff] %v910
          %927 = vst [vmem:[#allocation2 + $0x28] sm:$0xff] %v911
          %928 = vst [vmem:[#allocation2 + $0x30] sm:$0xff] %v912
          %929 = vst [vmem:[#allocation2 + $0x38] sm:$0xff] %v913
          %930 = vst [vmem:[#allocation2 + $0x40] sm:$0xff] %v914
          %931 = vst [vmem:[#allocation2 + $0x48] sm:$0xff] %v915
          %932 = vst [vmem:[#allocation2 + $0x50] sm:$0xff] %v916
          %933 = vst [vmem:[#allocation2 + $0x58] sm:$0xff] %v917
          %934 = vst [vmem:[#allocation2 + $0x60] sm:$0xff] %v918
          %935 = vst [vmem:[#allocation2 + $0x68] sm:$0xff] %v919
          %936 = vst [vmem:[#allocation2 + $0x70] sm:$0xff] %v920
          %937 = vst [vmem:[#allocation2 + $0x78] sm:$0xff] %v921
        $region128: #{tpu_custom_call.1} parent=83 // pred_fallthru
          _
        %v938 = vld [vmem:[#allocation2] sm:$0xff]
        %v939 = vld [vmem:[#allocation2 + $0x8] sm:$0xff]
        %v940 = vld [vmem:[#allocation2 + $0x10] sm:$0xff]
        %v941 = vld [vmem:[#allocation2 + $0x18] sm:$0xff]
        %v942 = vld [vmem:[#allocation2 + $0x20] sm:$0xff]
        %v943 = vld [vmem:[#allocation2 + $0x28] sm:$0xff]
        %v944 = vld [vmem:[#allocation2 + $0x30] sm:$0xff]
        %v945 = vld [vmem:[#allocation2 + $0x38] sm:$0xff]
        %v946 = vld [vmem:[#allocation2 + $0x40] sm:$0xff]
        %v947 = vld [vmem:[#allocation2 + $0x48] sm:$0xff]
        %v948 = vld [vmem:[#allocation2 + $0x50] sm:$0xff]
        %v949 = vld [vmem:[#allocation2 + $0x58] sm:$0xff]
        %v950 = vld [vmem:[#allocation2 + $0x60] sm:$0xff]
        %v951 = vld [vmem:[#allocation2 + $0x68] sm:$0xff]
        %v952 = vld [vmem:[#allocation2 + $0x70] sm:$0xff]
        %v953 = vld [vmem:[#allocation2 + $0x78] sm:$0xff]
        %v954 = vpack.c.bf16 %v939, %v938
        %v955 = vpack.c.bf16 %v941, %v940
        %v956 = vpack.c.bf16 %v943, %v942
        %v957 = vpack.c.bf16 %v945, %v944
        %v958 = vpack.c.bf16 %v947, %v946
        %v959 = vpack.c.bf16 %v949, %v948
        %v960 = vpack.c.bf16 %v951, %v950
        %v961 = vpack.c.bf16 %v953, %v952
        %v962 = vld [vmem:[%s732] sm:$0xff]
        %v963 = vld [vmem:[%s732 + $0x8] sm:$0xf]
        %v964 = vld [vmem:[%s732 + $0xc] sm:$0xff]
        %v965 = vld [vmem:[%s732 + $0x14] sm:$0xf]
        %v966 = vld [vmem:[%s732 + $0x18] sm:$0xff]
        %v967 = vld [vmem:[%s732 + $0x20] sm:$0xf]
        %v968 = vld [vmem:[%s732 + $0x24] sm:$0xff]
        %v969 = vld [vmem:[%s732 + $0x2c] sm:$0xf]
        %v970 = vld [vmem:[%s732 + $0x30] sm:$0xff]
        %v971 = vld [vmem:[%s732 + $0x38] sm:$0xf]
        %v972 = vld [vmem:[%s732 + $0x3c] sm:$0xff]
        %v973 = vld [vmem:[%s732 + $0x44] sm:$0xf]
        %v974 = vld [vmem:[%s732 + $0x48] sm:$0xff]
        %v975 = vld [vmem:[%s732 + $0x50] sm:$0xf]
        %v976 = vld [vmem:[%s732 + $0x54] sm:$0xff]
        %v977 = vld [vmem:[%s732 + $0x5c] sm:$0xf]
        %v978 = vld [vmem:[%s732 + $0x60] sm:$0xff]
        %v979 = vld [vmem:[%s732 + $0x68] sm:$0xf]
        %v980 = vld [vmem:[%s732 + $0x6c] sm:$0xff]
        %v981 = vld [vmem:[%s732 + $0x74] sm:$0xf]
        %v982 = vld [vmem:[%s732 + $0x78] sm:$0xff]
        %v983 = vld [vmem:[%s732 + $0x80] sm:$0xf]
        %v984 = vld [vmem:[%s732 + $0x84] sm:$0xff]
        %v985 = vld [vmem:[%s732 + $0x8c] sm:$0xf]
        %v986 = vld [vmem:[%s732 + $0x90] sm:$0xff]
        %v987 = vld [vmem:[%s732 + $0x98] sm:$0xf]
        %v988 = vld [vmem:[%s732 + $0x9c] sm:$0xff]
        %v989 = vld [vmem:[%s732 + $0xa4] sm:$0xf]
        %v990 = vld [vmem:[%s732 + $0xa8] sm:$0xff]
        %v991 = vld [vmem:[%s732 + $0xb0] sm:$0xf]
        %v992 = vld [vmem:[%s732 + $0xb4] sm:$0xff]
        %v993 = vld [vmem:[%s732 + $0xbc] sm:$0xf]
        %v994 = vld [vmem:[%s742] sm:$0x7]
        %v996 = vperm.slane %v994, 0
        %v997 = vperm.slane %v994, 1
        %v998 = vperm.slane %v994, 2
        %v1034 = vunpack.c.l.b16 %v962
        %v1035 = vunpack.c.h.b16 %v962
        %v1036 = vunpack.c.l.b16 %v963
        %v1037 = vunpack.c.l.b16 %v964
        %v1038 = vunpack.c.h.b16 %v964
        %v1039 = vunpack.c.l.b16 %v965
        %v1040 = vunpack.c.l.b16 %v966
        %v1041 = vunpack.c.h.b16 %v966
        %v1042 = vunpack.c.l.b16 %v967
        %v1043 = vunpack.c.l.b16 %v968
        %v1044 = vunpack.c.h.b16 %v968
        %v1045 = vunpack.c.l.b16 %v969
        %v1046 = vunpack.c.l.b16 %v970
        %v1047 = vunpack.c.h.b16 %v970
        %v1048 = vunpack.c.l.b16 %v971
        %v1049 = vunpack.c.l.b16 %v972
        %v1050 = vunpack.c.h.b16 %v972
        %v1051 = vunpack.c.l.b16 %v973
        %v1052 = vunpack.c.l.b16 %v974
        %v1053 = vunpack.c.h.b16 %v974
        %v1054 = vunpack.c.l.b16 %v975
        %v1055 = vunpack.c.l.b16 %v976
        %v1056 = vunpack.c.h.b16 %v976
        %v1057 = vunpack.c.l.b16 %v977
        %v1058 = vunpack.c.l.b16 %v978
        %v1059 = vunpack.c.h.b16 %v978
        %v1060 = vunpack.c.l.b16 %v979
        %v1061 = vunpack.c.l.b16 %v980
        %v1062 = vunpack.c.h.b16 %v980
        %v1063 = vunpack.c.l.b16 %v981
        %v1064 = vunpack.c.l.b16 %v982
        %v1065 = vunpack.c.h.b16 %v982
        %v1066 = vunpack.c.l.b16 %v983
        %v1067 = vunpack.c.l.b16 %v984
        %v1068 = vunpack.c.h.b16 %v984
        %v1069 = vunpack.c.l.b16 %v985
        %v1070 = vunpack.c.l.b16 %v986
        %v1071 = vunpack.c.h.b16 %v986
        %v1072 = vunpack.c.l.b16 %v987
        %v1073 = vunpack.c.l.b16 %v988
        %v1074 = vunpack.c.h.b16 %v988
        %v1075 = vunpack.c.l.b16 %v989
        %v1076 = vunpack.c.l.b16 %v990
        %v1077 = vunpack.c.h.b16 %v990
        %v1078 = vunpack.c.l.b16 %v991
        %v1079 = vunpack.c.l.b16 %v992
        %v1080 = vunpack.c.h.b16 %v992
        %v1081 = vunpack.c.l.b16 %v993
        %v1082 = vpack.c.b16 %v1037, %v1034
        %v1083 = vpack.c.b16 %v1038, %v1035
        %v1084 = vpack.c.b16 %v1039, %v1036
        %v1085 = vpack.c.b16 %v1043, %v1040
        %v1086 = vpack.c.b16 %v1044, %v1041
        %v1087 = vpack.c.b16 %v1045, %v1042
        %v1088 = vpack.c.b16 %v1049, %v1046
        %v1089 = vpack.c.b16 %v1050, %v1047
        %v1090 = vpack.c.b16 %v1051, %v1048
        %v1091 = vpack.c.b16 %v1055, %v1052
        %v1092 = vpack.c.b16 %v1056, %v1053
        %v1093 = vpack.c.b16 %v1057, %v1054
        %v1094 = vpack.c.b16 %v1061, %v1058
        %v1095 = vpack.c.b16 %v1062, %v1059
        %v1096 = vpack.c.b16 %v1063, %v1060
        %v1097 = vpack.c.b16 %v1067, %v1064
        %v1098 = vpack.c.b16 %v1068, %v1065
        %v1099 = vpack.c.b16 %v1069, %v1066
        %v1100 = vpack.c.b16 %v1073, %v1070
        %v1101 = vpack.c.b16 %v1074, %v1071
        %v1102 = vpack.c.b16 %v1075, %v1072
        %v1103 = vpack.c.b16 %v1079, %v1076
        %v1104 = vpack.c.b16 %v1080, %v1077
        %v1105 = vpack.c.b16 %v1081, %v1078
        %1130 = vmatpush.bf16.msra.mxu0 %v1103
        %1131 = vmatpush.bf16.msra.mxu0 %v1100
        %1132 = vmatpush.bf16.msra.mxu0 %v1097
        %1133 = vmatpush.bf16.msra.mxu0 %v1094
        %1134 = vmatpush.bf16.msra.mxu0 %v1091
        %1135 = vmatpush.bf16.msra.mxu0 %v1088
        %1136 = vmatpush.bf16.msra.mxu0 %v1085
        %1137 = vmatpush.bf16.msra.mxu0 %v1082
        %1138 = vmatmul.bf16.gmra.mxu0 %v954
        %v1139 = vpop.f32.mrf.mxu0
        %v1140 = vadd.f32 %v996, %v1139
        %v1141 = vpop.f32.mrf.mxu0
        %v1142 = vadd.f32 %v996, %v1141
        %1143 = vmatmul.bf16.gmra.mxu0 %v955
        %v1144 = vpop.f32.mrf.mxu0
        %v1145 = vadd.f32 %v996, %v1144
        %v1146 = vpop.f32.mrf.mxu0
        %v1147 = vadd.f32 %v996, %v1146
        %1148 = vmatmul.bf16.gmra.mxu0 %v956
        %v1149 = vpop.f32.mrf.mxu0
        %v1150 = vadd.f32 %v996, %v1149
        %v1151 = vpop.f32.mrf.mxu0
        %v1152 = vadd.f32 %v996, %v1151
        %1153 = vmatmul.bf16.gmra.mxu0 %v957
        %v1154 = vpop.f32.mrf.mxu0
        %v1155 = vadd.f32 %v996, %v1154
        %v1156 = vpop.f32.mrf.mxu0
        %v1157 = vadd.f32 %v996, %v1156
        %1158 = vmatmul.bf16.gmra.mxu0 %v958
        %v1159 = vpop.f32.mrf.mxu0
        %v1160 = vadd.f32 %v996, %v1159
        %v1161 = vpop.f32.mrf.mxu0
        %v1162 = vadd.f32 %v996, %v1161
        %1163 = vmatmul.bf16.gmra.mxu0 %v959
        %v1164 = vpop.f32.mrf.mxu0
        %v1165 = vadd.f32 %v996, %v1164
        %v1166 = vpop.f32.mrf.mxu0
        %v1167 = vadd.f32 %v996, %v1166
        %1168 = vmatmul.bf16.gmra.mxu0 %v960
        %v1169 = vpop.f32.mrf.mxu0
        %v1170 = vadd.f32 %v996, %v1169
        %v1171 = vpop.f32.mrf.mxu0
        %v1172 = vadd.f32 %v996, %v1171
        %1173 = vmatmul.bf16.gmra.mxu0 %v961
        %v1174 = vpop.f32.mrf.mxu0
        %v1175 = vadd.f32 %v996, %v1174
        %v1176 = vpop.f32.mrf.mxu0
        %v1177 = vadd.f32 %v996, %v1176
        %1178 = vdwg.mxu0
        %1179 = vmatpush.bf16.msra.mxu0 %v1104
        %1180 = vmatpush.bf16.msra.mxu0 %v1101
        %1181 = vmatpush.bf16.msra.mxu0 %v1098
        %1182 = vmatpush.bf16.msra.mxu0 %v1095
        %1183 = vmatpush.bf16.msra.mxu0 %v1092
        %1184 = vmatpush.bf16.msra.mxu0 %v1089
        %1185 = vmatpush.bf16.msra.mxu0 %v1086
        %1186 = vmatpush.bf16.msra.mxu0 %v1083
        %1187 = vmatmul.bf16.gmra.mxu0 %v954
        %v1188 = vpop.f32.mrf.mxu0
        %v1189 = vadd.f32 %v997, %v1188
        %v1190 = vpop.f32.mrf.mxu0
        %v1191 = vadd.f32 %v997, %v1190
        %1192 = vmatmul.bf16.gmra.mxu0 %v955
        %v1193 = vpop.f32.mrf.mxu0
        %v1194 = vadd.f32 %v997, %v1193
        %v1195 = vpop.f32.mrf.mxu0
        %v1196 = vadd.f32 %v997, %v1195
        %1197 = vmatmul.bf16.gmra.mxu0 %v956
        %v1198 = vpop.f32.mrf.mxu0
        %v1199 = vadd.f32 %v997, %v1198
        %v1200 = vpop.f32.mrf.mxu0
        %v1201 = vadd.f32 %v997, %v1200
        %1202 = vmatmul.bf16.gmra.mxu0 %v957
        %v1203 = vpop.f32.mrf.mxu0
        %v1204 = vadd.f32 %v997, %v1203
        %v1205 = vpop.f32.mrf.mxu0
        %v1206 = vadd.f32 %v997, %v1205
        %1207 = vmatmul.bf16.gmra.mxu0 %v958
        %v1208 = vpop.f32.mrf.mxu0
        %v1209 = vadd.f32 %v997, %v1208
        %v1210 = vpop.f32.mrf.mxu0
        %v1211 = vadd.f32 %v997, %v1210
        %1212 = vmatmul.bf16.gmra.mxu0 %v959
        %v1213 = vpop.f32.mrf.mxu0
        %v1214 = vadd.f32 %v997, %v1213
        %v1215 = vpop.f32.mrf.mxu0
        %v1216 = vadd.f32 %v997, %v1215
        %1217 = vmatmul.bf16.gmra.mxu0 %v960
        %v1218 = vpop.f32.mrf.mxu0
        %v1219 = vadd.f32 %v997, %v1218
        %v1220 = vpop.f32.mrf.mxu0
        %v1221 = vadd.f32 %v997, %v1220
        %1222 = vmatmul.bf16.gmra.mxu0 %v961
        %v1223 = vpop.f32.mrf.mxu0
        %v1224 = vadd.f32 %v997, %v1223
        %v1225 = vpop.f32.mrf.mxu0
        %v1226 = vadd.f32 %v997, %v1225
        %1227 = vdwg.mxu0
        %1228 = vmatpush.bf16.msra.mxu0 %v1105
        %1229 = vmatpush.bf16.msra.mxu0 %v1102
        %1230 = vmatpush.bf16.msra.mxu0 %v1099
        %1231 = vmatpush.bf16.msra.mxu0 %v1096
        %1232 = vmatpush.bf16.msra.mxu0 %v1093
        %1233 = vmatpush.bf16.msra.mxu0 %v1090
        %1234 = vmatpush.bf16.msra.mxu0 %v1087
        %1235 = vmatpush.bf16.msra.mxu0 %v1084
        %1236 = vmatmul.bf16.gmra.mxu0 %v954
        %v1237 = vpop.f32.mrf.mxu0
        %v1238 = vadd.f32 %v998, %v1237
        %v1239 = vpop.f32.mrf.mxu0
        %v1240 = vadd.f32 %v998, %v1239
        %1241 = vmatmul.bf16.gmra.mxu0 %v955
        %v1242 = vpop.f32.mrf.mxu0
        %v1243 = vadd.f32 %v998, %v1242
        %v1244 = vpop.f32.mrf.mxu0
        %v1245 = vadd.f32 %v998, %v1244
        %1246 = vmatmul.bf16.gmra.mxu0 %v956
        %v1247 = vpop.f32.mrf.mxu0
        %v1248 = vadd.f32 %v998, %v1247
        %v1249 = vpop.f32.mrf.mxu0
        %v1250 = vadd.f32 %v998, %v1249
        %1251 = vmatmul.bf16.gmra.mxu0 %v957
        %v1252 = vpop.f32.mrf.mxu0
        %v1253 = vadd.f32 %v998, %v1252
        %v1254 = vpop.f32.mrf.mxu0
        %v1255 = vadd.f32 %v998, %v1254
        %1256 = vmatmul.bf16.gmra.mxu0 %v958
        %v1257 = vpop.f32.mrf.mxu0
        %v1258 = vadd.f32 %v998, %v1257
        %v1259 = vpop.f32.mrf.mxu0
        %v1260 = vadd.f32 %v998, %v1259
        %1261 = vmatmul.bf16.gmra.mxu0 %v959
        %v1262 = vpop.f32.mrf.mxu0
        %v1263 = vadd.f32 %v998, %v1262
        %v1264 = vpop.f32.mrf.mxu0
        %v1265 = vadd.f32 %v998, %v1264
        %1266 = vmatmul.bf16.gmra.mxu0 %v960
        %v1267 = vpop.f32.mrf.mxu0
        %v1268 = vadd.f32 %v998, %v1267
        %v1269 = vpop.f32.mrf.mxu0
        %v1270 = vadd.f32 %v998, %v1269
        %1271 = vmatmul.bf16.gmra.mxu0 %v961
        %v1272 = vpop.f32.mrf.mxu0
        %v1273 = vadd.f32 %v998, %v1272
        %v1274 = vpop.f32.mrf.mxu0
        %v1275 = vadd.f32 %v998, %v1274
        %1276 = vdwg.mxu0
        %v1277 = vpack.c.bf16 %v1189, %v1140
        %v1278 = vpack.c.bf16 %v1238, %v1238
        %v1279 = vpack.c.bf16 %v1191, %v1142
        %v1280 = vpack.c.bf16 %v1240, %v1240
        %v1281 = vpack.c.bf16 %v1194, %v1145
        %v1282 = vpack.c.bf16 %v1243, %v1243
        %v1283 = vpack.c.bf16 %v1196, %v1147
        %v1284 = vpack.c.bf16 %v1245, %v1245
        %v1285 = vpack.c.bf16 %v1199, %v1150
        %v1286 = vpack.c.bf16 %v1248, %v1248
        %v1287 = vpack.c.bf16 %v1201, %v1152
        %v1288 = vpack.c.bf16 %v1250, %v1250
        %v1289 = vpack.c.bf16 %v1204, %v1155
        %v1290 = vpack.c.bf16 %v1253, %v1253
        %v1291 = vpack.c.bf16 %v1206, %v1157
        %v1292 = vpack.c.bf16 %v1255, %v1255
        %v1293 = vpack.c.bf16 %v1209, %v1160
        %v1294 = vpack.c.bf16 %v1258, %v1258
        %v1295 = vpack.c.bf16 %v1211, %v1162
        %v1296 = vpack.c.bf16 %v1260, %v1260
        %v1297 = vpack.c.bf16 %v1214, %v1165
        %v1298 = vpack.c.bf16 %v1263, %v1263
        %v1299 = vpack.c.bf16 %v1216, %v1167
        %v1300 = vpack.c.bf16 %v1265, %v1265
        %v1301 = vpack.c.bf16 %v1219, %v1170
        %v1302 = vpack.c.bf16 %v1268, %v1268
        %v1303 = vpack.c.bf16 %v1221, %v1172
        %v1304 = vpack.c.bf16 %v1270, %v1270
        %v1305 = vpack.c.bf16 %v1224, %v1175
        %v1306 = vpack.c.bf16 %v1273, %v1273
        %v1307 = vpack.c.bf16 %v1226, %v1177
        %v1308 = vpack.c.bf16 %v1275, %v1275
        %v1309 = vld [vmem:[#allocation6] sm:$0xff]
        %v1310 = vld [vmem:[#allocation6 + $0x8] sm:$0xff]
        %v1311 = vld [vmem:[#allocation6 + $0x10] sm:$0xff]
        %v1312 = vld [vmem:[#allocation6 + $0x18] sm:$0xff]
        %v1313 = vld [vmem:[#allocation6 + $0x20] sm:$0xff]
        %v1314 = vld [vmem:[#allocation6 + $0x28] sm:$0xff]
        %v1315 = vld [vmem:[#allocation6 + $0x30] sm:$0xff]
        %v1316 = vld [vmem:[#allocation6 + $0x38] sm:$0xff]
        %v1317 = vld [vmem:[#allocation6 + $0x40] sm:$0xff]
        %v1318 = vld [vmem:[#allocation6 + $0x48] sm:$0xff]
        %v1319 = vld [vmem:[#allocation6 + $0x50] sm:$0xff]
        %v1320 = vld [vmem:[#allocation6 + $0x58] sm:$0xff]
        %v1321 = vld [vmem:[#allocation6 + $0x60] sm:$0xff]
        %v1322 = vld [vmem:[#allocation6 + $0x68] sm:$0xff]
        %v1323 = vld [vmem:[#allocation6 + $0x70] sm:$0xff]
        %v1324 = vld [vmem:[#allocation6 + $0x78] sm:$0xff]
        %v1341 = vunpack.c.l.b16 %v1277
        %v1342 = vunpack.c.l.b16 %v1279
        %v1343 = vunpack.c.l.b16 %v1281
        %v1344 = vunpack.c.l.b16 %v1283
        %v1345 = vunpack.c.l.b16 %v1285
        %v1346 = vunpack.c.l.b16 %v1287
        %v1347 = vunpack.c.l.b16 %v1289
        %v1348 = vunpack.c.l.b16 %v1291
        %v1349 = vunpack.c.l.b16 %v1293
        %v1350 = vunpack.c.l.b16 %v1295
        %v1351 = vunpack.c.l.b16 %v1297
        %v1352 = vunpack.c.l.b16 %v1299
        %v1353 = vunpack.c.l.b16 %v1301
        %v1354 = vunpack.c.l.b16 %v1303
        %v1355 = vunpack.c.l.b16 %v1305
        %v1356 = vunpack.c.l.b16 %v1307
        %v1357 = vpack.c.b16 %v1342, %v1341
        %v1358 = vpack.c.b16 %v1344, %v1343
        %v1359 = vpack.c.b16 %v1346, %v1345
        %v1360 = vpack.c.b16 %v1348, %v1347
        %v1361 = vpack.c.b16 %v1350, %v1349
        %v1362 = vpack.c.b16 %v1352, %v1351
        %v1363 = vpack.c.b16 %v1354, %v1353
        %v1364 = vpack.c.b16 %v1356, %v1355
        %v1365 = vunpack.c.h.b16 %v1277
        %v1366 = vunpack.c.h.b16 %v1279
        %v1367 = vunpack.c.h.b16 %v1281
        %v1368 = vunpack.c.h.b16 %v1283
        %v1369 = vunpack.c.h.b16 %v1285
        %v1370 = vunpack.c.h.b16 %v1287
        %v1371 = vunpack.c.h.b16 %v1289
        %v1372 = vunpack.c.h.b16 %v1291
        %v1373 = vunpack.c.h.b16 %v1293
        %v1374 = vunpack.c.h.b16 %v1295
        %v1375 = vunpack.c.h.b16 %v1297
        %v1376 = vunpack.c.h.b16 %v1299
        %v1377 = vunpack.c.h.b16 %v1301
        %v1378 = vunpack.c.h.b16 %v1303
        %v1379 = vunpack.c.h.b16 %v1305
        %v1380 = vunpack.c.h.b16 %v1307
        %v1381 = vpack.c.b16 %v1366, %v1365
        %v1382 = vpack.c.b16 %v1368, %v1367
        %v1383 = vpack.c.b16 %v1370, %v1369
        %v1384 = vpack.c.b16 %v1372, %v1371
        %v1385 = vpack.c.b16 %v1374, %v1373
        %v1386 = vpack.c.b16 %v1376, %v1375
        %v1387 = vpack.c.b16 %v1378, %v1377
        %v1388 = vpack.c.b16 %v1380, %v1379
        %vm1389 = vcmask 261120
        %v1391 = vsel %vm1389, %v1357, 0
        %v1394 = vsel %vm1389, %v1358, 0
        %v1397 = vsel %vm1389, %v1359, 0
        %v1400 = vsel %vm1389, %v1360, 0
        %v1403 = vsel %vm1389, %v1361, 0
        %v1406 = vsel %vm1389, %v1362, 0
        %v1409 = vsel %vm1389, %v1363, 0
        %v1412 = vsel %vm1389, %v1364, 0
        %v1415 = vsel %vm1389, %v1381, 0
        %v1418 = vsel %vm1389, %v1382, 0
        %v1421 = vsel %vm1389, %v1383, 0
        %v1424 = vsel %vm1389, %v1384, 0
        %v1427 = vsel %vm1389, %v1385, 0
        %v1430 = vsel %vm1389, %v1386, 0
        %v1433 = vsel %vm1389, %v1387, 0
        %v1436 = vsel %vm1389, %v1388, 0
        %1438 = vmatpush.bf16.xpose.msra.mxu0 %v1436
        %1439 = vmatpush.bf16.xpose.msra.mxu0 %v1433
        %1440 = vmatpush.bf16.xpose.msra.mxu0 %v1430
        %1441 = vmatpush.bf16.xpose.msra.mxu0 %v1427
        %1442 = vmatpush.bf16.xpose.msra.mxu0 %v1424
        %1443 = vmatpush.bf16.xpose.msra.mxu0 %v1421
        %1444 = vmatpush.bf16.xpose.msra.mxu0 %v1418
        %1445 = vmatpush.bf16.xpose.msra.mxu0 %v1415
        %1446 = vmatmul.bf16.gmra.mxu0 %v1391
        %v1447 = vpop.f32.mrf.mxu0
        %v1448 = vadd.f32 %v1309, %v1447
        %v1449 = vpop.f32.mrf.mxu0
        %v1450 = vadd.f32 %v1310, %v1449
        %1451 = vmatmul.bf16.gmra.mxu0 %v1394
        %v1452 = vpop.f32.mrf.mxu0
        %v1453 = vadd.f32 %v1311, %v1452
        %v1454 = vpop.f32.mrf.mxu0
        %v1455 = vadd.f32 %v1312, %v1454
        %1456 = vmatmul.bf16.gmra.mxu0 %v1397
        %v1457 = vpop.f32.mrf.mxu0
        %v1458 = vadd.f32 %v1313, %v1457
        %v1459 = vpop.f32.mrf.mxu0
        %v1460 = vadd.f32 %v1314, %v1459
        %1461 = vmatmul.bf16.gmra.mxu0 %v1400
        %v1462 = vpop.f32.mrf.mxu0
        %v1463 = vadd.f32 %v1315, %v1462
        %v1464 = vpop.f32.mrf.mxu0
        %v1465 = vadd.f32 %v1316, %v1464
        %1466 = vmatmul.bf16.gmra.mxu0 %v1403
        %v1467 = vpop.f32.mrf.mxu0
        %v1468 = vadd.f32 %v1317, %v1467
        %v1469 = vpop.f32.mrf.mxu0
        %v1470 = vadd.f32 %v1318, %v1469
        %1471 = vmatmul.bf16.gmra.mxu0 %v1406
        %v1472 = vpop.f32.mrf.mxu0
        %v1473 = vadd.f32 %v1319, %v1472
        %v1474 = vpop.f32.mrf.mxu0
        %v1475 = vadd.f32 %v1320, %v1474
        %1476 = vmatmul.bf16.gmra.mxu0 %v1409
        %v1477 = vpop.f32.mrf.mxu0
        %v1478 = vadd.f32 %v1321, %v1477
        %v1479 = vpop.f32.mrf.mxu0
        %v1480 = vadd.f32 %v1322, %v1479
        %1481 = vmatmul.bf16.gmra.mxu0 %v1412
        %v1482 = vpop.f32.mrf.mxu0
        %v1483 = vadd.f32 %v1323, %v1482
        %v1484 = vpop.f32.mrf.mxu0
        %v1485 = vadd.f32 %v1324, %v1484
        %1486 = vdwg.mxu0
        %1487 = vmax.xlane.f32.xlu0 %v1448
        %v1488 = vpop.xlane.xlu0 %1487
        %1489 = vmax.xlane.f32.xlu0 %v1450
        %v1490 = vpop.xlane.xlu0 %1489
        %1491 = vmax.xlane.f32.xlu0 %v1453
        %v1492 = vpop.xlane.xlu0 %1491
        %1493 = vmax.xlane.f32.xlu0 %v1455
        %v1494 = vpop.xlane.xlu0 %1493
        %1495 = vmax.xlane.f32.xlu0 %v1458
        %v1496 = vpop.xlane.xlu0 %1495
        %1497 = vmax.xlane.f32.xlu0 %v1460
        %v1498 = vpop.xlane.xlu0 %1497
        %1499 = vmax.xlane.f32.xlu0 %v1463
        %v1500 = vpop.xlane.xlu0 %1499
        %1501 = vmax.xlane.f32.xlu0 %v1465
        %v1502 = vpop.xlane.xlu0 %1501
        %1503 = vmax.xlane.f32.xlu0 %v1468
        %v1504 = vpop.xlane.xlu0 %1503
        %1505 = vmax.xlane.f32.xlu0 %v1470
        %v1506 = vpop.xlane.xlu0 %1505
        %1507 = vmax.xlane.f32.xlu0 %v1473
        %v1508 = vpop.xlane.xlu0 %1507
        %1509 = vmax.xlane.f32.xlu0 %v1475
        %v1510 = vpop.xlane.xlu0 %1509
        %1511 = vmax.xlane.f32.xlu0 %v1478
        %v1512 = vpop.xlane.xlu0 %1511
        %1513 = vmax.xlane.f32.xlu0 %v1480
        %v1514 = vpop.xlane.xlu0 %1513
        %1515 = vmax.xlane.f32.xlu0 %v1483
        %v1516 = vpop.xlane.xlu0 %1515
        %1517 = vmax.xlane.f32.xlu0 %v1485
        %v1518 = vpop.xlane.xlu0 %1517
        %v1519 = vsub.f32 %v1448, %v1488
        %v1520 = vsub.f32 %v1450, %v1490
        %v1521 = vsub.f32 %v1453, %v1492
        %v1522 = vsub.f32 %v1455, %v1494
        %v1523 = vsub.f32 %v1458, %v1496
        %v1524 = vsub.f32 %v1460, %v1498
        %v1525 = vsub.f32 %v1463, %v1500
        %v1526 = vsub.f32 %v1465, %v1502
        %v1527 = vsub.f32 %v1468, %v1504
        %v1528 = vsub.f32 %v1470, %v1506
        %v1529 = vsub.f32 %v1473, %v1508
        %v1530 = vsub.f32 %v1475, %v1510
        %v1531 = vsub.f32 %v1478, %v1512
        %v1532 = vsub.f32 %v1480, %v1514
        %v1533 = vsub.f32 %v1483, %v1516
        %v1534 = vsub.f32 %v1485, %v1518
        %v1535 = vmul.f32 %v1519, 1.442695
        %v1536 = vpow.pop %v1535
        %v1537 = vmul.f32 %v1520, 1.442695
        %v1538 = vpow.pop %v1537
        %v1539 = vmul.f32 %v1521, 1.442695
        %v1540 = vpow.pop %v1539
        %v1541 = vmul.f32 %v1522, 1.442695
        %v1542 = vpow.pop %v1541
        %v1543 = vmul.f32 %v1523, 1.442695
        %v1544 = vpow.pop %v1543
        %v1545 = vmul.f32 %v1524, 1.442695
        %v1546 = vpow.pop %v1545
        %v1547 = vmul.f32 %v1525, 1.442695
        %v1548 = vpow.pop %v1547
        %v1549 = vmul.f32 %v1526, 1.442695
        %v1550 = vpow.pop %v1549
        %v1551 = vmul.f32 %v1527, 1.442695
        %v1552 = vpow.pop %v1551
        %v1553 = vmul.f32 %v1528, 1.442695
        %v1554 = vpow.pop %v1553
        %v1555 = vmul.f32 %v1529, 1.442695
        %v1556 = vpow.pop %v1555
        %v1557 = vmul.f32 %v1530, 1.442695
        %v1558 = vpow.pop %v1557
        %v1559 = vmul.f32 %v1531, 1.442695
        %v1560 = vpow.pop %v1559
        %v1561 = vmul.f32 %v1532, 1.442695
        %v1562 = vpow.pop %v1561
        %v1563 = vmul.f32 %v1533, 1.442695
        %v1564 = vpow.pop %v1563
        %v1565 = vmul.f32 %v1534, 1.442695
        %v1566 = vpow.pop %v1565
        %1567 = vadd.xlane.f32.xlu0 %v1536
        %v1568 = vpop.xlane.xlu0 %1567
        %1569 = vadd.xlane.f32.xlu0 %v1538
        %v1570 = vpop.xlane.xlu0 %1569
        %1571 = vadd.xlane.f32.xlu0 %v1540
        %v1572 = vpop.xlane.xlu0 %1571
        %1573 = vadd.xlane.f32.xlu0 %v1542
        %v1574 = vpop.xlane.xlu0 %1573
        %1575 = vadd.xlane.f32.xlu0 %v1544
        %v1576 = vpop.xlane.xlu0 %1575
        %1577 = vadd.xlane.f32.xlu0 %v1546
        %v1578 = vpop.xlane.xlu0 %1577
        %1579 = vadd.xlane.f32.xlu0 %v1548
        %v1580 = vpop.xlane.xlu0 %1579
        %1581 = vadd.xlane.f32.xlu0 %v1550
        %v1582 = vpop.xlane.xlu0 %1581
        %1583 = vadd.xlane.f32.xlu0 %v1552
        %v1584 = vpop.xlane.xlu0 %1583
        %1585 = vadd.xlane.f32.xlu0 %v1554
        %v1586 = vpop.xlane.xlu0 %1585
        %1587 = vadd.xlane.f32.xlu0 %v1556
        %v1588 = vpop.xlane.xlu0 %1587
        %1589 = vadd.xlane.f32.xlu0 %v1558
        %v1590 = vpop.xlane.xlu0 %1589
        %1591 = vadd.xlane.f32.xlu0 %v1560
        %v1592 = vpop.xlane.xlu0 %1591
        %1593 = vadd.xlane.f32.xlu0 %v1562
        %v1594 = vpop.xlane.xlu0 %1593
        %1595 = vadd.xlane.f32.xlu0 %v1564
        %v1596 = vpop.xlane.xlu0 %1595
        %1597 = vadd.xlane.f32.xlu0 %v1566
        %v1598 = vpop.xlane.xlu0 %1597
        %v1599 = vrcp.pop %v1568
        %v1600 = vrcp.pop %v1570
        %v1601 = vrcp.pop %v1572
        %v1602 = vrcp.pop %v1574
        %v1603 = vrcp.pop %v1576
        %v1604 = vrcp.pop %v1578
        %v1605 = vrcp.pop %v1580
        %v1606 = vrcp.pop %v1582
        %v1607 = vrcp.pop %v1584
        %v1608 = vrcp.pop %v1586
        %v1609 = vrcp.pop %v1588
        %v1610 = vrcp.pop %v1590
        %v1611 = vrcp.pop %v1592
        %v1612 = vrcp.pop %v1594
        %v1613 = vrcp.pop %v1596
        %v1614 = vrcp.pop %v1598
        %v1615 = vmul.f32 %v1536, %v1599
        %v1616 = vmul.f32 %v1538, %v1600
        %v1617 = vmul.f32 %v1540, %v1601
        %v1618 = vmul.f32 %v1542, %v1602
        %v1619 = vmul.f32 %v1544, %v1603
        %v1620 = vmul.f32 %v1546, %v1604
        %v1621 = vmul.f32 %v1548, %v1605
        %v1622 = vmul.f32 %v1550, %v1606
        %v1623 = vmul.f32 %v1552, %v1607
        %v1624 = vmul.f32 %v1554, %v1608
        %v1625 = vmul.f32 %v1556, %v1609
        %v1626 = vmul.f32 %v1558, %v1610
        %v1627 = vmul.f32 %v1560, %v1611
        %v1628 = vmul.f32 %v1562, %v1612
        %v1629 = vmul.f32 %v1564, %v1613
        %v1630 = vmul.f32 %v1566, %v1614
        %v1631 = vpack.c.bf16 %v1616, %v1615
        %v1632 = vpack.c.bf16 %v1618, %v1617
        %v1633 = vpack.c.bf16 %v1620, %v1619
        %v1634 = vpack.c.bf16 %v1622, %v1621
        %v1635 = vpack.c.bf16 %v1624, %v1623
        %v1636 = vpack.c.bf16 %v1626, %v1625
        %v1637 = vpack.c.bf16 %v1628, %v1627
        %v1638 = vpack.c.bf16 %v1630, %v1629
        %v1655 = vunpack.c.l.b16 %v1278
        %v1656 = vunpack.c.l.b16 %v1280
        %v1657 = vunpack.c.l.b16 %v1282
        %v1658 = vunpack.c.l.b16 %v1284
        %v1659 = vunpack.c.l.b16 %v1286
        %v1660 = vunpack.c.l.b16 %v1288
        %v1661 = vunpack.c.l.b16 %v1290
        %v1662 = vunpack.c.l.b16 %v1292
        %v1663 = vunpack.c.l.b16 %v1294
        %v1664 = vunpack.c.l.b16 %v1296
        %v1665 = vunpack.c.l.b16 %v1298
        %v1666 = vunpack.c.l.b16 %v1300
        %v1667 = vunpack.c.l.b16 %v1302
        %v1668 = vunpack.c.l.b16 %v1304
        %v1669 = vunpack.c.l.b16 %v1306
        %v1670 = vunpack.c.l.b16 %v1308
        %v1671 = vpack.c.b16 %v1656, %v1655
        %v1672 = vpack.c.b16 %v1658, %v1657
        %v1673 = vpack.c.b16 %v1660, %v1659
        %v1674 = vpack.c.b16 %v1662, %v1661
        %v1675 = vpack.c.b16 %v1664, %v1663
        %v1676 = vpack.c.b16 %v1666, %v1665
        %v1677 = vpack.c.b16 %v1668, %v1667
        %v1678 = vpack.c.b16 %v1670, %v1669
        %1687 = vmatpush.bf16.msra.mxu0 %v1678
        %1688 = vmatpush.bf16.msra.mxu0 %v1677
        %1689 = vmatpush.bf16.msra.mxu0 %v1676
        %1690 = vmatpush.bf16.msra.mxu0 %v1675
        %1691 = vmatpush.bf16.msra.mxu0 %v1674
        %1692 = vmatpush.bf16.msra.mxu0 %v1673
        %1693 = vmatpush.bf16.msra.mxu0 %v1672
        %1694 = vmatpush.bf16.msra.mxu0 %v1671
        %1695 = vmatmul.bf16.gmra.mxu0 %v1631
        %v1696 = vpop.f32.mrf.mxu0
        %v1697 = vadd.f32 0.0, %v1696
        %v1698 = vpop.f32.mrf.mxu0
        %v1699 = vadd.f32 0.0, %v1698
        %1700 = vmatmul.bf16.gmra.mxu0 %v1632
        %v1701 = vpop.f32.mrf.mxu0
        %v1702 = vadd.f32 0.0, %v1701
        %v1703 = vpop.f32.mrf.mxu0
        %v1704 = vadd.f32 0.0, %v1703
        %1705 = vmatmul.bf16.gmra.mxu0 %v1633
        %v1706 = vpop.f32.mrf.mxu0
        %v1707 = vadd.f32 0.0, %v1706
        %v1708 = vpop.f32.mrf.mxu0
        %v1709 = vadd.f32 0.0, %v1708
        %1710 = vmatmul.bf16.gmra.mxu0 %v1634
        %v1711 = vpop.f32.mrf.mxu0
        %v1712 = vadd.f32 0.0, %v1711
        %v1713 = vpop.f32.mrf.mxu0
        %v1714 = vadd.f32 0.0, %v1713
        %1715 = vmatmul.bf16.gmra.mxu0 %v1635
        %v1716 = vpop.f32.mrf.mxu0
        %v1717 = vadd.f32 0.0, %v1716
        %v1718 = vpop.f32.mrf.mxu0
        %v1719 = vadd.f32 0.0, %v1718
        %1720 = vmatmul.bf16.gmra.mxu0 %v1636
        %v1721 = vpop.f32.mrf.mxu0
        %v1722 = vadd.f32 0.0, %v1721
        %v1723 = vpop.f32.mrf.mxu0
        %v1724 = vadd.f32 0.0, %v1723
        %1725 = vmatmul.bf16.gmra.mxu0 %v1637
        %v1726 = vpop.f32.mrf.mxu0
        %v1727 = vadd.f32 0.0, %v1726
        %v1728 = vpop.f32.mrf.mxu0
        %v1729 = vadd.f32 0.0, %v1728
        %1730 = vmatmul.bf16.gmra.mxu0 %v1638
        %v1731 = vpop.f32.mrf.mxu0
        %v1732 = vadd.f32 0.0, %v1731
        %v1733 = vpop.f32.mrf.mxu0
        %v1734 = vadd.f32 0.0, %v1733
        %1735 = vdwg.mxu0
        %1736 = vrot.lane.b32.xlu0 %v1357, 96
        %v1737 = vpop.permute.xlu0 %1736
        %1738 = vrot.lane.b32.xlu0 %v1358, 96
        %v1739 = vpop.permute.xlu0 %1738
        %1740 = vrot.lane.b32.xlu0 %v1359, 96
        %v1741 = vpop.permute.xlu0 %1740
        %1742 = vrot.lane.b32.xlu0 %v1360, 96
        %v1743 = vpop.permute.xlu0 %1742
        %1744 = vrot.lane.b32.xlu0 %v1361, 96
        %v1745 = vpop.permute.xlu0 %1744
        %1746 = vrot.lane.b32.xlu0 %v1362, 96
        %v1747 = vpop.permute.xlu0 %1746
        %1748 = vrot.lane.b32.xlu0 %v1363, 96
        %v1749 = vpop.permute.xlu0 %1748
        %1750 = vrot.lane.b32.xlu0 %v1364, 96
        %v1751 = vpop.permute.xlu0 %1750
        %1752 = vrot.lane.b32.xlu0 %v1381, 96
        %v1753 = vpop.permute.xlu0 %1752
        %1754 = vrot.lane.b32.xlu0 %v1382, 96
        %v1755 = vpop.permute.xlu0 %1754
        %1756 = vrot.lane.b32.xlu0 %v1383, 96
        %v1757 = vpop.permute.xlu0 %1756
        %1758 = vrot.lane.b32.xlu0 %v1384, 96
        %v1759 = vpop.permute.xlu0 %1758
        %1760 = vrot.lane.b32.xlu0 %v1385, 96
        %v1761 = vpop.permute.xlu0 %1760
        %1762 = vrot.lane.b32.xlu0 %v1386, 96
        %v1763 = vpop.permute.xlu0 %1762
        %1764 = vrot.lane.b32.xlu0 %v1387, 96
        %v1765 = vpop.permute.xlu0 %1764
        %1766 = vrot.lane.b32.xlu0 %v1388, 96
        %v1767 = vpop.permute.xlu0 %1766
        %v1769 = vsel %vm1389, %v1737, 0
        %v1772 = vsel %vm1389, %v1739, 0
        %v1775 = vsel %vm1389, %v1741, 0
        %v1778 = vsel %vm1389, %v1743, 0
        %v1781 = vsel %vm1389, %v1745, 0
        %v1784 = vsel %vm1389, %v1747, 0
        %v1787 = vsel %vm1389, %v1749, 0
        %v1790 = vsel %vm1389, %v1751, 0
        %v1793 = vsel %vm1389, %v1753, 0
        %v1796 = vsel %vm1389, %v1755, 0
        %v1799 = vsel %vm1389, %v1757, 0
        %v1802 = vsel %vm1389, %v1759, 0
        %v1805 = vsel %vm1389, %v1761, 0
        %v1808 = vsel %vm1389, %v1763, 0
        %v1811 = vsel %vm1389, %v1765, 0
        %v1814 = vsel %vm1389, %v1767, 0
        %1816 = vmatpush.bf16.xpose.msra.mxu0 %v1814
        %1817 = vmatpush.bf16.xpose.msra.mxu0 %v1811
        %1818 = vmatpush.bf16.xpose.msra.mxu0 %v1808
        %1819 = vmatpush.bf16.xpose.msra.mxu0 %v1805
        %1820 = vmatpush.bf16.xpose.msra.mxu0 %v1802
        %1821 = vmatpush.bf16.xpose.msra.mxu0 %v1799
        %1822 = vmatpush.bf16.xpose.msra.mxu0 %v1796
        %1823 = vmatpush.bf16.xpose.msra.mxu0 %v1793
        %1824 = vmatmul.bf16.gmra.mxu0 %v1769
        %v1825 = vpop.f32.mrf.mxu0
        %v1826 = vadd.f32 %v1309, %v1825
        %v1827 = vpop.f32.mrf.mxu0
        %v1828 = vadd.f32 %v1310, %v1827
        %1829 = vmatmul.bf16.gmra.mxu0 %v1772
        %v1830 = vpop.f32.mrf.mxu0
        %v1831 = vadd.f32 %v1311, %v1830
        %v1832 = vpop.f32.mrf.mxu0
        %v1833 = vadd.f32 %v1312, %v1832
        %1834 = vmatmul.bf16.gmra.mxu0 %v1775
        %v1835 = vpop.f32.mrf.mxu0
        %v1836 = vadd.f32 %v1313, %v1835
        %v1837 = vpop.f32.mrf.mxu0
        %v1838 = vadd.f32 %v1314, %v1837
        %1839 = vmatmul.bf16.gmra.mxu0 %v1778
        %v1840 = vpop.f32.mrf.mxu0
        %v1841 = vadd.f32 %v1315, %v1840
        %v1842 = vpop.f32.mrf.mxu0
        %v1843 = vadd.f32 %v1316, %v1842
        %1844 = vmatmul.bf16.gmra.mxu0 %v1781
        %v1845 = vpop.f32.mrf.mxu0
        %v1846 = vadd.f32 %v1317, %v1845
        %v1847 = vpop.f32.mrf.mxu0
        %v1848 = vadd.f32 %v1318, %v1847
        %1849 = vmatmul.bf16.gmra.mxu0 %v1784
        %v1850 = vpop.f32.mrf.mxu0
        %v1851 = vadd.f32 %v1319, %v1850
        %v1852 = vpop.f32.mrf.mxu0
        %v1853 = vadd.f32 %v1320, %v1852
        %1854 = vmatmul.bf16.gmra.mxu0 %v1787
        %v1855 = vpop.f32.mrf.mxu0
        %v1856 = vadd.f32 %v1321, %v1855
        %v1857 = vpop.f32.mrf.mxu0
        %v1858 = vadd.f32 %v1322, %v1857
        %1859 = vmatmul.bf16.gmra.mxu0 %v1790
        %v1860 = vpop.f32.mrf.mxu0
        %v1861 = vadd.f32 %v1323, %v1860
        %v1862 = vpop.f32.mrf.mxu0
        %v1863 = vadd.f32 %v1324, %v1862
        %1864 = vdwg.mxu0
        %1865 = vmax.xlane.f32.xlu0 %v1826
        %v1866 = vpop.xlane.xlu0 %1865
        %1867 = vmax.xlane.f32.xlu0 %v1828
        %v1868 = vpop.xlane.xlu0 %1867
        %1869 = vmax.xlane.f32.xlu0 %v1831
        %v1870 = vpop.xlane.xlu0 %1869
        %1871 = vmax.xlane.f32.xlu0 %v1833
        %v1872 = vpop.xlane.xlu0 %1871
        %1873 = vmax.xlane.f32.xlu0 %v1836
        %v1874 = vpop.xlane.xlu0 %1873
        %1875 = vmax.xlane.f32.xlu0 %v1838
        %v1876 = vpop.xlane.xlu0 %1875
        %1877 = vmax.xlane.f32.xlu0 %v1841
        %v1878 = vpop.xlane.xlu0 %1877
        %1879 = vmax.xlane.f32.xlu0 %v1843
        %v1880 = vpop.xlane.xlu0 %1879
        %1881 = vmax.xlane.f32.xlu0 %v1846
        %v1882 = vpop.xlane.xlu0 %1881
        %1883 = vmax.xlane.f32.xlu0 %v1848
        %v1884 = vpop.xlane.xlu0 %1883
        %1885 = vmax.xlane.f32.xlu0 %v1851
        %v1886 = vpop.xlane.xlu0 %1885
        %1887 = vmax.xlane.f32.xlu0 %v1853
        %v1888 = vpop.xlane.xlu0 %1887
        %1889 = vmax.xlane.f32.xlu0 %v1856
        %v1890 = vpop.xlane.xlu0 %1889
        %1891 = vmax.xlane.f32.xlu0 %v1858
        %v1892 = vpop.xlane.xlu0 %1891
        %1893 = vmax.xlane.f32.xlu0 %v1861
        %v1894 = vpop.xlane.xlu0 %1893
        %1895 = vmax.xlane.f32.xlu0 %v1863
        %v1896 = vpop.xlane.xlu0 %1895
        %v1897 = vsub.f32 %v1826, %v1866
        %v1898 = vsub.f32 %v1828, %v1868
        %v1899 = vsub.f32 %v1831, %v1870
        %v1900 = vsub.f32 %v1833, %v1872
        %v1901 = vsub.f32 %v1836, %v1874
        %v1902 = vsub.f32 %v1838, %v1876
        %v1903 = vsub.f32 %v1841, %v1878
        %v1904 = vsub.f32 %v1843, %v1880
        %v1905 = vsub.f32 %v1846, %v1882
        %v1906 = vsub.f32 %v1848, %v1884
        %v1907 = vsub.f32 %v1851, %v1886
        %v1908 = vsub.f32 %v1853, %v1888
        %v1909 = vsub.f32 %v1856, %v1890
        %v1910 = vsub.f32 %v1858, %v1892
        %v1911 = vsub.f32 %v1861, %v1894
        %v1912 = vsub.f32 %v1863, %v1896
        %v1913 = vmul.f32 %v1897, 1.442695
        %v1914 = vpow.pop %v1913
        %v1915 = vmul.f32 %v1898, 1.442695
        %v1916 = vpow.pop %v1915
        %v1917 = vmul.f32 %v1899, 1.442695
        %v1918 = vpow.pop %v1917
        %v1919 = vmul.f32 %v1900, 1.442695
        %v1920 = vpow.pop %v1919
        %v1921 = vmul.f32 %v1901, 1.442695
        %v1922 = vpow.pop %v1921
        %v1923 = vmul.f32 %v1902, 1.442695
        %v1924 = vpow.pop %v1923
        %v1925 = vmul.f32 %v1903, 1.442695
        %v1926 = vpow.pop %v1925
        %v1927 = vmul.f32 %v1904, 1.442695
        %v1928 = vpow.pop %v1927
        %v1929 = vmul.f32 %v1905, 1.442695
        %v1930 = vpow.pop %v1929
        %v1931 = vmul.f32 %v1906, 1.442695
        %v1932 = vpow.pop %v1931
        %v1933 = vmul.f32 %v1907, 1.442695
        %v1934 = vpow.pop %v1933
        %v1935 = vmul.f32 %v1908, 1.442695
        %v1936 = vpow.pop %v1935
        %v1937 = vmul.f32 %v1909, 1.442695
        %v1938 = vpow.pop %v1937
        %v1939 = vmul.f32 %v1910, 1.442695
        %v1940 = vpow.pop %v1939
        %v1941 = vmul.f32 %v1911, 1.442695
        %v1942 = vpow.pop %v1941
        %v1943 = vmul.f32 %v1912, 1.442695
        %v1944 = vpow.pop %v1943
        %1945 = vadd.xlane.f32.xlu0 %v1914
        %v1946 = vpop.xlane.xlu0 %1945
        %1947 = vadd.xlane.f32.xlu0 %v1916
        %v1948 = vpop.xlane.xlu0 %1947
        %1949 = vadd.xlane.f32.xlu0 %v1918
        %v1950 = vpop.xlane.xlu0 %1949
        %1951 = vadd.xlane.f32.xlu0 %v1920
        %v1952 = vpop.xlane.xlu0 %1951
        %1953 = vadd.xlane.f32.xlu0 %v1922
        %v1954 = vpop.xlane.xlu0 %1953
        %1955 = vadd.xlane.f32.xlu0 %v1924
        %v1956 = vpop.xlane.xlu0 %1955
        %1957 = vadd.xlane.f32.xlu0 %v1926
        %v1958 = vpop.xlane.xlu0 %1957
        %1959 = vadd.xlane.f32.xlu0 %v1928
        %v1960 = vpop.xlane.xlu0 %1959
        %1961 = vadd.xlane.f32.xlu0 %v1930
        %v1962 = vpop.xlane.xlu0 %1961
        %1963 = vadd.xlane.f32.xlu0 %v1932
        %v1964 = vpop.xlane.xlu0 %1963
        %1965 = vadd.xlane.f32.xlu0 %v1934
        %v1966 = vpop.xlane.xlu0 %1965
        %1967 = vadd.xlane.f32.xlu0 %v1936
        %v1968 = vpop.xlane.xlu0 %1967
        %1969 = vadd.xlane.f32.xlu0 %v1938
        %v1970 = vpop.xlane.xlu0 %1969
        %1971 = vadd.xlane.f32.xlu0 %v1940
        %v1972 = vpop.xlane.xlu0 %1971
        %1973 = vadd.xlane.f32.xlu0 %v1942
        %v1974 = vpop.xlane.xlu0 %1973
        %1975 = vadd.xlane.f32.xlu0 %v1944
        %v1976 = vpop.xlane.xlu0 %1975
        %v1977 = vrcp.pop %v1946
        %v1978 = vrcp.pop %v1948
        %v1979 = vrcp.pop %v1950
        %v1980 = vrcp.pop %v1952
        %v1981 = vrcp.pop %v1954
        %v1982 = vrcp.pop %v1956
        %v1983 = vrcp.pop %v1958
        %v1984 = vrcp.pop %v1960
        %v1985 = vrcp.pop %v1962
        %v1986 = vrcp.pop %v1964
        %v1987 = vrcp.pop %v1966
        %v1988 = vrcp.pop %v1968
        %v1989 = vrcp.pop %v1970
        %v1990 = vrcp.pop %v1972
        %v1991 = vrcp.pop %v1974
        %v1992 = vrcp.pop %v1976
        %v1993 = vmul.f32 %v1914, %v1977
        %v1994 = vmul.f32 %v1916, %v1978
        %v1995 = vmul.f32 %v1918, %v1979
        %v1996 = vmul.f32 %v1920, %v1980
        %v1997 = vmul.f32 %v1922, %v1981
        %v1998 = vmul.f32 %v1924, %v1982
        %v1999 = vmul.f32 %v1926, %v1983
        %v2000 = vmul.f32 %v1928, %v1984
        %v2001 = vmul.f32 %v1930, %v1985
        %v2002 = vmul.f32 %v1932, %v1986
        %v2003 = vmul.f32 %v1934, %v1987
        %v2004 = vmul.f32 %v1936, %v1988
        %v2005 = vmul.f32 %v1938, %v1989
        %v2006 = vmul.f32 %v1940, %v1990
        %v2007 = vmul.f32 %v1942, %v1991
        %v2008 = vmul.f32 %v1944, %v1992
        %v2009 = vpack.c.bf16 %v1994, %v1993
        %v2010 = vpack.c.bf16 %v1996, %v1995
        %v2011 = vpack.c.bf16 %v1998, %v1997
        %v2012 = vpack.c.bf16 %v2000, %v1999
        %v2013 = vpack.c.bf16 %v2002, %v2001
        %v2014 = vpack.c.bf16 %v2004, %v2003
        %v2015 = vpack.c.bf16 %v2006, %v2005
        %v2016 = vpack.c.bf16 %v2008, %v2007
        %2017 = vrot.lane.b32.xlu0 %v1671, 96
        %v2018 = vpop.permute.xlu0 %2017
        %2019 = vrot.lane.b32.xlu0 %v1672, 96
        %v2020 = vpop.permute.xlu0 %2019
        %2021 = vrot.lane.b32.xlu0 %v1673, 96
        %v2022 = vpop.permute.xlu0 %2021
        %2023 = vrot.lane.b32.xlu0 %v1674, 96
        %v2024 = vpop.permute.xlu0 %2023
        %2025 = vrot.lane.b32.xlu0 %v1675, 96
        %v2026 = vpop.permute.xlu0 %2025
        %2027 = vrot.lane.b32.xlu0 %v1676, 96
        %v2028 = vpop.permute.xlu0 %2027
        %2029 = vrot.lane.b32.xlu0 %v1677, 96
        %v2030 = vpop.permute.xlu0 %2029
        %2031 = vrot.lane.b32.xlu0 %v1678, 96
        %v2032 = vpop.permute.xlu0 %2031
        %2041 = vmatpush.bf16.msra.mxu0 %v2032
        %2042 = vmatpush.bf16.msra.mxu0 %v2030
        %2043 = vmatpush.bf16.msra.mxu0 %v2028
        %2044 = vmatpush.bf16.msra.mxu0 %v2026
        %2045 = vmatpush.bf16.msra.mxu0 %v2024
        %2046 = vmatpush.bf16.msra.mxu0 %v2022
        %2047 = vmatpush.bf16.msra.mxu0 %v2020
        %2048 = vmatpush.bf16.msra.mxu0 %v2018
        %2049 = vmatmul.bf16.gmra.mxu0 %v2009
        %v2050 = vpop.f32.mrf.mxu0
        %v2051 = vadd.f32 0.0, %v2050
        %v2052 = vpop.f32.mrf.mxu0
        %v2053 = vadd.f32 0.0, %v2052
        %2054 = vmatmul.bf16.gmra.mxu0 %v2010
        %v2055 = vpop.f32.mrf.mxu0
        %v2056 = vadd.f32 0.0, %v2055
        %v2057 = vpop.f32.mrf.mxu0
        %v2058 = vadd.f32 0.0, %v2057
        %2059 = vmatmul.bf16.gmra.mxu0 %v2011
        %v2060 = vpop.f32.mrf.mxu0
        %v2061 = vadd.f32 0.0, %v2060
        %v2062 = vpop.f32.mrf.mxu0
        %v2063 = vadd.f32 0.0, %v2062
        %2064 = vmatmul.bf16.gmra.mxu0 %v2012
        %v2065 = vpop.f32.mrf.mxu0
        %v2066 = vadd.f32 0.0, %v2065
        %v2067 = vpop.f32.mrf.mxu0
        %v2068 = vadd.f32 0.0, %v2067
        %2069 = vmatmul.bf16.gmra.mxu0 %v2013
        %v2070 = vpop.f32.mrf.mxu0
        %v2071 = vadd.f32 0.0, %v2070
        %v2072 = vpop.f32.mrf.mxu0
        %v2073 = vadd.f32 0.0, %v2072
        %2074 = vmatmul.bf16.gmra.mxu0 %v2014
        %v2075 = vpop.f32.mrf.mxu0
        %v2076 = vadd.f32 0.0, %v2075
        %v2077 = vpop.f32.mrf.mxu0
        %v2078 = vadd.f32 0.0, %v2077
        %2079 = vmatmul.bf16.gmra.mxu0 %v2015
        %v2080 = vpop.f32.mrf.mxu0
        %v2081 = vadd.f32 0.0, %v2080
        %v2082 = vpop.f32.mrf.mxu0
        %v2083 = vadd.f32 0.0, %v2082
        %2084 = vmatmul.bf16.gmra.mxu0 %v2016
        %v2085 = vpop.f32.mrf.mxu0
        %v2086 = vadd.f32 0.0, %v2085
        %v2087 = vpop.f32.mrf.mxu0
        %v2088 = vadd.f32 0.0, %v2087
        %2089 = vdwg.mxu0
        %2090 = vrot.lane.b32.xlu0 %v1357, 64
        %v2091 = vpop.permute.xlu0 %2090
        %2092 = vrot.lane.b32.xlu0 %v1358, 64
        %v2093 = vpop.permute.xlu0 %2092
        %2094 = vrot.lane.b32.xlu0 %v1359, 64
        %v2095 = vpop.permute.xlu0 %2094
        %2096 = vrot.lane.b32.xlu0 %v1360, 64
        %v2097 = vpop.permute.xlu0 %2096
        %2098 = vrot.lane.b32.xlu0 %v1361, 64
        %v2099 = vpop.permute.xlu0 %2098
        %2100 = vrot.lane.b32.xlu0 %v1362, 64
        %v2101 = vpop.permute.xlu0 %2100
        %2102 = vrot.lane.b32.xlu0 %v1363, 64
        %v2103 = vpop.permute.xlu0 %2102
        %2104 = vrot.lane.b32.xlu0 %v1364, 64
        %v2105 = vpop.permute.xlu0 %2104
        %2106 = vrot.lane.b32.xlu0 %v1381, 64
        %v2107 = vpop.permute.xlu0 %2106
        %2108 = vrot.lane.b32.xlu0 %v1382, 64
        %v2109 = vpop.permute.xlu0 %2108
        %2110 = vrot.lane.b32.xlu0 %v1383, 64
        %v2111 = vpop.permute.xlu0 %2110
        %2112 = vrot.lane.b32.xlu0 %v1384, 64
        %v2113 = vpop.permute.xlu0 %2112
        %2114 = vrot.lane.b32.xlu0 %v1385, 64
        %v2115 = vpop.permute.xlu0 %2114
        %2116 = vrot.lane.b32.xlu0 %v1386, 64
        %v2117 = vpop.permute.xlu0 %2116
        %2118 = vrot.lane.b32.xlu0 %v1387, 64
        %v2119 = vpop.permute.xlu0 %2118
        %2120 = vrot.lane.b32.xlu0 %v1388, 64
        %v2121 = vpop.permute.xlu0 %2120
        %v2123 = vsel %vm1389, %v2091, 0
        %v2126 = vsel %vm1389, %v2093, 0
        %v2129 = vsel %vm1389, %v2095, 0
        %v2132 = vsel %vm1389, %v2097, 0
        %v2135 = vsel %vm1389, %v2099, 0
        %v2138 = vsel %vm1389, %v2101, 0
        %v2141 = vsel %vm1389, %v2103, 0
        %v2144 = vsel %vm1389, %v2105, 0
        %v2147 = vsel %vm1389, %v2107, 0
        %v2150 = vsel %vm1389, %v2109, 0
        %v2153 = vsel %vm1389, %v2111, 0
        %v2156 = vsel %vm1389, %v2113, 0
        %v2159 = vsel %vm1389, %v2115, 0
        %v2162 = vsel %vm1389, %v2117, 0
        %v2165 = vsel %vm1389, %v2119, 0
        %v2168 = vsel %vm1389, %v2121, 0
        %2170 = vmatpush.bf16.xpose.msra.mxu0 %v2168
        %2171 = vmatpush.bf16.xpose.msra.mxu0 %v2165
        %2172 = vmatpush.bf16.xpose.msra.mxu0 %v2162
        %2173 = vmatpush.bf16.xpose.msra.mxu0 %v2159
        %2174 = vmatpush.bf16.xpose.msra.mxu0 %v2156
        %2175 = vmatpush.bf16.xpose.msra.mxu0 %v2153
        %2176 = vmatpush.bf16.xpose.msra.mxu0 %v2150
        %2177 = vmatpush.bf16.xpose.msra.mxu0 %v2147
        %2178 = vmatmul.bf16.gmra.mxu0 %v2123
        %v2179 = vpop.f32.mrf.mxu0
        %v2180 = vadd.f32 %v1309, %v2179
        %v2181 = vpop.f32.mrf.mxu0
        %v2182 = vadd.f32 %v1310, %v2181
        %2183 = vmatmul.bf16.gmra.mxu0 %v2126
        %v2184 = vpop.f32.mrf.mxu0
        %v2185 = vadd.f32 %v1311, %v2184
        %v2186 = vpop.f32.mrf.mxu0
        %v2187 = vadd.f32 %v1312, %v2186
        %2188 = vmatmul.bf16.gmra.mxu0 %v2129
        %v2189 = vpop.f32.mrf.mxu0
        %v2190 = vadd.f32 %v1313, %v2189
        %v2191 = vpop.f32.mrf.mxu0
        %v2192 = vadd.f32 %v1314, %v2191
        %2193 = vmatmul.bf16.gmra.mxu0 %v2132
        %v2194 = vpop.f32.mrf.mxu0
        %v2195 = vadd.f32 %v1315, %v2194
        %v2196 = vpop.f32.mrf.mxu0
        %v2197 = vadd.f32 %v1316, %v2196
        %2198 = vmatmul.bf16.gmra.mxu0 %v2135
        %v2199 = vpop.f32.mrf.mxu0
        %v2200 = vadd.f32 %v1317, %v2199
        %v2201 = vpop.f32.mrf.mxu0
        %v2202 = vadd.f32 %v1318, %v2201
        %2203 = vmatmul.bf16.gmra.mxu0 %v2138
        %v2204 = vpop.f32.mrf.mxu0
        %v2205 = vadd.f32 %v1319, %v2204
        %v2206 = vpop.f32.mrf.mxu0
        %v2207 = vadd.f32 %v1320, %v2206
        %2208 = vmatmul.bf16.gmra.mxu0 %v2141
        %v2209 = vpop.f32.mrf.mxu0
        %v2210 = vadd.f32 %v1321, %v2209
        %v2211 = vpop.f32.mrf.mxu0
        %v2212 = vadd.f32 %v1322, %v2211
        %2213 = vmatmul.bf16.gmra.mxu0 %v2144
        %v2214 = vpop.f32.mrf.mxu0
        %v2215 = vadd.f32 %v1323, %v2214
        %v2216 = vpop.f32.mrf.mxu0
        %v2217 = vadd.f32 %v1324, %v2216
        %2218 = vdwg.mxu0
        %2219 = vmax.xlane.f32.xlu0 %v2180
        %v2220 = vpop.xlane.xlu0 %2219
        %2221 = vmax.xlane.f32.xlu0 %v2182
        %v2222 = vpop.xlane.xlu0 %2221
        %2223 = vmax.xlane.f32.xlu0 %v2185
        %v2224 = vpop.xlane.xlu0 %2223
        %2225 = vmax.xlane.f32.xlu0 %v2187
        %v2226 = vpop.xlane.xlu0 %2225
        %2227 = vmax.xlane.f32.xlu0 %v2190
        %v2228 = vpop.xlane.xlu0 %2227
        %2229 = vmax.xlane.f32.xlu0 %v2192
        %v2230 = vpop.xlane.xlu0 %2229
        %2231 = vmax.xlane.f32.xlu0 %v2195
        %v2232 = vpop.xlane.xlu0 %2231
        %2233 = vmax.xlane.f32.xlu0 %v2197
        %v2234 = vpop.xlane.xlu0 %2233
        %2235 = vmax.xlane.f32.xlu0 %v2200
        %v2236 = vpop.xlane.xlu0 %2235
        %2237 = vmax.xlane.f32.xlu0 %v2202
        %v2238 = vpop.xlane.xlu0 %2237
        %2239 = vmax.xlane.f32.xlu0 %v2205
        %v2240 = vpop.xlane.xlu0 %2239
        %2241 = vmax.xlane.f32.xlu0 %v2207
        %v2242 = vpop.xlane.xlu0 %2241
        %2243 = vmax.xlane.f32.xlu0 %v2210
        %v2244 = vpop.xlane.xlu0 %2243
        %2245 = vmax.xlane.f32.xlu0 %v2212
        %v2246 = vpop.xlane.xlu0 %2245
        %2247 = vmax.xlane.f32.xlu0 %v2215
        %v2248 = vpop.xlane.xlu0 %2247
        %2249 = vmax.xlane.f32.xlu0 %v2217
        %v2250 = vpop.xlane.xlu0 %2249
        %v2251 = vsub.f32 %v2180, %v2220
        %v2252 = vsub.f32 %v2182, %v2222
        %v2253 = vsub.f32 %v2185, %v2224
        %v2254 = vsub.f32 %v2187, %v2226
        %v2255 = vsub.f32 %v2190, %v2228
        %v2256 = vsub.f32 %v2192, %v2230
        %v2257 = vsub.f32 %v2195, %v2232
        %v2258 = vsub.f32 %v2197, %v2234
        %v2259 = vsub.f32 %v2200, %v2236
        %v2260 = vsub.f32 %v2202, %v2238
        %v2261 = vsub.f32 %v2205, %v2240
        %v2262 = vsub.f32 %v2207, %v2242
        %v2263 = vsub.f32 %v2210, %v2244
        %v2264 = vsub.f32 %v2212, %v2246
        %v2265 = vsub.f32 %v2215, %v2248
        %v2266 = vsub.f32 %v2217, %v2250
        %v2267 = vmul.f32 %v2251, 1.442695
        %v2268 = vpow.pop %v2267
        %v2269 = vmul.f32 %v2252, 1.442695
        %v2270 = vpow.pop %v2269
        %v2271 = vmul.f32 %v2253, 1.442695
        %v2272 = vpow.pop %v2271
        %v2273 = vmul.f32 %v2254, 1.442695
        %v2274 = vpow.pop %v2273
        %v2275 = vmul.f32 %v2255, 1.442695
        %v2276 = vpow.pop %v2275
        %v2277 = vmul.f32 %v2256, 1.442695
        %v2278 = vpow.pop %v2277
        %v2279 = vmul.f32 %v2257, 1.442695
        %v2280 = vpow.pop %v2279
        %v2281 = vmul.f32 %v2258, 1.442695
        %v2282 = vpow.pop %v2281
        %v2283 = vmul.f32 %v2259, 1.442695
        %v2284 = vpow.pop %v2283
        %v2285 = vmul.f32 %v2260, 1.442695
        %v2286 = vpow.pop %v2285
        %v2287 = vmul.f32 %v2261, 1.442695
        %v2288 = vpow.pop %v2287
        %v2289 = vmul.f32 %v2262, 1.442695
        %v2290 = vpow.pop %v2289
        %v2291 = vmul.f32 %v2263, 1.442695
        %v2292 = vpow.pop %v2291
        %v2293 = vmul.f32 %v2264, 1.442695
        %v2294 = vpow.pop %v2293
        %v2295 = vmul.f32 %v2265, 1.442695
        %v2296 = vpow.pop %v2295
        %v2297 = vmul.f32 %v2266, 1.442695
        %v2298 = vpow.pop %v2297
        %2299 = vadd.xlane.f32.xlu0 %v2268
        %v2300 = vpop.xlane.xlu0 %2299
        %2301 = vadd.xlane.f32.xlu0 %v2270
        %v2302 = vpop.xlane.xlu0 %2301
        %2303 = vadd.xlane.f32.xlu0 %v2272
        %v2304 = vpop.xlane.xlu0 %2303
        %2305 = vadd.xlane.f32.xlu0 %v2274
        %v2306 = vpop.xlane.xlu0 %2305
        %2307 = vadd.xlane.f32.xlu0 %v2276
        %v2308 = vpop.xlane.xlu0 %2307
        %2309 = vadd.xlane.f32.xlu0 %v2278
        %v2310 = vpop.xlane.xlu0 %2309
        %2311 = vadd.xlane.f32.xlu0 %v2280
        %v2312 = vpop.xlane.xlu0 %2311
        %2313 = vadd.xlane.f32.xlu0 %v2282
        %v2314 = vpop.xlane.xlu0 %2313
        %2315 = vadd.xlane.f32.xlu0 %v2284
        %v2316 = vpop.xlane.xlu0 %2315
        %2317 = vadd.xlane.f32.xlu0 %v2286
        %v2318 = vpop.xlane.xlu0 %2317
        %2319 = vadd.xlane.f32.xlu0 %v2288
        %v2320 = vpop.xlane.xlu0 %2319
        %2321 = vadd.xlane.f32.xlu0 %v2290
        %v2322 = vpop.xlane.xlu0 %2321
        %2323 = vadd.xlane.f32.xlu0 %v2292
        %v2324 = vpop.xlane.xlu0 %2323
        %2325 = vadd.xlane.f32.xlu0 %v2294
        %v2326 = vpop.xlane.xlu0 %2325
        %2327 = vadd.xlane.f32.xlu0 %v2296
        %v2328 = vpop.xlane.xlu0 %2327
        %2329 = vadd.xlane.f32.xlu0 %v2298
        %v2330 = vpop.xlane.xlu0 %2329
        %v2331 = vrcp.pop %v2300
        %v2332 = vrcp.pop %v2302
        %v2333 = vrcp.pop %v2304
        %v2334 = vrcp.pop %v2306
        %v2335 = vrcp.pop %v2308
        %v2336 = vrcp.pop %v2310
        %v2337 = vrcp.pop %v2312
        %v2338 = vrcp.pop %v2314
        %v2339 = vrcp.pop %v2316
        %v2340 = vrcp.pop %v2318
        %v2341 = vrcp.pop %v2320
        %v2342 = vrcp.pop %v2322
        %v2343 = vrcp.pop %v2324
        %v2344 = vrcp.pop %v2326
        %v2345 = vrcp.pop %v2328
        %v2346 = vrcp.pop %v2330
        %v2347 = vmul.f32 %v2268, %v2331
        %v2348 = vmul.f32 %v2270, %v2332
        %v2349 = vmul.f32 %v2272, %v2333
        %v2350 = vmul.f32 %v2274, %v2334
        %v2351 = vmul.f32 %v2276, %v2335
        %v2352 = vmul.f32 %v2278, %v2336
        %v2353 = vmul.f32 %v2280, %v2337
        %v2354 = vmul.f32 %v2282, %v2338
        %v2355 = vmul.f32 %v2284, %v2339
        %v2356 = vmul.f32 %v2286, %v2340
        %v2357 = vmul.f32 %v2288, %v2341
        %v2358 = vmul.f32 %v2290, %v2342
        %v2359 = vmul.f32 %v2292, %v2343
        %v2360 = vmul.f32 %v2294, %v2344
        %v2361 = vmul.f32 %v2296, %v2345
        %v2362 = vmul.f32 %v2298, %v2346
        %v2363 = vpack.c.bf16 %v2348, %v2347
        %v2364 = vpack.c.bf16 %v2350, %v2349
        %v2365 = vpack.c.bf16 %v2352, %v2351
        %v2366 = vpack.c.bf16 %v2354, %v2353
        %v2367 = vpack.c.bf16 %v2356, %v2355
        %v2368 = vpack.c.bf16 %v2358, %v2357
        %v2369 = vpack.c.bf16 %v2360, %v2359
        %v2370 = vpack.c.bf16 %v2362, %v2361
        %2371 = vrot.lane.b32.xlu0 %v1671, 64
        %v2372 = vpop.permute.xlu0 %2371
        %2373 = vrot.lane.b32.xlu0 %v1672, 64
        %v2374 = vpop.permute.xlu0 %2373
        %2375 = vrot.lane.b32.xlu0 %v1673, 64
        %v2376 = vpop.permute.xlu0 %2375
        %2377 = vrot.lane.b32.xlu0 %v1674, 64
        %v2378 = vpop.permute.xlu0 %2377
        %2379 = vrot.lane.b32.xlu0 %v1675, 64
        %v2380 = vpop.permute.xlu0 %2379
        %2381 = vrot.lane.b32.xlu0 %v1676, 64
        %v2382 = vpop.permute.xlu0 %2381
        %2383 = vrot.lane.b32.xlu0 %v1677, 64
        %v2384 = vpop.permute.xlu0 %2383
        %2385 = vrot.lane.b32.xlu0 %v1678, 64
        %v2386 = vpop.permute.xlu0 %2385
        %2395 = vmatpush.bf16.msra.mxu0 %v2386
        %2396 = vmatpush.bf16.msra.mxu0 %v2384
        %2397 = vmatpush.bf16.msra.mxu0 %v2382
        %2398 = vmatpush.bf16.msra.mxu0 %v2380
        %2399 = vmatpush.bf16.msra.mxu0 %v2378
        %2400 = vmatpush.bf16.msra.mxu0 %v2376
        %2401 = vmatpush.bf16.msra.mxu0 %v2374
        %2402 = vmatpush.bf16.msra.mxu0 %v2372
        %2403 = vmatmul.bf16.gmra.mxu0 %v2363
        %v2404 = vpop.f32.mrf.mxu0
        %v2405 = vadd.f32 0.0, %v2404
        %v2406 = vpop.f32.mrf.mxu0
        %v2407 = vadd.f32 0.0, %v2406
        %2408 = vmatmul.bf16.gmra.mxu0 %v2364
        %v2409 = vpop.f32.mrf.mxu0
        %v2410 = vadd.f32 0.0, %v2409
        %v2411 = vpop.f32.mrf.mxu0
        %v2412 = vadd.f32 0.0, %v2411
        %2413 = vmatmul.bf16.gmra.mxu0 %v2365
        %v2414 = vpop.f32.mrf.mxu0
        %v2415 = vadd.f32 0.0, %v2414
        %v2416 = vpop.f32.mrf.mxu0
        %v2417 = vadd.f32 0.0, %v2416
        %2418 = vmatmul.bf16.gmra.mxu0 %v2366
        %v2419 = vpop.f32.mrf.mxu0
        %v2420 = vadd.f32 0.0, %v2419
        %v2421 = vpop.f32.mrf.mxu0
        %v2422 = vadd.f32 0.0, %v2421
        %2423 = vmatmul.bf16.gmra.mxu0 %v2367
        %v2424 = vpop.f32.mrf.mxu0
        %v2425 = vadd.f32 0.0, %v2424
        %v2426 = vpop.f32.mrf.mxu0
        %v2427 = vadd.f32 0.0, %v2426
        %2428 = vmatmul.bf16.gmra.mxu0 %v2368
        %v2429 = vpop.f32.mrf.mxu0
        %v2430 = vadd.f32 0.0, %v2429
        %v2431 = vpop.f32.mrf.mxu0
        %v2432 = vadd.f32 0.0, %v2431
        %2433 = vmatmul.bf16.gmra.mxu0 %v2369
        %v2434 = vpop.f32.mrf.mxu0
        %v2435 = vadd.f32 0.0, %v2434
        %v2436 = vpop.f32.mrf.mxu0
        %v2437 = vadd.f32 0.0, %v2436
        %2438 = vmatmul.bf16.gmra.mxu0 %v2370
        %v2439 = vpop.f32.mrf.mxu0
        %v2440 = vadd.f32 0.0, %v2439
        %v2441 = vpop.f32.mrf.mxu0
        %v2442 = vadd.f32 0.0, %v2441
        %2443 = vdwg.mxu0
        %2444 = vrot.lane.b32.xlu0 %v1357, 32
        %v2445 = vpop.permute.xlu0 %2444
        %2446 = vrot.lane.b32.xlu0 %v1358, 32
        %v2447 = vpop.permute.xlu0 %2446
        %2448 = vrot.lane.b32.xlu0 %v1359, 32
        %v2449 = vpop.permute.xlu0 %2448
        %2450 = vrot.lane.b32.xlu0 %v1360, 32
        %v2451 = vpop.permute.xlu0 %2450
        %2452 = vrot.lane.b32.xlu0 %v1361, 32
        %v2453 = vpop.permute.xlu0 %2452
        %2454 = vrot.lane.b32.xlu0 %v1362, 32
        %v2455 = vpop.permute.xlu0 %2454
        %2456 = vrot.lane.b32.xlu0 %v1363, 32
        %v2457 = vpop.permute.xlu0 %2456
        %2458 = vrot.lane.b32.xlu0 %v1364, 32
        %v2459 = vpop.permute.xlu0 %2458
        %2460 = vrot.lane.b32.xlu0 %v1381, 32
        %v2461 = vpop.permute.xlu0 %2460
        %2462 = vrot.lane.b32.xlu0 %v1382, 32
        %v2463 = vpop.permute.xlu0 %2462
        %2464 = vrot.lane.b32.xlu0 %v1383, 32
        %v2465 = vpop.permute.xlu0 %2464
        %2466 = vrot.lane.b32.xlu0 %v1384, 32
        %v2467 = vpop.permute.xlu0 %2466
        %2468 = vrot.lane.b32.xlu0 %v1385, 32
        %v2469 = vpop.permute.xlu0 %2468
        %2470 = vrot.lane.b32.xlu0 %v1386, 32
        %v2471 = vpop.permute.xlu0 %2470
        %2472 = vrot.lane.b32.xlu0 %v1387, 32
        %v2473 = vpop.permute.xlu0 %2472
        %2474 = vrot.lane.b32.xlu0 %v1388, 32
        %v2475 = vpop.permute.xlu0 %2474
        %v2477 = vsel %vm1389, %v2445, 0
        %v2480 = vsel %vm1389, %v2447, 0
        %v2483 = vsel %vm1389, %v2449, 0
        %v2486 = vsel %vm1389, %v2451, 0
        %v2489 = vsel %vm1389, %v2453, 0
        %v2492 = vsel %vm1389, %v2455, 0
        %v2495 = vsel %vm1389, %v2457, 0
        %v2498 = vsel %vm1389, %v2459, 0
        %v2501 = vsel %vm1389, %v2461, 0
        %v2504 = vsel %vm1389, %v2463, 0
        %v2507 = vsel %vm1389, %v2465, 0
        %v2510 = vsel %vm1389, %v2467, 0
        %v2513 = vsel %vm1389, %v2469, 0
        %v2516 = vsel %vm1389, %v2471, 0
        %v2519 = vsel %vm1389, %v2473, 0
        %v2522 = vsel %vm1389, %v2475, 0
        %2524 = vmatpush.bf16.xpose.msra.mxu0 %v2522
        %2525 = vmatpush.bf16.xpose.msra.mxu0 %v2519
        %2526 = vmatpush.bf16.xpose.msra.mxu0 %v2516
        %2527 = vmatpush.bf16.xpose.msra.mxu0 %v2513
        %2528 = vmatpush.bf16.xpose.msra.mxu0 %v2510
        %2529 = vmatpush.bf16.xpose.msra.mxu0 %v2507
        %2530 = vmatpush.bf16.xpose.msra.mxu0 %v2504
        %2531 = vmatpush.bf16.xpose.msra.mxu0 %v2501
        %2532 = vmatmul.bf16.gmra.mxu0 %v2477
        %v2533 = vpop.f32.mrf.mxu0
        %v2534 = vadd.f32 %v1309, %v2533
        %v2535 = vpop.f32.mrf.mxu0
        %v2536 = vadd.f32 %v1310, %v2535
        %2537 = vmatmul.bf16.gmra.mxu0 %v2480
        %v2538 = vpop.f32.mrf.mxu0
        %v2539 = vadd.f32 %v1311, %v2538
        %v2540 = vpop.f32.mrf.mxu0
        %v2541 = vadd.f32 %v1312, %v2540
        %2542 = vmatmul.bf16.gmra.mxu0 %v2483
        %v2543 = vpop.f32.mrf.mxu0
        %v2544 = vadd.f32 %v1313, %v2543
        %v2545 = vpop.f32.mrf.mxu0
        %v2546 = vadd.f32 %v1314, %v2545
        %2547 = vmatmul.bf16.gmra.mxu0 %v2486
        %v2548 = vpop.f32.mrf.mxu0
        %v2549 = vadd.f32 %v1315, %v2548
        %v2550 = vpop.f32.mrf.mxu0
        %v2551 = vadd.f32 %v1316, %v2550
        %2552 = vmatmul.bf16.gmra.mxu0 %v2489
        %v2553 = vpop.f32.mrf.mxu0
        %v2554 = vadd.f32 %v1317, %v2553
        %v2555 = vpop.f32.mrf.mxu0
        %v2556 = vadd.f32 %v1318, %v2555
        %2557 = vmatmul.bf16.gmra.mxu0 %v2492
        %v2558 = vpop.f32.mrf.mxu0
        %v2559 = vadd.f32 %v1319, %v2558
        %v2560 = vpop.f32.mrf.mxu0
        %v2561 = vadd.f32 %v1320, %v2560
        %2562 = vmatmul.bf16.gmra.mxu0 %v2495
        %v2563 = vpop.f32.mrf.mxu0
        %v2564 = vadd.f32 %v1321, %v2563
        %v2565 = vpop.f32.mrf.mxu0
        %v2566 = vadd.f32 %v1322, %v2565
        %2567 = vmatmul.bf16.gmra.mxu0 %v2498
        %v2568 = vpop.f32.mrf.mxu0
        %v2569 = vadd.f32 %v1323, %v2568
        %v2570 = vpop.f32.mrf.mxu0
        %v2571 = vadd.f32 %v1324, %v2570
        %2572 = vdwg.mxu0
        %2573 = vmax.xlane.f32.xlu0 %v2534
        %v2574 = vpop.xlane.xlu0 %2573
        %2575 = vmax.xlane.f32.xlu0 %v2536
        %v2576 = vpop.xlane.xlu0 %2575
        %2577 = vmax.xlane.f32.xlu0 %v2539
        %v2578 = vpop.xlane.xlu0 %2577
        %2579 = vmax.xlane.f32.xlu0 %v2541
        %v2580 = vpop.xlane.xlu0 %2579
        %2581 = vmax.xlane.f32.xlu0 %v2544
        %v2582 = vpop.xlane.xlu0 %2581
        %2583 = vmax.xlane.f32.xlu0 %v2546
        %v2584 = vpop.xlane.xlu0 %2583
        %2585 = vmax.xlane.f32.xlu0 %v2549
        %v2586 = vpop.xlane.xlu0 %2585
        %2587 = vmax.xlane.f32.xlu0 %v2551
        %v2588 = vpop.xlane.xlu0 %2587
        %2589 = vmax.xlane.f32.xlu0 %v2554
        %v2590 = vpop.xlane.xlu0 %2589
        %2591 = vmax.xlane.f32.xlu0 %v2556
        %v2592 = vpop.xlane.xlu0 %2591
        %2593 = vmax.xlane.f32.xlu0 %v2559
        %v2594 = vpop.xlane.xlu0 %2593
        %2595 = vmax.xlane.f32.xlu0 %v2561
        %v2596 = vpop.xlane.xlu0 %2595
        %2597 = vmax.xlane.f32.xlu0 %v2564
        %v2598 = vpop.xlane.xlu0 %2597
        %2599 = vmax.xlane.f32.xlu0 %v2566
        %v2600 = vpop.xlane.xlu0 %2599
        %2601 = vmax.xlane.f32.xlu0 %v2569
        %v2602 = vpop.xlane.xlu0 %2601
        %2603 = vmax.xlane.f32.xlu0 %v2571
        %v2604 = vpop.xlane.xlu0 %2603
        %v2605 = vsub.f32 %v2534, %v2574
        %v2606 = vsub.f32 %v2536, %v2576
        %v2607 = vsub.f32 %v2539, %v2578
        %v2608 = vsub.f32 %v2541, %v2580
        %v2609 = vsub.f32 %v2544, %v2582
        %v2610 = vsub.f32 %v2546, %v2584
        %v2611 = vsub.f32 %v2549, %v2586
        %v2612 = vsub.f32 %v2551, %v2588
        %v2613 = vsub.f32 %v2554, %v2590
        %v2614 = vsub.f32 %v2556, %v2592
        %v2615 = vsub.f32 %v2559, %v2594
        %v2616 = vsub.f32 %v2561, %v2596
        %v2617 = vsub.f32 %v2564, %v2598
        %v2618 = vsub.f32 %v2566, %v2600
        %v2619 = vsub.f32 %v2569, %v2602
        %v2620 = vsub.f32 %v2571, %v2604
        %v2621 = vmul.f32 %v2605, 1.442695
        %v2622 = vpow.pop %v2621
        %v2623 = vmul.f32 %v2606, 1.442695
        %v2624 = vpow.pop %v2623
        %v2625 = vmul.f32 %v2607, 1.442695
        %v2626 = vpow.pop %v2625
        %v2627 = vmul.f32 %v2608, 1.442695
        %v2628 = vpow.pop %v2627
        %v2629 = vmul.f32 %v2609, 1.442695
        %v2630 = vpow.pop %v2629
        %v2631 = vmul.f32 %v2610, 1.442695
        %v2632 = vpow.pop %v2631
        %v2633 = vmul.f32 %v2611, 1.442695
        %v2634 = vpow.pop %v2633
        %v2635 = vmul.f32 %v2612, 1.442695
        %v2636 = vpow.pop %v2635
        %v2637 = vmul.f32 %v2613, 1.442695
        %v2638 = vpow.pop %v2637
        %v2639 = vmul.f32 %v2614, 1.442695
        %v2640 = vpow.pop %v2639
        %v2641 = vmul.f32 %v2615, 1.442695
        %v2642 = vpow.pop %v2641
        %v2643 = vmul.f32 %v2616, 1.442695
        %v2644 = vpow.pop %v2643
        %v2645 = vmul.f32 %v2617, 1.442695
        %v2646 = vpow.pop %v2645
        %v2647 = vmul.f32 %v2618, 1.442695
        %v2648 = vpow.pop %v2647
        %v2649 = vmul.f32 %v2619, 1.442695
        %v2650 = vpow.pop %v2649
        %v2651 = vmul.f32 %v2620, 1.442695
        %v2652 = vpow.pop %v2651
        %2653 = vadd.xlane.f32.xlu0 %v2622
        %v2654 = vpop.xlane.xlu0 %2653
        %2655 = vadd.xlane.f32.xlu0 %v2624
        %v2656 = vpop.xlane.xlu0 %2655
        %2657 = vadd.xlane.f32.xlu0 %v2626
        %v2658 = vpop.xlane.xlu0 %2657
        %2659 = vadd.xlane.f32.xlu0 %v2628
        %v2660 = vpop.xlane.xlu0 %2659
        %2661 = vadd.xlane.f32.xlu0 %v2630
        %v2662 = vpop.xlane.xlu0 %2661
        %2663 = vadd.xlane.f32.xlu0 %v2632
        %v2664 = vpop.xlane.xlu0 %2663
        %2665 = vadd.xlane.f32.xlu0 %v2634
        %v2666 = vpop.xlane.xlu0 %2665
        %2667 = vadd.xlane.f32.xlu0 %v2636
        %v2668 = vpop.xlane.xlu0 %2667
        %2669 = vadd.xlane.f32.xlu0 %v2638
        %v2670 = vpop.xlane.xlu0 %2669
        %2671 = vadd.xlane.f32.xlu0 %v2640
        %v2672 = vpop.xlane.xlu0 %2671
        %2673 = vadd.xlane.f32.xlu0 %v2642
        %v2674 = vpop.xlane.xlu0 %2673
        %2675 = vadd.xlane.f32.xlu0 %v2644
        %v2676 = vpop.xlane.xlu0 %2675
        %2677 = vadd.xlane.f32.xlu0 %v2646
        %v2678 = vpop.xlane.xlu0 %2677
        %2679 = vadd.xlane.f32.xlu0 %v2648
        %v2680 = vpop.xlane.xlu0 %2679
        %2681 = vadd.xlane.f32.xlu0 %v2650
        %v2682 = vpop.xlane.xlu0 %2681
        %2683 = vadd.xlane.f32.xlu0 %v2652
        %v2684 = vpop.xlane.xlu0 %2683
        %v2685 = vrcp.pop %v2654
        %v2686 = vrcp.pop %v2656
        %v2687 = vrcp.pop %v2658
        %v2688 = vrcp.pop %v2660
        %v2689 = vrcp.pop %v2662
        %v2690 = vrcp.pop %v2664
        %v2691 = vrcp.pop %v2666
        %v2692 = vrcp.pop %v2668
        %v2693 = vrcp.pop %v2670
        %v2694 = vrcp.pop %v2672
        %v2695 = vrcp.pop %v2674
        %v2696 = vrcp.pop %v2676
        %v2697 = vrcp.pop %v2678
        %v2698 = vrcp.pop %v2680
        %v2699 = vrcp.pop %v2682
        %v2700 = vrcp.pop %v2684
        %v2701 = vmul.f32 %v2622, %v2685
        %v2702 = vmul.f32 %v2624, %v2686
        %v2703 = vmul.f32 %v2626, %v2687
        %v2704 = vmul.f32 %v2628, %v2688
        %v2705 = vmul.f32 %v2630, %v2689
        %v2706 = vmul.f32 %v2632, %v2690
        %v2707 = vmul.f32 %v2634, %v2691
        %v2708 = vmul.f32 %v2636, %v2692
        %v2709 = vmul.f32 %v2638, %v2693
        %v2710 = vmul.f32 %v2640, %v2694
        %v2711 = vmul.f32 %v2642, %v2695
        %v2712 = vmul.f32 %v2644, %v2696
        %v2713 = vmul.f32 %v2646, %v2697
        %v2714 = vmul.f32 %v2648, %v2698
        %v2715 = vmul.f32 %v2650, %v2699
        %v2716 = vmul.f32 %v2652, %v2700
        %v2717 = vpack.c.bf16 %v2702, %v2701
        %v2718 = vpack.c.bf16 %v2704, %v2703
        %v2719 = vpack.c.bf16 %v2706, %v2705
        %v2720 = vpack.c.bf16 %v2708, %v2707
        %v2721 = vpack.c.bf16 %v2710, %v2709
        %v2722 = vpack.c.bf16 %v2712, %v2711
        %v2723 = vpack.c.bf16 %v2714, %v2713
        %v2724 = vpack.c.bf16 %v2716, %v2715
        %2725 = vrot.lane.b32.xlu0 %v1671, 32
        %v2726 = vpop.permute.xlu0 %2725
        %2727 = vrot.lane.b32.xlu0 %v1672, 32
        %v2728 = vpop.permute.xlu0 %2727
        %2729 = vrot.lane.b32.xlu0 %v1673, 32
        %v2730 = vpop.permute.xlu0 %2729
        %2731 = vrot.lane.b32.xlu0 %v1674, 32
        %v2732 = vpop.permute.xlu0 %2731
        %2733 = vrot.lane.b32.xlu0 %v1675, 32
        %v2734 = vpop.permute.xlu0 %2733
        %2735 = vrot.lane.b32.xlu0 %v1676, 32
        %v2736 = vpop.permute.xlu0 %2735
        %2737 = vrot.lane.b32.xlu0 %v1677, 32
        %v2738 = vpop.permute.xlu0 %2737
        %2739 = vrot.lane.b32.xlu0 %v1678, 32
        %v2740 = vpop.permute.xlu0 %2739
        %2749 = vmatpush.bf16.msra.mxu0 %v2740
        %2750 = vmatpush.bf16.msra.mxu0 %v2738
        %2751 = vmatpush.bf16.msra.mxu0 %v2736
        %2752 = vmatpush.bf16.msra.mxu0 %v2734
        %2753 = vmatpush.bf16.msra.mxu0 %v2732
        %2754 = vmatpush.bf16.msra.mxu0 %v2730
        %2755 = vmatpush.bf16.msra.mxu0 %v2728
        %2756 = vmatpush.bf16.msra.mxu0 %v2726
        %2757 = vmatmul.bf16.gmra.mxu0 %v2717
        %v2758 = vpop.f32.mrf.mxu0
        %v2759 = vadd.f32 0.0, %v2758
        %v2760 = vpop.f32.mrf.mxu0
        %v2761 = vadd.f32 0.0, %v2760
        %2762 = vmatmul.bf16.gmra.mxu0 %v2718
        %v2763 = vpop.f32.mrf.mxu0
        %v2764 = vadd.f32 0.0, %v2763
        %v2765 = vpop.f32.mrf.mxu0
        %v2766 = vadd.f32 0.0, %v2765
        %2767 = vmatmul.bf16.gmra.mxu0 %v2719
        %v2768 = vpop.f32.mrf.mxu0
        %v2769 = vadd.f32 0.0, %v2768
        %v2770 = vpop.f32.mrf.mxu0
        %v2771 = vadd.f32 0.0, %v2770
        %2772 = vmatmul.bf16.gmra.mxu0 %v2720
        %v2773 = vpop.f32.mrf.mxu0
        %v2774 = vadd.f32 0.0, %v2773
        %v2775 = vpop.f32.mrf.mxu0
        %v2776 = vadd.f32 0.0, %v2775
        %2777 = vmatmul.bf16.gmra.mxu0 %v2721
        %v2778 = vpop.f32.mrf.mxu0
        %v2779 = vadd.f32 0.0, %v2778
        %v2780 = vpop.f32.mrf.mxu0
        %v2781 = vadd.f32 0.0, %v2780
        %2782 = vmatmul.bf16.gmra.mxu0 %v2722
        %v2783 = vpop.f32.mrf.mxu0
        %v2784 = vadd.f32 0.0, %v2783
        %v2785 = vpop.f32.mrf.mxu0
        %v2786 = vadd.f32 0.0, %v2785
        %2787 = vmatmul.bf16.gmra.mxu0 %v2723
        %v2788 = vpop.f32.mrf.mxu0
        %v2789 = vadd.f32 0.0, %v2788
        %v2790 = vpop.f32.mrf.mxu0
        %v2791 = vadd.f32 0.0, %v2790
        %2792 = vmatmul.bf16.gmra.mxu0 %v2724
        %v2793 = vpop.f32.mrf.mxu0
        %v2794 = vadd.f32 0.0, %v2793
        %v2795 = vpop.f32.mrf.mxu0
        %v2796 = vadd.f32 0.0, %v2795
        %2797 = vdwg.mxu0
        %2814 = vrot.lane.b32.xlu0 %v2051, 32
        %v2815 = vpop.permute.xlu0 %2814
        %2816 = vrot.lane.b32.xlu0 %v2053, 32
        %v2817 = vpop.permute.xlu0 %2816
        %2818 = vrot.lane.b32.xlu0 %v2056, 32
        %v2819 = vpop.permute.xlu0 %2818
        %2820 = vrot.lane.b32.xlu0 %v2058, 32
        %v2821 = vpop.permute.xlu0 %2820
        %2822 = vrot.lane.b32.xlu0 %v2061, 32
        %v2823 = vpop.permute.xlu0 %2822
        %2824 = vrot.lane.b32.xlu0 %v2063, 32
        %v2825 = vpop.permute.xlu0 %2824
        %2826 = vrot.lane.b32.xlu0 %v2066, 32
        %v2827 = vpop.permute.xlu0 %2826
        %2828 = vrot.lane.b32.xlu0 %v2068, 32
        %v2829 = vpop.permute.xlu0 %2828
        %2830 = vrot.lane.b32.xlu0 %v2071, 32
        %v2831 = vpop.permute.xlu0 %2830
        %2832 = vrot.lane.b32.xlu0 %v2073, 32
        %v2833 = vpop.permute.xlu0 %2832
        %2834 = vrot.lane.b32.xlu0 %v2076, 32
        %v2835 = vpop.permute.xlu0 %2834
        %2836 = vrot.lane.b32.xlu0 %v2078, 32
        %v2837 = vpop.permute.xlu0 %2836
        %2838 = vrot.lane.b32.xlu0 %v2081, 32
        %v2839 = vpop.permute.xlu0 %2838
        %2840 = vrot.lane.b32.xlu0 %v2083, 32
        %v2841 = vpop.permute.xlu0 %2840
        %2842 = vrot.lane.b32.xlu0 %v2086, 32
        %v2843 = vpop.permute.xlu0 %2842
        %2844 = vrot.lane.b32.xlu0 %v2088, 32
        %v2845 = vpop.permute.xlu0 %2844
        %2878 = vrot.lane.b32.xlu0 %v2405, 64
        %v2879 = vpop.permute.xlu0 %2878
        %2880 = vrot.lane.b32.xlu0 %v2407, 64
        %v2881 = vpop.permute.xlu0 %2880
        %2882 = vrot.lane.b32.xlu0 %v2410, 64
        %v2883 = vpop.permute.xlu0 %2882
        %2884 = vrot.lane.b32.xlu0 %v2412, 64
        %v2885 = vpop.permute.xlu0 %2884
        %2886 = vrot.lane.b32.xlu0 %v2415, 64
        %v2887 = vpop.permute.xlu0 %2886
        %2888 = vrot.lane.b32.xlu0 %v2417, 64
        %v2889 = vpop.permute.xlu0 %2888
        %2890 = vrot.lane.b32.xlu0 %v2420, 64
        %v2891 = vpop.permute.xlu0 %2890
        %2892 = vrot.lane.b32.xlu0 %v2422, 64
        %v2893 = vpop.permute.xlu0 %2892
        %2894 = vrot.lane.b32.xlu0 %v2425, 64
        %v2895 = vpop.permute.xlu0 %2894
        %2896 = vrot.lane.b32.xlu0 %v2427, 64
        %v2897 = vpop.permute.xlu0 %2896
        %2898 = vrot.lane.b32.xlu0 %v2430, 64
        %v2899 = vpop.permute.xlu0 %2898
        %2900 = vrot.lane.b32.xlu0 %v2432, 64
        %v2901 = vpop.permute.xlu0 %2900
        %2902 = vrot.lane.b32.xlu0 %v2435, 64
        %v2903 = vpop.permute.xlu0 %2902
        %2904 = vrot.lane.b32.xlu0 %v2437, 64
        %v2905 = vpop.permute.xlu0 %2904
        %2906 = vrot.lane.b32.xlu0 %v2440, 64
        %v2907 = vpop.permute.xlu0 %2906
        %2908 = vrot.lane.b32.xlu0 %v2442, 64
        %v2909 = vpop.permute.xlu0 %2908
        %2942 = vrot.lane.b32.xlu0 %v2759, 96
        %v2943 = vpop.permute.xlu0 %2942
        %2944 = vrot.lane.b32.xlu0 %v2761, 96
        %v2945 = vpop.permute.xlu0 %2944
        %2946 = vrot.lane.b32.xlu0 %v2764, 96
        %v2947 = vpop.permute.xlu0 %2946
        %2948 = vrot.lane.b32.xlu0 %v2766, 96
        %v2949 = vpop.permute.xlu0 %2948
        %2950 = vrot.lane.b32.xlu0 %v2769, 96
        %v2951 = vpop.permute.xlu0 %2950
        %2952 = vrot.lane.b32.xlu0 %v2771, 96
        %v2953 = vpop.permute.xlu0 %2952
        %2954 = vrot.lane.b32.xlu0 %v2774, 96
        %v2955 = vpop.permute.xlu0 %2954
        %2956 = vrot.lane.b32.xlu0 %v2776, 96
        %v2957 = vpop.permute.xlu0 %2956
        %2958 = vrot.lane.b32.xlu0 %v2779, 96
        %v2959 = vpop.permute.xlu0 %2958
        %2960 = vrot.lane.b32.xlu0 %v2781, 96
        %v2961 = vpop.permute.xlu0 %2960
        %2962 = vrot.lane.b32.xlu0 %v2784, 96
        %v2963 = vpop.permute.xlu0 %2962
        %2964 = vrot.lane.b32.xlu0 %v2786, 96
        %v2965 = vpop.permute.xlu0 %2964
        %2966 = vrot.lane.b32.xlu0 %v2789, 96
        %v2967 = vpop.permute.xlu0 %2966
        %2968 = vrot.lane.b32.xlu0 %v2791, 96
        %v2969 = vpop.permute.xlu0 %2968
        %2970 = vrot.lane.b32.xlu0 %v2794, 96
        %v2971 = vpop.permute.xlu0 %2970
        %2972 = vrot.lane.b32.xlu0 %v2796, 96
        %v2973 = vpop.permute.xlu0 %2972
        %v2990 = vsel %vm1389, %v1697, %v2815
        %v2991 = vsel %vm1389, %v1699, %v2817
        %v2992 = vsel %vm1389, %v1702, %v2819
        %v2993 = vsel %vm1389, %v1704, %v2821
        %v2994 = vsel %vm1389, %v1707, %v2823
        %v2995 = vsel %vm1389, %v1709, %v2825
        %v2996 = vsel %vm1389, %v1712, %v2827
        %v2997 = vsel %vm1389, %v1714, %v2829
        %v2998 = vsel %vm1389, %v1717, %v2831
        %v2999 = vsel %vm1389, %v1719, %v2833
        %v3000 = vsel %vm1389, %v1722, %v2835
        %v3001 = vsel %vm1389, %v1724, %v2837
        %v3002 = vsel %vm1389, %v1727, %v2839
        %v3003 = vsel %vm1389, %v1729, %v2841
        %v3004 = vsel %vm1389, %v1732, %v2843
        %v3005 = vsel %vm1389, %v1734, %v2845
        %vm3006 = vcmask 523264
        %v3007 = vsel %vm3006, %v2990, %v2879
        %v3008 = vsel %vm3006, %v2991, %v2881
        %v3009 = vsel %vm3006, %v2992, %v2883
        %v3010 = vsel %vm3006, %v2993, %v2885
        %v3011 = vsel %vm3006, %v2994, %v2887
        %v3012 = vsel %vm3006, %v2995, %v2889
        %v3013 = vsel %vm3006, %v2996, %v2891
        %v3014 = vsel %vm3006, %v2997, %v2893
        %v3015 = vsel %vm3006, %v2998, %v2895
        %v3016 = vsel %vm3006, %v2999, %v2897
        %v3017 = vsel %vm3006, %v3000, %v2899
        %v3018 = vsel %vm3006, %v3001, %v2901
        %v3019 = vsel %vm3006, %v3002, %v2903
        %v3020 = vsel %vm3006, %v3003, %v2905
        %v3021 = vsel %vm3006, %v3004, %v2907
        %v3022 = vsel %vm3006, %v3005, %v2909
        %vm3023 = vcmask 785408
        %v3024 = vsel %vm3023, %v3007, %v2943
        %v3025 = vsel %vm3023, %v3008, %v2945
        %v3026 = vsel %vm3023, %v3009, %v2947
        %v3027 = vsel %vm3023, %v3010, %v2949
        %v3028 = vsel %vm3023, %v3011, %v2951
        %v3029 = vsel %vm3023, %v3012, %v2953
        %v3030 = vsel %vm3023, %v3013, %v2955
        %v3031 = vsel %vm3023, %v3014, %v2957
        %v3032 = vsel %vm3023, %v3015, %v2959
        %v3033 = vsel %vm3023, %v3016, %v2961
        %v3034 = vsel %vm3023, %v3017, %v2963
        %v3035 = vsel %vm3023, %v3018, %v2965
        %v3036 = vsel %vm3023, %v3019, %v2967
        %v3037 = vsel %vm3023, %v3020, %v2969
        %v3038 = vsel %vm3023, %v3021, %v2971
        %v3039 = vsel %vm3023, %v3022, %v2973
        %v3040 = vpack.c.bf16 %v3025, %v3024
        %v3041 = vpack.c.bf16 %v3027, %v3026
        %v3042 = vpack.c.bf16 %v3029, %v3028
        %v3043 = vpack.c.bf16 %v3031, %v3030
        %v3044 = vpack.c.bf16 %v3033, %v3032
        %v3045 = vpack.c.bf16 %v3035, %v3034
        %v3046 = vpack.c.bf16 %v3037, %v3036
        %v3047 = vpack.c.bf16 %v3039, %v3038
        %v3048 = vld [vmem:[%s752] sm:$0xf]
        %v3049 = vld [vmem:[%s752 + $0x4] sm:$0xf]
        %v3050 = vld [vmem:[%s752 + $0x8] sm:$0xf]
        %v3051 = vld [vmem:[%s752 + $0xc] sm:$0xf]
        %v3052 = vld [vmem:[%s752 + $0x10] sm:$0xf]
        %v3053 = vld [vmem:[%s752 + $0x14] sm:$0xf]
        %v3054 = vld [vmem:[%s752 + $0x18] sm:$0xf]
        %v3055 = vld [vmem:[%s752 + $0x1c] sm:$0xf]
        %v3056 = vld [vmem:[%s752 + $0x20] sm:$0xf]
        %v3057 = vld [vmem:[%s752 + $0x24] sm:$0xf]
        %v3058 = vld [vmem:[%s752 + $0x28] sm:$0xf]
        %v3059 = vld [vmem:[%s752 + $0x2c] sm:$0xf]
        %v3060 = vld [vmem:[%s752 + $0x30] sm:$0xf]
        %v3061 = vld [vmem:[%s752 + $0x34] sm:$0xf]
        %v3062 = vld [vmem:[%s752 + $0x38] sm:$0xf]
        %v3063 = vld [vmem:[%s752 + $0x3c] sm:$0xf]
        %v3064 = vld [vmem:[%s887] sm:$0x1]
        %v3066 = vperm.slane %v3064, 0
        %v3084 = vunpack.c.l.b16 %v3048
        %v3085 = vunpack.c.l.b16 %v3049
        %v3086 = vunpack.c.l.b16 %v3050
        %v3087 = vunpack.c.l.b16 %v3051
        %v3088 = vunpack.c.l.b16 %v3052
        %v3089 = vunpack.c.l.b16 %v3053
        %v3090 = vunpack.c.l.b16 %v3054
        %v3091 = vunpack.c.l.b16 %v3055
        %v3092 = vunpack.c.l.b16 %v3056
        %v3093 = vunpack.c.l.b16 %v3057
        %v3094 = vunpack.c.l.b16 %v3058
        %v3095 = vunpack.c.l.b16 %v3059
        %v3096 = vunpack.c.l.b16 %v3060
        %v3097 = vunpack.c.l.b16 %v3061
        %v3098 = vunpack.c.l.b16 %v3062
        %v3099 = vunpack.c.l.b16 %v3063
        %v3100 = vpack.c.b16 %v3085, %v3084
        %v3101 = vpack.c.b16 %v3087, %v3086
        %v3102 = vpack.c.b16 %v3089, %v3088
        %v3103 = vpack.c.b16 %v3091, %v3090
        %v3104 = vpack.c.b16 %v3093, %v3092
        %v3105 = vpack.c.b16 %v3095, %v3094
        %v3106 = vpack.c.b16 %v3097, %v3096
        %v3107 = vpack.c.b16 %v3099, %v3098
        %3116 = vmatpush.bf16.msra.mxu0 %v3107
        %3117 = vmatpush.bf16.msra.mxu0 %v3106
        %3118 = vmatpush.bf16.msra.mxu0 %v3105
        %3119 = vmatpush.bf16.msra.mxu0 %v3104
        %3120 = vmatpush.bf16.msra.mxu0 %v3103
        %3121 = vmatpush.bf16.msra.mxu0 %v3102
        %3122 = vmatpush.bf16.msra.mxu0 %v3101
        %3123 = vmatpush.bf16.msra.mxu0 %v3100
        %3124 = vmatmul.bf16.gmra.mxu0 %v3040
        %v3125 = vpop.f32.mrf.mxu0
        %v3126 = vadd.f32 %v3066, %v3125
        %v3127 = vpop.f32.mrf.mxu0
        %v3128 = vadd.f32 %v3066, %v3127
        %3129 = vmatmul.bf16.gmra.mxu0 %v3041
        %v3130 = vpop.f32.mrf.mxu0
        %v3131 = vadd.f32 %v3066, %v3130
        %v3132 = vpop.f32.mrf.mxu0
        %v3133 = vadd.f32 %v3066, %v3132
        %3134 = vmatmul.bf16.gmra.mxu0 %v3042
        %v3135 = vpop.f32.mrf.mxu0
        %v3136 = vadd.f32 %v3066, %v3135
        %v3137 = vpop.f32.mrf.mxu0
        %v3138 = vadd.f32 %v3066, %v3137
        %3139 = vmatmul.bf16.gmra.mxu0 %v3043
        %v3140 = vpop.f32.mrf.mxu0
        %v3141 = vadd.f32 %v3066, %v3140
        %v3142 = vpop.f32.mrf.mxu0
        %v3143 = vadd.f32 %v3066, %v3142
        %3144 = vmatmul.bf16.gmra.mxu0 %v3044
        %v3145 = vpop.f32.mrf.mxu0
        %v3146 = vadd.f32 %v3066, %v3145
        %v3147 = vpop.f32.mrf.mxu0
        %v3148 = vadd.f32 %v3066, %v3147
        %3149 = vmatmul.bf16.gmra.mxu0 %v3045
        %v3150 = vpop.f32.mrf.mxu0
        %v3151 = vadd.f32 %v3066, %v3150
        %v3152 = vpop.f32.mrf.mxu0
        %v3153 = vadd.f32 %v3066, %v3152
        %3154 = vmatmul.bf16.gmra.mxu0 %v3046
        %v3155 = vpop.f32.mrf.mxu0
        %v3156 = vadd.f32 %v3066, %v3155
        %v3157 = vpop.f32.mrf.mxu0
        %v3158 = vadd.f32 %v3066, %v3157
        %3159 = vmatmul.bf16.gmra.mxu0 %v3047
        %v3160 = vpop.f32.mrf.mxu0
        %v3161 = vadd.f32 %v3066, %v3160
        %v3162 = vpop.f32.mrf.mxu0
        %v3163 = vadd.f32 %v3066, %v3162
        %3164 = vdwg.mxu0
        %v3165 = vadd.f32 %v938, %v3126
        %v3166 = vadd.f32 %v939, %v3128
        %v3167 = vadd.f32 %v940, %v3131
        %v3168 = vadd.f32 %v941, %v3133
        %v3169 = vadd.f32 %v942, %v3136
        %v3170 = vadd.f32 %v943, %v3138
        %v3171 = vadd.f32 %v944, %v3141
        %v3172 = vadd.f32 %v945, %v3143
        %v3173 = vadd.f32 %v946, %v3146
        %v3174 = vadd.f32 %v947, %v3148
        %v3175 = vadd.f32 %v948, %v3151
        %v3176 = vadd.f32 %v949, %v3153
        %v3177 = vadd.f32 %v950, %v3156
        %v3178 = vadd.f32 %v951, %v3158
        %v3179 = vadd.f32 %v952, %v3161
        %v3180 = vadd.f32 %v953, %v3163
        %3181 = vadd.xlane.f32.xlu0 %v3165
        %v3182 = vpop.xlane.xlu0 %3181
        %3183 = vadd.xlane.f32.xlu0 %v3166
        %v3184 = vpop.xlane.xlu0 %3183
        %3185 = vadd.xlane.f32.xlu0 %v3167
        %v3186 = vpop.xlane.xlu0 %3185
        %3187 = vadd.xlane.f32.xlu0 %v3168
        %v3188 = vpop.xlane.xlu0 %3187
        %3189 = vadd.xlane.f32.xlu0 %v3169
        %v3190 = vpop.xlane.xlu0 %3189
        %3191 = vadd.xlane.f32.xlu0 %v3170
        %v3192 = vpop.xlane.xlu0 %3191
        %3193 = vadd.xlane.f32.xlu0 %v3171
        %v3194 = vpop.xlane.xlu0 %3193
        %3195 = vadd.xlane.f32.xlu0 %v3172
        %v3196 = vpop.xlane.xlu0 %3195
        %3197 = vadd.xlane.f32.xlu0 %v3173
        %v3198 = vpop.xlane.xlu0 %3197
        %3199 = vadd.xlane.f32.xlu0 %v3174
        %v3200 = vpop.xlane.xlu0 %3199
        %3201 = vadd.xlane.f32.xlu0 %v3175
        %v3202 = vpop.xlane.xlu0 %3201
        %3203 = vadd.xlane.f32.xlu0 %v3176
        %v3204 = vpop.xlane.xlu0 %3203
        %3205 = vadd.xlane.f32.xlu0 %v3177
        %v3206 = vpop.xlane.xlu0 %3205
        %3207 = vadd.xlane.f32.xlu0 %v3178
        %v3208 = vpop.xlane.xlu0 %3207
        %3209 = vadd.xlane.f32.xlu0 %v3179
        %v3210 = vpop.xlane.xlu0 %3209
        %3211 = vadd.xlane.f32.xlu0 %v3180
        %v3212 = vpop.xlane.xlu0 %3211
        %v3213 = vrcp.pop 128.0
        %v3214 = vmul.f32 128.0, %v3213
        %v3215 = vsub.f32 1.0, %v3214
        %v3216 = vmul.f32 %v3213, %v3215
        %v3217 = vadd.f32 %v3213, %v3216
        %vm3218 = vweird.f32 %v3213
        %v3219 = vsel %vm3218, %v3213, %v3217
        %v3220 = vmul.f32 %v3182, %v3219
        %v3221 = vmul.f32 %v3184, %v3219
        %v3222 = vmul.f32 %v3186, %v3219
        %v3223 = vmul.f32 %v3188, %v3219
        %v3224 = vmul.f32 %v3190, %v3219
        %v3225 = vmul.f32 %v3192, %v3219
        %v3226 = vmul.f32 %v3194, %v3219
        %v3227 = vmul.f32 %v3196, %v3219
        %v3228 = vmul.f32 %v3198, %v3219
        %v3229 = vmul.f32 %v3200, %v3219
        %v3230 = vmul.f32 %v3202, %v3219
        %v3231 = vmul.f32 %v3204, %v3219
        %v3232 = vmul.f32 %v3206, %v3219
        %v3233 = vmul.f32 %v3208, %v3219
        %v3234 = vmul.f32 %v3210, %v3219
        %v3235 = vmul.f32 %v3212, %v3219
        %v3236 = vsub.f32 %v3165, %v3220
        %v3237 = vsub.f32 %v3166, %v3221
        %v3238 = vsub.f32 %v3167, %v3222
        %v3239 = vsub.f32 %v3168, %v3223
        %v3240 = vsub.f32 %v3169, %v3224
        %v3241 = vsub.f32 %v3170, %v3225
        %v3242 = vsub.f32 %v3171, %v3226
        %v3243 = vsub.f32 %v3172, %v3227
        %v3244 = vsub.f32 %v3173, %v3228
        %v3245 = vsub.f32 %v3174, %v3229
        %v3246 = vsub.f32 %v3175, %v3230
        %v3247 = vsub.f32 %v3176, %v3231
        %v3248 = vsub.f32 %v3177, %v3232
        %v3249 = vsub.f32 %v3178, %v3233
        %v3250 = vsub.f32 %v3179, %v3234
        %v3251 = vsub.f32 %v3180, %v3235
        %v3252 = vmul.f32 %v3236, %v3236
        %v3253 = vmul.f32 %v3237, %v3237
        %v3254 = vmul.f32 %v3238, %v3238
        %v3255 = vmul.f32 %v3239, %v3239
        %v3256 = vmul.f32 %v3240, %v3240
        %v3257 = vmul.f32 %v3241, %v3241
        %v3258 = vmul.f32 %v3242, %v3242
        %v3259 = vmul.f32 %v3243, %v3243
        %v3260 = vmul.f32 %v3244, %v3244
        %v3261 = vmul.f32 %v3245, %v3245
        %v3262 = vmul.f32 %v3246, %v3246
        %v3263 = vmul.f32 %v3247, %v3247
        %v3264 = vmul.f32 %v3248, %v3248
        %v3265 = vmul.f32 %v3249, %v3249
        %v3266 = vmul.f32 %v3250, %v3250
        %v3267 = vmul.f32 %v3251, %v3251
        %3268 = vadd.xlane.f32.xlu0 %v3252
        %v3269 = vpop.xlane.xlu0 %3268
        %3270 = vadd.xlane.f32.xlu0 %v3253
        %v3271 = vpop.xlane.xlu0 %3270
        %3272 = vadd.xlane.f32.xlu0 %v3254
        %v3273 = vpop.xlane.xlu0 %3272
        %3274 = vadd.xlane.f32.xlu0 %v3255
        %v3275 = vpop.xlane.xlu0 %3274
        %3276 = vadd.xlane.f32.xlu0 %v3256
        %v3277 = vpop.xlane.xlu0 %3276
        %3278 = vadd.xlane.f32.xlu0 %v3257
        %v3279 = vpop.xlane.xlu0 %3278
        %3280 = vadd.xlane.f32.xlu0 %v3258
        %v3281 = vpop.xlane.xlu0 %3280
        %3282 = vadd.xlane.f32.xlu0 %v3259
        %v3283 = vpop.xlane.xlu0 %3282
        %3284 = vadd.xlane.f32.xlu0 %v3260
        %v3285 = vpop.xlane.xlu0 %3284
        %3286 = vadd.xlane.f32.xlu0 %v3261
        %v3287 = vpop.xlane.xlu0 %3286
        %3288 = vadd.xlane.f32.xlu0 %v3262
        %v3289 = vpop.xlane.xlu0 %3288
        %3290 = vadd.xlane.f32.xlu0 %v3263
        %v3291 = vpop.xlane.xlu0 %3290
        %3292 = vadd.xlane.f32.xlu0 %v3264
        %v3293 = vpop.xlane.xlu0 %3292
        %3294 = vadd.xlane.f32.xlu0 %v3265
        %v3295 = vpop.xlane.xlu0 %3294
        %3296 = vadd.xlane.f32.xlu0 %v3266
        %v3297 = vpop.xlane.xlu0 %3296
        %3298 = vadd.xlane.f32.xlu0 %v3267
        %v3299 = vpop.xlane.xlu0 %3298
        %v3300 = vmul.f32 %v3269, %v3219
        %v3301 = vmul.f32 %v3271, %v3219
        %v3302 = vmul.f32 %v3273, %v3219
        %v3303 = vmul.f32 %v3275, %v3219
        %v3304 = vmul.f32 %v3277, %v3219
        %v3305 = vmul.f32 %v3279, %v3219
        %v3306 = vmul.f32 %v3281, %v3219
        %v3307 = vmul.f32 %v3283, %v3219
        %v3308 = vmul.f32 %v3285, %v3219
        %v3309 = vmul.f32 %v3287, %v3219
        %v3310 = vmul.f32 %v3289, %v3219
        %v3311 = vmul.f32 %v3291, %v3219
        %v3312 = vmul.f32 %v3293, %v3219
        %v3313 = vmul.f32 %v3295, %v3219
        %v3314 = vmul.f32 %v3297, %v3219
        %v3315 = vmul.f32 %v3299, %v3219
        %v3316 = vadd.f32 %v3300, 1e-05
        %v3317 = vadd.f32 %v3301, 1e-05
        %v3318 = vadd.f32 %v3302, 1e-05
        %v3319 = vadd.f32 %v3303, 1e-05
        %v3320 = vadd.f32 %v3304, 1e-05
        %v3321 = vadd.f32 %v3305, 1e-05
        %v3322 = vadd.f32 %v3306, 1e-05
        %v3323 = vadd.f32 %v3307, 1e-05
        %v3324 = vadd.f32 %v3308, 1e-05
        %v3325 = vadd.f32 %v3309, 1e-05
        %v3326 = vadd.f32 %v3310, 1e-05
        %v3327 = vadd.f32 %v3311, 1e-05
        %v3328 = vadd.f32 %v3312, 1e-05
        %v3329 = vadd.f32 %v3313, 1e-05
        %v3330 = vadd.f32 %v3314, 1e-05
        %v3331 = vadd.f32 %v3315, 1e-05
        %v3332 = vrsqrt.pop %v3316
        %v3333 = vmul.f32 %v3332, %v3316
        %v3334 = vmul.f32 %v3333, %v3332
        %v3335 = vmul.f32 0.5, %v3334
        %v3336 = vsub.f32 1.5, %v3335
        %v3337 = vmul.f32 %v3332, %v3336
        %vm3338 = vweird.f32 %v3316
        %vm3339 = vweird.f32 %v3332
        %vm3340 = vmor %vm3338, %vm3339
        %v3341 = vsel %vm3340, %v3332, %v3337
        %v3342 = vrsqrt.pop %v3317
        %v3343 = vmul.f32 %v3342, %v3317
        %v3344 = vmul.f32 %v3343, %v3342
        %v3345 = vmul.f32 0.5, %v3344
        %v3346 = vsub.f32 1.5, %v3345
        %v3347 = vmul.f32 %v3342, %v3346
        %vm3348 = vweird.f32 %v3317
        %vm3349 = vweird.f32 %v3342
        %vm3350 = vmor %vm3348, %vm3349
        %v3351 = vsel %vm3350, %v3342, %v3347
        %v3352 = vrsqrt.pop %v3318
        %v3353 = vmul.f32 %v3352, %v3318
        %v3354 = vmul.f32 %v3353, %v3352
        %v3355 = vmul.f32 0.5, %v3354
        %v3356 = vsub.f32 1.5, %v3355
        %v3357 = vmul.f32 %v3352, %v3356
        %vm3358 = vweird.f32 %v3318
        %vm3359 = vweird.f32 %v3352
        %vm3360 = vmor %vm3358, %vm3359
        %v3361 = vsel %vm3360, %v3352, %v3357
        %v3362 = vrsqrt.pop %v3319
        %v3363 = vmul.f32 %v3362, %v3319
        %v3364 = vmul.f32 %v3363, %v3362
        %v3365 = vmul.f32 0.5, %v3364
        %v3366 = vsub.f32 1.5, %v3365
        %v3367 = vmul.f32 %v3362, %v3366
        %vm3368 = vweird.f32 %v3319
        %vm3369 = vweird.f32 %v3362
        %vm3370 = vmor %vm3368, %vm3369
        %v3371 = vsel %vm3370, %v3362, %v3367
        %v3372 = vrsqrt.pop %v3320
        %v3373 = vmul.f32 %v3372, %v3320
        %v3374 = vmul.f32 %v3373, %v3372
        %v3375 = vmul.f32 0.5, %v3374
        %v3376 = vsub.f32 1.5, %v3375
        %v3377 = vmul.f32 %v3372, %v3376
        %vm3378 = vweird.f32 %v3320
        %vm3379 = vweird.f32 %v3372
        %vm3380 = vmor %vm3378, %vm3379
        %v3381 = vsel %vm3380, %v3372, %v3377
        %v3382 = vrsqrt.pop %v3321
        %v3383 = vmul.f32 %v3382, %v3321
        %v3384 = vmul.f32 %v3383, %v3382
        %v3385 = vmul.f32 0.5, %v3384
        %v3386 = vsub.f32 1.5, %v3385
        %v3387 = vmul.f32 %v3382, %v3386
        %vm3388 = vweird.f32 %v3321
        %vm3389 = vweird.f32 %v3382
        %vm3390 = vmor %vm3388, %vm3389
        %v3391 = vsel %vm3390, %v3382, %v3387
        %v3392 = vrsqrt.pop %v3322
        %v3393 = vmul.f32 %v3392, %v3322
        %v3394 = vmul.f32 %v3393, %v3392
        %v3395 = vmul.f32 0.5, %v3394
        %v3396 = vsub.f32 1.5, %v3395
        %v3397 = vmul.f32 %v3392, %v3396
        %vm3398 = vweird.f32 %v3322
        %vm3399 = vweird.f32 %v3392
        %vm3400 = vmor %vm3398, %vm3399
        %v3401 = vsel %vm3400, %v3392, %v3397
        %v3402 = vrsqrt.pop %v3323
        %v3403 = vmul.f32 %v3402, %v3323
        %v3404 = vmul.f32 %v3403, %v3402
        %v3405 = vmul.f32 0.5, %v3404
        %v3406 = vsub.f32 1.5, %v3405
        %v3407 = vmul.f32 %v3402, %v3406
        %vm3408 = vweird.f32 %v3323
        %vm3409 = vweird.f32 %v3402
        %vm3410 = vmor %vm3408, %vm3409
        %v3411 = vsel %vm3410, %v3402, %v3407
        %v3412 = vrsqrt.pop %v3324
        %v3413 = vmul.f32 %v3412, %v3324
        %v3414 = vmul.f32 %v3413, %v3412
        %v3415 = vmul.f32 0.5, %v3414
        %v3416 = vsub.f32 1.5, %v3415
        %v3417 = vmul.f32 %v3412, %v3416
        %vm3418 = vweird.f32 %v3324
        %vm3419 = vweird.f32 %v3412
        %vm3420 = vmor %vm3418, %vm3419
        %v3421 = vsel %vm3420, %v3412, %v3417
        %v3422 = vrsqrt.pop %v3325
        %v3423 = vmul.f32 %v3422, %v3325
        %v3424 = vmul.f32 %v3423, %v3422
        %v3425 = vmul.f32 0.5, %v3424
        %v3426 = vsub.f32 1.5, %v3425
        %v3427 = vmul.f32 %v3422, %v3426
        %vm3428 = vweird.f32 %v3325
        %vm3429 = vweird.f32 %v3422
        %vm3430 = vmor %vm3428, %vm3429
        %v3431 = vsel %vm3430, %v3422, %v3427
        %v3432 = vrsqrt.pop %v3326
        %v3433 = vmul.f32 %v3432, %v3326
        %v3434 = vmul.f32 %v3433, %v3432
        %v3435 = vmul.f32 0.5, %v3434
        %v3436 = vsub.f32 1.5, %v3435
        %v3437 = vmul.f32 %v3432, %v3436
        %vm3438 = vweird.f32 %v3326
        %vm3439 = vweird.f32 %v3432
        %vm3440 = vmor %vm3438, %vm3439
        %v3441 = vsel %vm3440, %v3432, %v3437
        %v3442 = vrsqrt.pop %v3327
        %v3443 = vmul.f32 %v3442, %v3327
        %v3444 = vmul.f32 %v3443, %v3442
        %v3445 = vmul.f32 0.5, %v3444
        %v3446 = vsub.f32 1.5, %v3445
        %v3447 = vmul.f32 %v3442, %v3446
        %vm3448 = vweird.f32 %v3327
        %vm3449 = vweird.f32 %v3442
        %vm3450 = vmor %vm3448, %vm3449
        %v3451 = vsel %vm3450, %v3442, %v3447
        %v3452 = vrsqrt.pop %v3328
        %v3453 = vmul.f32 %v3452, %v3328
        %v3454 = vmul.f32 %v3453, %v3452
        %v3455 = vmul.f32 0.5, %v3454
        %v3456 = vsub.f32 1.5, %v3455
        %v3457 = vmul.f32 %v3452, %v3456
        %vm3458 = vweird.f32 %v3328
        %vm3459 = vweird.f32 %v3452
        %vm3460 = vmor %vm3458, %vm3459
        %v3461 = vsel %vm3460, %v3452, %v3457
        %v3462 = vrsqrt.pop %v3329
        %v3463 = vmul.f32 %v3462, %v3329
        %v3464 = vmul.f32 %v3463, %v3462
        %v3465 = vmul.f32 0.5, %v3464
        %v3466 = vsub.f32 1.5, %v3465
        %v3467 = vmul.f32 %v3462, %v3466
        %vm3468 = vweird.f32 %v3329
        %vm3469 = vweird.f32 %v3462
        %vm3470 = vmor %vm3468, %vm3469
        %v3471 = vsel %vm3470, %v3462, %v3467
        %v3472 = vrsqrt.pop %v3330
        %v3473 = vmul.f32 %v3472, %v3330
        %v3474 = vmul.f32 %v3473, %v3472
        %v3475 = vmul.f32 0.5, %v3474
        %v3476 = vsub.f32 1.5, %v3475
        %v3477 = vmul.f32 %v3472, %v3476
        %vm3478 = vweird.f32 %v3330
        %vm3479 = vweird.f32 %v3472
        %vm3480 = vmor %vm3478, %vm3479
        %v3481 = vsel %vm3480, %v3472, %v3477
        %v3482 = vrsqrt.pop %v3331
        %v3483 = vmul.f32 %v3482, %v3331
        %v3484 = vmul.f32 %v3483, %v3482
        %v3485 = vmul.f32 0.5, %v3484
        %v3486 = vsub.f32 1.5, %v3485
        %v3487 = vmul.f32 %v3482, %v3486
        %vm3488 = vweird.f32 %v3331
        %vm3489 = vweird.f32 %v3482
        %vm3490 = vmor %vm3488, %vm3489
        %v3491 = vsel %vm3490, %v3482, %v3487
        %v3492 = vmul.f32 %v3236, %v3341
        %v3493 = vmul.f32 %v3237, %v3351
        %v3494 = vmul.f32 %v3238, %v3361
        %v3495 = vmul.f32 %v3239, %v3371
        %v3496 = vmul.f32 %v3240, %v3381
        %v3497 = vmul.f32 %v3241, %v3391
        %v3498 = vmul.f32 %v3242, %v3401
        %v3499 = vmul.f32 %v3243, %v3411
        %v3500 = vmul.f32 %v3244, %v3421
        %v3501 = vmul.f32 %v3245, %v3431
        %v3502 = vmul.f32 %v3246, %v3441
        %v3503 = vmul.f32 %v3247, %v3451
        %v3504 = vmul.f32 %v3248, %v3461
        %v3505 = vmul.f32 %v3249, %v3471
        %v3506 = vmul.f32 %v3250, %v3481
        %v3507 = vmul.f32 %v3251, %v3491
        %v3508 = vld [vmem:[%s761] sm:$0x1]
        %v3510 = vperm.slane %v3508, 0
        %v3512 = vmul.f32 %v3492, %v3510
        %v3513 = vmul.f32 %v3493, %v3510
        %v3514 = vmul.f32 %v3494, %v3510
        %v3515 = vmul.f32 %v3495, %v3510
        %v3516 = vmul.f32 %v3496, %v3510
        %v3517 = vmul.f32 %v3497, %v3510
        %v3518 = vmul.f32 %v3498, %v3510
        %v3519 = vmul.f32 %v3499, %v3510
        %v3520 = vmul.f32 %v3500, %v3510
        %v3521 = vmul.f32 %v3501, %v3510
        %v3522 = vmul.f32 %v3502, %v3510
        %v3523 = vmul.f32 %v3503, %v3510
        %v3524 = vmul.f32 %v3504, %v3510
        %v3525 = vmul.f32 %v3505, %v3510
        %v3526 = vmul.f32 %v3506, %v3510
        %v3527 = vmul.f32 %v3507, %v3510
        %v3528 = vld [vmem:[%s770] sm:$0x1]
        %v3530 = vperm.slane %v3528, 0
        %v3532 = vadd.f32 %v3512, %v3530
        %v3533 = vadd.f32 %v3513, %v3530
        %v3534 = vadd.f32 %v3514, %v3530
        %v3535 = vadd.f32 %v3515, %v3530
        %v3536 = vadd.f32 %v3516, %v3530
        %v3537 = vadd.f32 %v3517, %v3530
        %v3538 = vadd.f32 %v3518, %v3530
        %v3539 = vadd.f32 %v3519, %v3530
        %v3540 = vadd.f32 %v3520, %v3530
        %v3541 = vadd.f32 %v3521, %v3530
        %v3542 = vadd.f32 %v3522, %v3530
        %v3543 = vadd.f32 %v3523, %v3530
        %v3544 = vadd.f32 %v3524, %v3530
        %v3545 = vadd.f32 %v3525, %v3530
        %v3546 = vadd.f32 %v3526, %v3530
        %v3547 = vadd.f32 %v3527, %v3530
        %v3548 = vpack.c.bf16 %v3533, %v3532
        %v3549 = vpack.c.bf16 %v3535, %v3534
        %v3550 = vpack.c.bf16 %v3537, %v3536
        %v3551 = vpack.c.bf16 %v3539, %v3538
        %v3552 = vpack.c.bf16 %v3541, %v3540
        %v3553 = vpack.c.bf16 %v3543, %v3542
        %v3554 = vpack.c.bf16 %v3545, %v3544
        %v3555 = vpack.c.bf16 %v3547, %v3546
        %v3556 = vld [vmem:[%s780] sm:$0xff]
        %v3557 = vld [vmem:[%s780 + $0x8] sm:$0xff]
        %v3558 = vld [vmem:[%s780 + $0x10] sm:$0xff]
        %v3559 = vld [vmem:[%s780 + $0x18] sm:$0xff]
        %v3560 = vld [vmem:[%s780 + $0x20] sm:$0xff]
        %v3561 = vld [vmem:[%s780 + $0x28] sm:$0xff]
        %v3562 = vld [vmem:[%s780 + $0x30] sm:$0xff]
        %v3563 = vld [vmem:[%s780 + $0x38] sm:$0xff]
        %v3564 = vld [vmem:[%s780 + $0x40] sm:$0xff]
        %v3565 = vld [vmem:[%s780 + $0x48] sm:$0xff]
        %v3566 = vld [vmem:[%s780 + $0x50] sm:$0xff]
        %v3567 = vld [vmem:[%s780 + $0x58] sm:$0xff]
        %v3568 = vld [vmem:[%s780 + $0x60] sm:$0xff]
        %v3569 = vld [vmem:[%s780 + $0x68] sm:$0xff]
        %v3570 = vld [vmem:[%s780 + $0x70] sm:$0xff]
        %v3571 = vld [vmem:[%s780 + $0x78] sm:$0xff]
        %v3572 = vld [vmem:[%s891] sm:$0x3]
        %v3574 = vperm.slane %v3572, 0
        %v3575 = vperm.slane %v3572, 1
        %v3594 = vunpack.c.l.b16 %v3556
        %v3595 = vunpack.c.h.b16 %v3556
        %v3596 = vunpack.c.l.b16 %v3557
        %v3597 = vunpack.c.h.b16 %v3557
        %v3598 = vunpack.c.l.b16 %v3558
        %v3599 = vunpack.c.h.b16 %v3558
        %v3600 = vunpack.c.l.b16 %v3559
        %v3601 = vunpack.c.h.b16 %v3559
        %v3602 = vunpack.c.l.b16 %v3560
        %v3603 = vunpack.c.h.b16 %v3560
        %v3604 = vunpack.c.l.b16 %v3561
        %v3605 = vunpack.c.h.b16 %v3561
        %v3606 = vunpack.c.l.b16 %v3562
        %v3607 = vunpack.c.h.b16 %v3562
        %v3608 = vunpack.c.l.b16 %v3563
        %v3609 = vunpack.c.h.b16 %v3563
        %v3610 = vunpack.c.l.b16 %v3564
        %v3611 = vunpack.c.h.b16 %v3564
        %v3612 = vunpack.c.l.b16 %v3565
        %v3613 = vunpack.c.h.b16 %v3565
        %v3614 = vunpack.c.l.b16 %v3566
        %v3615 = vunpack.c.h.b16 %v3566
        %v3616 = vunpack.c.l.b16 %v3567
        %v3617 = vunpack.c.h.b16 %v3567
        %v3618 = vunpack.c.l.b16 %v3568
        %v3619 = vunpack.c.h.b16 %v3568
        %v3620 = vunpack.c.l.b16 %v3569
        %v3621 = vunpack.c.h.b16 %v3569
        %v3622 = vunpack.c.l.b16 %v3570
        %v3623 = vunpack.c.h.b16 %v3570
        %v3624 = vunpack.c.l.b16 %v3571
        %v3625 = vunpack.c.h.b16 %v3571
        %v3626 = vpack.c.b16 %v3596, %v3594
        %v3627 = vpack.c.b16 %v3597, %v3595
        %v3628 = vpack.c.b16 %v3600, %v3598
        %v3629 = vpack.c.b16 %v3601, %v3599
        %v3630 = vpack.c.b16 %v3604, %v3602
        %v3631 = vpack.c.b16 %v3605, %v3603
        %v3632 = vpack.c.b16 %v3608, %v3606
        %v3633 = vpack.c.b16 %v3609, %v3607
        %v3634 = vpack.c.b16 %v3612, %v3610
        %v3635 = vpack.c.b16 %v3613, %v3611
        %v3636 = vpack.c.b16 %v3616, %v3614
        %v3637 = vpack.c.b16 %v3617, %v3615
        %v3638 = vpack.c.b16 %v3620, %v3618
        %v3639 = vpack.c.b16 %v3621, %v3619
        %v3640 = vpack.c.b16 %v3624, %v3622
        %v3641 = vpack.c.b16 %v3625, %v3623
        %3658 = vmatpush.bf16.msra.mxu0 %v3640
        %3659 = vmatpush.bf16.msra.mxu0 %v3638
        %3660 = vmatpush.bf16.msra.mxu0 %v3636
        %3661 = vmatpush.bf16.msra.mxu0 %v3634
        %3662 = vmatpush.bf16.msra.mxu0 %v3632
        %3663 = vmatpush.bf16.msra.mxu0 %v3630
        %3664 = vmatpush.bf16.msra.mxu0 %v3628
        %3665 = vmatpush.bf16.msra.mxu0 %v3626
        %3666 = vmatmul.bf16.gmra.mxu0 %v3548
        %v3667 = vpop.f32.mrf.mxu0
        %v3668 = vadd.f32 %v3574, %v3667
        %v3669 = vpop.f32.mrf.mxu0
        %v3670 = vadd.f32 %v3574, %v3669
        %3671 = vmatmul.bf16.gmra.mxu0 %v3549
        %v3672 = vpop.f32.mrf.mxu0
        %v3673 = vadd.f32 %v3574, %v3672
        %v3674 = vpop.f32.mrf.mxu0
        %v3675 = vadd.f32 %v3574, %v3674
        %3676 = vmatmul.bf16.gmra.mxu0 %v3550
        %v3677 = vpop.f32.mrf.mxu0
        %v3678 = vadd.f32 %v3574, %v3677
        %v3679 = vpop.f32.mrf.mxu0
        %v3680 = vadd.f32 %v3574, %v3679
        %3681 = vmatmul.bf16.gmra.mxu0 %v3551
        %v3682 = vpop.f32.mrf.mxu0
        %v3683 = vadd.f32 %v3574, %v3682
        %v3684 = vpop.f32.mrf.mxu0
        %v3685 = vadd.f32 %v3574, %v3684
        %3686 = vmatmul.bf16.gmra.mxu0 %v3552
        %v3687 = vpop.f32.mrf.mxu0
        %v3688 = vadd.f32 %v3574, %v3687
        %v3689 = vpop.f32.mrf.mxu0
        %v3690 = vadd.f32 %v3574, %v3689
        %3691 = vmatmul.bf16.gmra.mxu0 %v3553
        %v3692 = vpop.f32.mrf.mxu0
        %v3693 = vadd.f32 %v3574, %v3692
        %v3694 = vpop.f32.mrf.mxu0
        %v3695 = vadd.f32 %v3574, %v3694
        %3696 = vmatmul.bf16.gmra.mxu0 %v3554
        %v3697 = vpop.f32.mrf.mxu0
        %v3698 = vadd.f32 %v3574, %v3697
        %v3699 = vpop.f32.mrf.mxu0
        %v3700 = vadd.f32 %v3574, %v3699
        %3701 = vmatmul.bf16.gmra.mxu0 %v3555
        %v3702 = vpop.f32.mrf.mxu0
        %v3703 = vadd.f32 %v3574, %v3702
        %v3704 = vpop.f32.mrf.mxu0
        %v3705 = vadd.f32 %v3574, %v3704
        %3706 = vdwg.mxu0
        %3707 = vmatpush.bf16.msra.mxu0 %v3641
        %3708 = vmatpush.bf16.msra.mxu0 %v3639
        %3709 = vmatpush.bf16.msra.mxu0 %v3637
        %3710 = vmatpush.bf16.msra.mxu0 %v3635
        %3711 = vmatpush.bf16.msra.mxu0 %v3633
        %3712 = vmatpush.bf16.msra.mxu0 %v3631
        %3713 = vmatpush.bf16.msra.mxu0 %v3629
        %3714 = vmatpush.bf16.msra.mxu0 %v3627
        %3715 = vmatmul.bf16.gmra.mxu0 %v3548
        %v3716 = vpop.f32.mrf.mxu0
        %v3717 = vadd.f32 %v3575, %v3716
        %v3718 = vpop.f32.mrf.mxu0
        %v3719 = vadd.f32 %v3575, %v3718
        %3720 = vmatmul.bf16.gmra.mxu0 %v3549
        %v3721 = vpop.f32.mrf.mxu0
        %v3722 = vadd.f32 %v3575, %v3721
        %v3723 = vpop.f32.mrf.mxu0
        %v3724 = vadd.f32 %v3575, %v3723
        %3725 = vmatmul.bf16.gmra.mxu0 %v3550
        %v3726 = vpop.f32.mrf.mxu0
        %v3727 = vadd.f32 %v3575, %v3726
        %v3728 = vpop.f32.mrf.mxu0
        %v3729 = vadd.f32 %v3575, %v3728
        %3730 = vmatmul.bf16.gmra.mxu0 %v3551
        %v3731 = vpop.f32.mrf.mxu0
        %v3732 = vadd.f32 %v3575, %v3731
        %v3733 = vpop.f32.mrf.mxu0
        %v3734 = vadd.f32 %v3575, %v3733
        %3735 = vmatmul.bf16.gmra.mxu0 %v3552
        %v3736 = vpop.f32.mrf.mxu0
        %v3737 = vadd.f32 %v3575, %v3736
        %v3738 = vpop.f32.mrf.mxu0
        %v3739 = vadd.f32 %v3575, %v3738
        %3740 = vmatmul.bf16.gmra.mxu0 %v3553
        %v3741 = vpop.f32.mrf.mxu0
        %v3742 = vadd.f32 %v3575, %v3741
        %v3743 = vpop.f32.mrf.mxu0
        %v3744 = vadd.f32 %v3575, %v3743
        %3745 = vmatmul.bf16.gmra.mxu0 %v3554
        %v3746 = vpop.f32.mrf.mxu0
        %v3747 = vadd.f32 %v3575, %v3746
        %v3748 = vpop.f32.mrf.mxu0
        %v3749 = vadd.f32 %v3575, %v3748
        %3750 = vmatmul.bf16.gmra.mxu0 %v3555
        %v3751 = vpop.f32.mrf.mxu0
        %v3752 = vadd.f32 %v3575, %v3751
        %v3753 = vpop.f32.mrf.mxu0
        %v3754 = vadd.f32 %v3575, %v3753
        %3755 = vdwg.mxu0
        %v3756 = vmax.f32 %v3668, 0.0
        %v3757 = vmax.f32 %v3717, 0.0
        %v3758 = vmax.f32 %v3670, 0.0
        %v3759 = vmax.f32 %v3719, 0.0
        %v3760 = vmax.f32 %v3673, 0.0
        %v3761 = vmax.f32 %v3722, 0.0
        %v3762 = vmax.f32 %v3675, 0.0
        %v3763 = vmax.f32 %v3724, 0.0
        %v3764 = vmax.f32 %v3678, 0.0
        %v3765 = vmax.f32 %v3727, 0.0
        %v3766 = vmax.f32 %v3680, 0.0
        %v3767 = vmax.f32 %v3729, 0.0
        %v3768 = vmax.f32 %v3683, 0.0
        %v3769 = vmax.f32 %v3732, 0.0
        %v3770 = vmax.f32 %v3685, 0.0
        %v3771 = vmax.f32 %v3734, 0.0
        %v3772 = vmax.f32 %v3688, 0.0
        %v3773 = vmax.f32 %v3737, 0.0
        %v3774 = vmax.f32 %v3690, 0.0
        %v3775 = vmax.f32 %v3739, 0.0
        %v3776 = vmax.f32 %v3693, 0.0
        %v3777 = vmax.f32 %v3742, 0.0
        %v3778 = vmax.f32 %v3695, 0.0
        %v3779 = vmax.f32 %v3744, 0.0
        %v3780 = vmax.f32 %v3698, 0.0
        %v3781 = vmax.f32 %v3747, 0.0
        %v3782 = vmax.f32 %v3700, 0.0
        %v3783 = vmax.f32 %v3749, 0.0
        %v3784 = vmax.f32 %v3703, 0.0
        %v3785 = vmax.f32 %v3752, 0.0
        %v3786 = vmax.f32 %v3705, 0.0
        %v3787 = vmax.f32 %v3754, 0.0
        %v3788 = vpack.c.bf16 %v3758, %v3756
        %v3789 = vpack.c.bf16 %v3759, %v3757
        %v3790 = vpack.c.bf16 %v3762, %v3760
        %v3791 = vpack.c.bf16 %v3763, %v3761
        %v3792 = vpack.c.bf16 %v3766, %v3764
        %v3793 = vpack.c.bf16 %v3767, %v3765
        %v3794 = vpack.c.bf16 %v3770, %v3768
        %v3795 = vpack.c.bf16 %v3771, %v3769
        %v3796 = vpack.c.bf16 %v3774, %v3772
        %v3797 = vpack.c.bf16 %v3775, %v3773
        %v3798 = vpack.c.bf16 %v3778, %v3776
        %v3799 = vpack.c.bf16 %v3779, %v3777
        %v3800 = vpack.c.bf16 %v3782, %v3780
        %v3801 = vpack.c.bf16 %v3783, %v3781
        %v3802 = vpack.c.bf16 %v3786, %v3784
        %v3803 = vpack.c.bf16 %v3787, %v3785
        %v3804 = vld [vmem:[%s790] sm:$0xf]
        %v3805 = vld [vmem:[%s790 + $0x4] sm:$0xf]
        %v3806 = vld [vmem:[%s790 + $0x8] sm:$0xf]
        %v3807 = vld [vmem:[%s790 + $0xc] sm:$0xf]
        %v3808 = vld [vmem:[%s790 + $0x10] sm:$0xf]
        %v3809 = vld [vmem:[%s790 + $0x14] sm:$0xf]
        %v3810 = vld [vmem:[%s790 + $0x18] sm:$0xf]
        %v3811 = vld [vmem:[%s790 + $0x1c] sm:$0xf]
        %v3812 = vld [vmem:[%s790 + $0x20] sm:$0xf]
        %v3813 = vld [vmem:[%s790 + $0x24] sm:$0xf]
        %v3814 = vld [vmem:[%s790 + $0x28] sm:$0xf]
        %v3815 = vld [vmem:[%s790 + $0x2c] sm:$0xf]
        %v3816 = vld [vmem:[%s790 + $0x30] sm:$0xf]
        %v3817 = vld [vmem:[%s790 + $0x34] sm:$0xf]
        %v3818 = vld [vmem:[%s790 + $0x38] sm:$0xf]
        %v3819 = vld [vmem:[%s790 + $0x3c] sm:$0xf]
        %v3820 = vld [vmem:[%s790 + $0x40] sm:$0xf]
        %v3821 = vld [vmem:[%s790 + $0x44] sm:$0xf]
        %v3822 = vld [vmem:[%s790 + $0x48] sm:$0xf]
        %v3823 = vld [vmem:[%s790 + $0x4c] sm:$0xf]
        %v3824 = vld [vmem:[%s790 + $0x50] sm:$0xf]
        %v3825 = vld [vmem:[%s790 + $0x54] sm:$0xf]
        %v3826 = vld [vmem:[%s790 + $0x58] sm:$0xf]
        %v3827 = vld [vmem:[%s790 + $0x5c] sm:$0xf]
        %v3828 = vld [vmem:[%s790 + $0x60] sm:$0xf]
        %v3829 = vld [vmem:[%s790 + $0x64] sm:$0xf]
        %v3830 = vld [vmem:[%s790 + $0x68] sm:$0xf]
        %v3831 = vld [vmem:[%s790 + $0x6c] sm:$0xf]
        %v3832 = vld [vmem:[%s790 + $0x70] sm:$0xf]
        %v3833 = vld [vmem:[%s790 + $0x74] sm:$0xf]
        %v3834 = vld [vmem:[%s790 + $0x78] sm:$0xf]
        %v3835 = vld [vmem:[%s790 + $0x7c] sm:$0xf]
        %v3836 = vld [vmem:[%s894] sm:$0x1]
        %v3838 = vperm.slane %v3836, 0
        %v3872 = vunpack.c.l.b16 %v3804
        %v3873 = vunpack.c.l.b16 %v3805
        %v3874 = vunpack.c.l.b16 %v3806
        %v3875 = vunpack.c.l.b16 %v3807
        %v3876 = vunpack.c.l.b16 %v3808
        %v3877 = vunpack.c.l.b16 %v3809
        %v3878 = vunpack.c.l.b16 %v3810
        %v3879 = vunpack.c.l.b16 %v3811
        %v3880 = vunpack.c.l.b16 %v3812
        %v3881 = vunpack.c.l.b16 %v3813
        %v3882 = vunpack.c.l.b16 %v3814
        %v3883 = vunpack.c.l.b16 %v3815
        %v3884 = vunpack.c.l.b16 %v3816
        %v3885 = vunpack.c.l.b16 %v3817
        %v3886 = vunpack.c.l.b16 %v3818
        %v3887 = vunpack.c.l.b16 %v3819
        %v3888 = vunpack.c.l.b16 %v3820
        %v3889 = vunpack.c.l.b16 %v3821
        %v3890 = vunpack.c.l.b16 %v3822
        %v3891 = vunpack.c.l.b16 %v3823
        %v3892 = vunpack.c.l.b16 %v3824
        %v3893 = vunpack.c.l.b16 %v3825
        %v3894 = vunpack.c.l.b16 %v3826
        %v3895 = vunpack.c.l.b16 %v3827
        %v3896 = vunpack.c.l.b16 %v3828
        %v3897 = vunpack.c.l.b16 %v3829
        %v3898 = vunpack.c.l.b16 %v3830
        %v3899 = vunpack.c.l.b16 %v3831
        %v3900 = vunpack.c.l.b16 %v3832
        %v3901 = vunpack.c.l.b16 %v3833
        %v3902 = vunpack.c.l.b16 %v3834
        %v3903 = vunpack.c.l.b16 %v3835
        %v3904 = vpack.c.b16 %v3873, %v3872
        %v3905 = vpack.c.b16 %v3875, %v3874
        %v3906 = vpack.c.b16 %v3877, %v3876
        %v3907 = vpack.c.b16 %v3879, %v3878
        %v3908 = vpack.c.b16 %v3881, %v3880
        %v3909 = vpack.c.b16 %v3883, %v3882
        %v3910 = vpack.c.b16 %v3885, %v3884
        %v3911 = vpack.c.b16 %v3887, %v3886
        %v3912 = vpack.c.b16 %v3889, %v3888
        %v3913 = vpack.c.b16 %v3891, %v3890
        %v3914 = vpack.c.b16 %v3893, %v3892
        %v3915 = vpack.c.b16 %v3895, %v3894
        %v3916 = vpack.c.b16 %v3897, %v3896
        %v3917 = vpack.c.b16 %v3899, %v3898
        %v3918 = vpack.c.b16 %v3901, %v3900
        %v3919 = vpack.c.b16 %v3903, %v3902
        %3936 = vmatpush.bf16.msra.mxu0 %v3911
        %3937 = vmatpush.bf16.msra.mxu0 %v3910
        %3938 = vmatpush.bf16.msra.mxu0 %v3909
        %3939 = vmatpush.bf16.msra.mxu0 %v3908
        %3940 = vmatpush.bf16.msra.mxu0 %v3907
        %3941 = vmatpush.bf16.msra.mxu0 %v3906
        %3942 = vmatpush.bf16.msra.mxu0 %v3905
        %3943 = vmatpush.bf16.msra.mxu0 %v3904
        %3944 = vmatmul.bf16.gmra.mxu0 %v3788
        %v3945 = vpop.f32.mrf.mxu0
        %v3946 = vadd.f32 %v3838, %v3945
        %v3947 = vpop.f32.mrf.mxu0
        %v3948 = vadd.f32 %v3838, %v3947
        %3949 = vmatmul.bf16.gmra.mxu0 %v3790
        %v3950 = vpop.f32.mrf.mxu0
        %v3951 = vadd.f32 %v3838, %v3950
        %v3952 = vpop.f32.mrf.mxu0
        %v3953 = vadd.f32 %v3838, %v3952
        %3954 = vmatmul.bf16.gmra.mxu0 %v3792
        %v3955 = vpop.f32.mrf.mxu0
        %v3956 = vadd.f32 %v3838, %v3955
        %v3957 = vpop.f32.mrf.mxu0
        %v3958 = vadd.f32 %v3838, %v3957
        %3959 = vmatmul.bf16.gmra.mxu0 %v3794
        %v3960 = vpop.f32.mrf.mxu0
        %v3961 = vadd.f32 %v3838, %v3960
        %v3962 = vpop.f32.mrf.mxu0
        %v3963 = vadd.f32 %v3838, %v3962
        %3964 = vmatmul.bf16.gmra.mxu0 %v3796
        %v3965 = vpop.f32.mrf.mxu0
        %v3966 = vadd.f32 %v3838, %v3965
        %v3967 = vpop.f32.mrf.mxu0
        %v3968 = vadd.f32 %v3838, %v3967
        %3969 = vmatmul.bf16.gmra.mxu0 %v3798
        %v3970 = vpop.f32.mrf.mxu0
        %v3971 = vadd.f32 %v3838, %v3970
        %v3972 = vpop.f32.mrf.mxu0
        %v3973 = vadd.f32 %v3838, %v3972
        %3974 = vmatmul.bf16.gmra.mxu0 %v3800
        %v3975 = vpop.f32.mrf.mxu0
        %v3976 = vadd.f32 %v3838, %v3975
        %v3977 = vpop.f32.mrf.mxu0
        %v3978 = vadd.f32 %v3838, %v3977
        %3979 = vmatmul.bf16.gmra.mxu0 %v3802
        %v3980 = vpop.f32.mrf.mxu0
        %v3981 = vadd.f32 %v3838, %v3980
        %v3982 = vpop.f32.mrf.mxu0
        %v3983 = vadd.f32 %v3838, %v3982
        %3984 = vdwg.mxu0
        %3985 = vmatpush.bf16.msra.mxu0 %v3919
        %3986 = vmatpush.bf16.msra.mxu0 %v3918
        %3987 = vmatpush.bf16.msra.mxu0 %v3917
        %3988 = vmatpush.bf16.msra.mxu0 %v3916
        %3989 = vmatpush.bf16.msra.mxu0 %v3915
        %3990 = vmatpush.bf16.msra.mxu0 %v3914
        %3991 = vmatpush.bf16.msra.mxu0 %v3913
        %3992 = vmatpush.bf16.msra.mxu0 %v3912
        %3993 = vmatmul.bf16.gmra.mxu0 %v3789
        %v3994 = vpop.f32.mrf.mxu0
        %v3995 = vadd.f32 %v3946, %v3994
        %v3996 = vpop.f32.mrf.mxu0
        %v3997 = vadd.f32 %v3948, %v3996
        %3998 = vmatmul.bf16.gmra.mxu0 %v3791
        %v3999 = vpop.f32.mrf.mxu0
        %v4000 = vadd.f32 %v3951, %v3999
        %v4001 = vpop.f32.mrf.mxu0
        %v4002 = vadd.f32 %v3953, %v4001
        %4003 = vmatmul.bf16.gmra.mxu0 %v3793
        %v4004 = vpop.f32.mrf.mxu0
        %v4005 = vadd.f32 %v3956, %v4004
        %v4006 = vpop.f32.mrf.mxu0
        %v4007 = vadd.f32 %v3958, %v4006
        %4008 = vmatmul.bf16.gmra.mxu0 %v3795
        %v4009 = vpop.f32.mrf.mxu0
        %v4010 = vadd.f32 %v3961, %v4009
        %v4011 = vpop.f32.mrf.mxu0
        %v4012 = vadd.f32 %v3963, %v4011
        %4013 = vmatmul.bf16.gmra.mxu0 %v3797
        %v4014 = vpop.f32.mrf.mxu0
        %v4015 = vadd.f32 %v3966, %v4014
        %v4016 = vpop.f32.mrf.mxu0
        %v4017 = vadd.f32 %v3968, %v4016
        %4018 = vmatmul.bf16.gmra.mxu0 %v3799
        %v4019 = vpop.f32.mrf.mxu0
        %v4020 = vadd.f32 %v3971, %v4019
        %v4021 = vpop.f32.mrf.mxu0
        %v4022 = vadd.f32 %v3973, %v4021
        %4023 = vmatmul.bf16.gmra.mxu0 %v3801
        %v4024 = vpop.f32.mrf.mxu0
        %v4025 = vadd.f32 %v3976, %v4024
        %v4026 = vpop.f32.mrf.mxu0
        %v4027 = vadd.f32 %v3978, %v4026
        %4028 = vmatmul.bf16.gmra.mxu0 %v3803
        %v4029 = vpop.f32.mrf.mxu0
        %v4030 = vadd.f32 %v3981, %v4029
        %v4031 = vpop.f32.mrf.mxu0
        %v4032 = vadd.f32 %v3983, %v4031
        %4033 = vdwg.mxu0
        %v4034 = vadd.f32 %v3532, %v3995
        %v4035 = vadd.f32 %v3533, %v3997
        %v4036 = vadd.f32 %v3534, %v4000
        %v4037 = vadd.f32 %v3535, %v4002
        %v4038 = vadd.f32 %v3536, %v4005
        %v4039 = vadd.f32 %v3537, %v4007
        %v4040 = vadd.f32 %v3538, %v4010
        %v4041 = vadd.f32 %v3539, %v4012
        %v4042 = vadd.f32 %v3540, %v4015
        %v4043 = vadd.f32 %v3541, %v4017
        %v4044 = vadd.f32 %v3542, %v4020
        %v4045 = vadd.f32 %v3543, %v4022
        %v4046 = vadd.f32 %v3544, %v4025
        %v4047 = vadd.f32 %v3545, %v4027
        %v4048 = vadd.f32 %v3546, %v4030
        %v4049 = vadd.f32 %v3547, %v4032
        %4050 = vadd.xlane.f32.xlu0 %v4034
        %v4051 = vpop.xlane.xlu0 %4050
        %4052 = vadd.xlane.f32.xlu0 %v4035
        %v4053 = vpop.xlane.xlu0 %4052
        %4054 = vadd.xlane.f32.xlu0 %v4036
        %v4055 = vpop.xlane.xlu0 %4054
        %4056 = vadd.xlane.f32.xlu0 %v4037
        %v4057 = vpop.xlane.xlu0 %4056
        %4058 = vadd.xlane.f32.xlu0 %v4038
        %v4059 = vpop.xlane.xlu0 %4058
        %4060 = vadd.xlane.f32.xlu0 %v4039
        %v4061 = vpop.xlane.xlu0 %4060
        %4062 = vadd.xlane.f32.xlu0 %v4040
        %v4063 = vpop.xlane.xlu0 %4062
        %4064 = vadd.xlane.f32.xlu0 %v4041
        %v4065 = vpop.xlane.xlu0 %4064
        %4066 = vadd.xlane.f32.xlu0 %v4042
        %v4067 = vpop.xlane.xlu0 %4066
        %4068 = vadd.xlane.f32.xlu0 %v4043
        %v4069 = vpop.xlane.xlu0 %4068
        %4070 = vadd.xlane.f32.xlu0 %v4044
        %v4071 = vpop.xlane.xlu0 %4070
        %4072 = vadd.xlane.f32.xlu0 %v4045
        %v4073 = vpop.xlane.xlu0 %4072
        %4074 = vadd.xlane.f32.xlu0 %v4046
        %v4075 = vpop.xlane.xlu0 %4074
        %4076 = vadd.xlane.f32.xlu0 %v4047
        %v4077 = vpop.xlane.xlu0 %4076
        %4078 = vadd.xlane.f32.xlu0 %v4048
        %v4079 = vpop.xlane.xlu0 %4078
        %4080 = vadd.xlane.f32.xlu0 %v4049
        %v4081 = vpop.xlane.xlu0 %4080
        %v4082 = vmul.f32 %v4051, %v3219
        %v4083 = vmul.f32 %v4053, %v3219
        %v4084 = vmul.f32 %v4055, %v3219
        %v4085 = vmul.f32 %v4057, %v3219
        %v4086 = vmul.f32 %v4059, %v3219
        %v4087 = vmul.f32 %v4061, %v3219
        %v4088 = vmul.f32 %v4063, %v3219
        %v4089 = vmul.f32 %v4065, %v3219
        %v4090 = vmul.f32 %v4067, %v3219
        %v4091 = vmul.f32 %v4069, %v3219
        %v4092 = vmul.f32 %v4071, %v3219
        %v4093 = vmul.f32 %v4073, %v3219
        %v4094 = vmul.f32 %v4075, %v3219
        %v4095 = vmul.f32 %v4077, %v3219
        %v4096 = vmul.f32 %v4079, %v3219
        %v4097 = vmul.f32 %v4081, %v3219
        %v4098 = vsub.f32 %v4034, %v4082
        %v4099 = vsub.f32 %v4035, %v4083
        %v4100 = vsub.f32 %v4036, %v4084
        %v4101 = vsub.f32 %v4037, %v4085
        %v4102 = vsub.f32 %v4038, %v4086
        %v4103 = vsub.f32 %v4039, %v4087
        %v4104 = vsub.f32 %v4040, %v4088
        %v4105 = vsub.f32 %v4041, %v4089
        %v4106 = vsub.f32 %v4042, %v4090
        %v4107 = vsub.f32 %v4043, %v4091
        %v4108 = vsub.f32 %v4044, %v4092
        %v4109 = vsub.f32 %v4045, %v4093
        %v4110 = vsub.f32 %v4046, %v4094
        %v4111 = vsub.f32 %v4047, %v4095
        %v4112 = vsub.f32 %v4048, %v4096
        %v4113 = vsub.f32 %v4049, %v4097
        %v4114 = vmul.f32 %v4098, %v4098
        %v4115 = vmul.f32 %v4099, %v4099
        %v4116 = vmul.f32 %v4100, %v4100
        %v4117 = vmul.f32 %v4101, %v4101
        %v4118 = vmul.f32 %v4102, %v4102
        %v4119 = vmul.f32 %v4103, %v4103
        %v4120 = vmul.f32 %v4104, %v4104
        %v4121 = vmul.f32 %v4105, %v4105
        %v4122 = vmul.f32 %v4106, %v4106
        %v4123 = vmul.f32 %v4107, %v4107
        %v4124 = vmul.f32 %v4108, %v4108
        %v4125 = vmul.f32 %v4109, %v4109
        %v4126 = vmul.f32 %v4110, %v4110
        %v4127 = vmul.f32 %v4111, %v4111
        %v4128 = vmul.f32 %v4112, %v4112
        %v4129 = vmul.f32 %v4113, %v4113
        %4130 = vadd.xlane.f32.xlu0 %v4114
        %v4131 = vpop.xlane.xlu0 %4130
        %4132 = vadd.xlane.f32.xlu0 %v4115
        %v4133 = vpop.xlane.xlu0 %4132
        %4134 = vadd.xlane.f32.xlu0 %v4116
        %v4135 = vpop.xlane.xlu0 %4134
        %4136 = vadd.xlane.f32.xlu0 %v4117
        %v4137 = vpop.xlane.xlu0 %4136
        %4138 = vadd.xlane.f32.xlu0 %v4118
        %v4139 = vpop.xlane.xlu0 %4138
        %4140 = vadd.xlane.f32.xlu0 %v4119
        %v4141 = vpop.xlane.xlu0 %4140
        %4142 = vadd.xlane.f32.xlu0 %v4120
        %v4143 = vpop.xlane.xlu0 %4142
        %4144 = vadd.xlane.f32.xlu0 %v4121
        %v4145 = vpop.xlane.xlu0 %4144
        %4146 = vadd.xlane.f32.xlu0 %v4122
        %v4147 = vpop.xlane.xlu0 %4146
        %4148 = vadd.xlane.f32.xlu0 %v4123
        %v4149 = vpop.xlane.xlu0 %4148
        %4150 = vadd.xlane.f32.xlu0 %v4124
        %v4151 = vpop.xlane.xlu0 %4150
        %4152 = vadd.xlane.f32.xlu0 %v4125
        %v4153 = vpop.xlane.xlu0 %4152
        %4154 = vadd.xlane.f32.xlu0 %v4126
        %v4155 = vpop.xlane.xlu0 %4154
        %4156 = vadd.xlane.f32.xlu0 %v4127
        %v4157 = vpop.xlane.xlu0 %4156
        %4158 = vadd.xlane.f32.xlu0 %v4128
        %v4159 = vpop.xlane.xlu0 %4158
        %4160 = vadd.xlane.f32.xlu0 %v4129
        %v4161 = vpop.xlane.xlu0 %4160
        %v4162 = vmul.f32 %v4131, %v3219
        %v4163 = vmul.f32 %v4133, %v3219
        %v4164 = vmul.f32 %v4135, %v3219
        %v4165 = vmul.f32 %v4137, %v3219
        %v4166 = vmul.f32 %v4139, %v3219
        %v4167 = vmul.f32 %v4141, %v3219
        %v4168 = vmul.f32 %v4143, %v3219
        %v4169 = vmul.f32 %v4145, %v3219
        %v4170 = vmul.f32 %v4147, %v3219
        %v4171 = vmul.f32 %v4149, %v3219
        %v4172 = vmul.f32 %v4151, %v3219
        %v4173 = vmul.f32 %v4153, %v3219
        %v4174 = vmul.f32 %v4155, %v3219
        %v4175 = vmul.f32 %v4157, %v3219
        %v4176 = vmul.f32 %v4159, %v3219
        %v4177 = vmul.f32 %v4161, %v3219
        %v4178 = vadd.f32 %v4162, 1e-05
        %v4179 = vadd.f32 %v4163, 1e-05
        %v4180 = vadd.f32 %v4164, 1e-05
        %v4181 = vadd.f32 %v4165, 1e-05
        %v4182 = vadd.f32 %v4166, 1e-05
        %v4183 = vadd.f32 %v4167, 1e-05
        %v4184 = vadd.f32 %v4168, 1e-05
        %v4185 = vadd.f32 %v4169, 1e-05
        %v4186 = vadd.f32 %v4170, 1e-05
        %v4187 = vadd.f32 %v4171, 1e-05
        %v4188 = vadd.f32 %v4172, 1e-05
        %v4189 = vadd.f32 %v4173, 1e-05
        %v4190 = vadd.f32 %v4174, 1e-05
        %v4191 = vadd.f32 %v4175, 1e-05
        %v4192 = vadd.f32 %v4176, 1e-05
        %v4193 = vadd.f32 %v4177, 1e-05
        %v4194 = vrsqrt.pop %v4178
        %v4195 = vmul.f32 %v4194, %v4178
        %v4196 = vmul.f32 %v4195, %v4194
        %v4197 = vmul.f32 0.5, %v4196
        %v4198 = vsub.f32 1.5, %v4197
        %v4199 = vmul.f32 %v4194, %v4198
        %vm4200 = vweird.f32 %v4178
        %vm4201 = vweird.f32 %v4194
        %vm4202 = vmor %vm4200, %vm4201
        %v4203 = vsel %vm4202, %v4194, %v4199
        %v4204 = vrsqrt.pop %v4179
        %v4205 = vmul.f32 %v4204, %v4179
        %v4206 = vmul.f32 %v4205, %v4204
        %v4207 = vmul.f32 0.5, %v4206
        %v4208 = vsub.f32 1.5, %v4207
        %v4209 = vmul.f32 %v4204, %v4208
        %vm4210 = vweird.f32 %v4179
        %vm4211 = vweird.f32 %v4204
        %vm4212 = vmor %vm4210, %vm4211
        %v4213 = vsel %vm4212, %v4204, %v4209
        %v4214 = vrsqrt.pop %v4180
        %v4215 = vmul.f32 %v4214, %v4180
        %v4216 = vmul.f32 %v4215, %v4214
        %v4217 = vmul.f32 0.5, %v4216
        %v4218 = vsub.f32 1.5, %v4217
        %v4219 = vmul.f32 %v4214, %v4218
        %vm4220 = vweird.f32 %v4180
        %vm4221 = vweird.f32 %v4214
        %vm4222 = vmor %vm4220, %vm4221
        %v4223 = vsel %vm4222, %v4214, %v4219
        %v4224 = vrsqrt.pop %v4181
        %v4225 = vmul.f32 %v4224, %v4181
        %v4226 = vmul.f32 %v4225, %v4224
        %v4227 = vmul.f32 0.5, %v4226
        %v4228 = vsub.f32 1.5, %v4227
        %v4229 = vmul.f32 %v4224, %v4228
        %vm4230 = vweird.f32 %v4181
        %vm4231 = vweird.f32 %v4224
        %vm4232 = vmor %vm4230, %vm4231
        %v4233 = vsel %vm4232, %v4224, %v4229
        %v4234 = vrsqrt.pop %v4182
        %v4235 = vmul.f32 %v4234, %v4182
        %v4236 = vmul.f32 %v4235, %v4234
        %v4237 = vmul.f32 0.5, %v4236
        %v4238 = vsub.f32 1.5, %v4237
        %v4239 = vmul.f32 %v4234, %v4238
        %vm4240 = vweird.f32 %v4182
        %vm4241 = vweird.f32 %v4234
        %vm4242 = vmor %vm4240, %vm4241
        %v4243 = vsel %vm4242, %v4234, %v4239
        %v4244 = vrsqrt.pop %v4183
        %v4245 = vmul.f32 %v4244, %v4183
        %v4246 = vmul.f32 %v4245, %v4244
        %v4247 = vmul.f32 0.5, %v4246
        %v4248 = vsub.f32 1.5, %v4247
        %v4249 = vmul.f32 %v4244, %v4248
        %vm4250 = vweird.f32 %v4183
        %vm4251 = vweird.f32 %v4244
        %vm4252 = vmor %vm4250, %vm4251
        %v4253 = vsel %vm4252, %v4244, %v4249
        %v4254 = vrsqrt.pop %v4184
        %v4255 = vmul.f32 %v4254, %v4184
        %v4256 = vmul.f32 %v4255, %v4254
        %v4257 = vmul.f32 0.5, %v4256
        %v4258 = vsub.f32 1.5, %v4257
        %v4259 = vmul.f32 %v4254, %v4258
        %vm4260 = vweird.f32 %v4184
        %vm4261 = vweird.f32 %v4254
        %vm4262 = vmor %vm4260, %vm4261
        %v4263 = vsel %vm4262, %v4254, %v4259
        %v4264 = vrsqrt.pop %v4185
        %v4265 = vmul.f32 %v4264, %v4185
        %v4266 = vmul.f32 %v4265, %v4264
        %v4267 = vmul.f32 0.5, %v4266
        %v4268 = vsub.f32 1.5, %v4267
        %v4269 = vmul.f32 %v4264, %v4268
        %vm4270 = vweird.f32 %v4185
        %vm4271 = vweird.f32 %v4264
        %vm4272 = vmor %vm4270, %vm4271
        %v4273 = vsel %vm4272, %v4264, %v4269
        %v4274 = vrsqrt.pop %v4186
        %v4275 = vmul.f32 %v4274, %v4186
        %v4276 = vmul.f32 %v4275, %v4274
        %v4277 = vmul.f32 0.5, %v4276
        %v4278 = vsub.f32 1.5, %v4277
        %v4279 = vmul.f32 %v4274, %v4278
        %vm4280 = vweird.f32 %v4186
        %vm4281 = vweird.f32 %v4274
        %vm4282 = vmor %vm4280, %vm4281
        %v4283 = vsel %vm4282, %v4274, %v4279
        %v4284 = vrsqrt.pop %v4187
        %v4285 = vmul.f32 %v4284, %v4187
        %v4286 = vmul.f32 %v4285, %v4284
        %v4287 = vmul.f32 0.5, %v4286
        %v4288 = vsub.f32 1.5, %v4287
        %v4289 = vmul.f32 %v4284, %v4288
        %vm4290 = vweird.f32 %v4187
        %vm4291 = vweird.f32 %v4284
        %vm4292 = vmor %vm4290, %vm4291
        %v4293 = vsel %vm4292, %v4284, %v4289
        %v4294 = vrsqrt.pop %v4188
        %v4295 = vmul.f32 %v4294, %v4188
        %v4296 = vmul.f32 %v4295, %v4294
        %v4297 = vmul.f32 0.5, %v4296
        %v4298 = vsub.f32 1.5, %v4297
        %v4299 = vmul.f32 %v4294, %v4298
        %vm4300 = vweird.f32 %v4188
        %vm4301 = vweird.f32 %v4294
        %vm4302 = vmor %vm4300, %vm4301
        %v4303 = vsel %vm4302, %v4294, %v4299
        %v4304 = vrsqrt.pop %v4189
        %v4305 = vmul.f32 %v4304, %v4189
        %v4306 = vmul.f32 %v4305, %v4304
        %v4307 = vmul.f32 0.5, %v4306
        %v4308 = vsub.f32 1.5, %v4307
        %v4309 = vmul.f32 %v4304, %v4308
        %vm4310 = vweird.f32 %v4189
        %vm4311 = vweird.f32 %v4304
        %vm4312 = vmor %vm4310, %vm4311
        %v4313 = vsel %vm4312, %v4304, %v4309
        %v4314 = vrsqrt.pop %v4190
        %v4315 = vmul.f32 %v4314, %v4190
        %v4316 = vmul.f32 %v4315, %v4314
        %v4317 = vmul.f32 0.5, %v4316
        %v4318 = vsub.f32 1.5, %v4317
        %v4319 = vmul.f32 %v4314, %v4318
        %vm4320 = vweird.f32 %v4190
        %vm4321 = vweird.f32 %v4314
        %vm4322 = vmor %vm4320, %vm4321
        %v4323 = vsel %vm4322, %v4314, %v4319
        %v4324 = vrsqrt.pop %v4191
        %v4325 = vmul.f32 %v4324, %v4191
        %v4326 = vmul.f32 %v4325, %v4324
        %v4327 = vmul.f32 0.5, %v4326
        %v4328 = vsub.f32 1.5, %v4327
        %v4329 = vmul.f32 %v4324, %v4328
        %vm4330 = vweird.f32 %v4191
        %vm4331 = vweird.f32 %v4324
        %vm4332 = vmor %vm4330, %vm4331
        %v4333 = vsel %vm4332, %v4324, %v4329
        %v4334 = vrsqrt.pop %v4192
        %v4335 = vmul.f32 %v4334, %v4192
        %v4336 = vmul.f32 %v4335, %v4334
        %v4337 = vmul.f32 0.5, %v4336
        %v4338 = vsub.f32 1.5, %v4337
        %v4339 = vmul.f32 %v4334, %v4338
        %vm4340 = vweird.f32 %v4192
        %vm4341 = vweird.f32 %v4334
        %vm4342 = vmor %vm4340, %vm4341
        %v4343 = vsel %vm4342, %v4334, %v4339
        %v4344 = vrsqrt.pop %v4193
        %v4345 = vmul.f32 %v4344, %v4193
        %v4346 = vmul.f32 %v4345, %v4344
        %v4347 = vmul.f32 0.5, %v4346
        %v4348 = vsub.f32 1.5, %v4347
        %v4349 = vmul.f32 %v4344, %v4348
        %vm4350 = vweird.f32 %v4193
        %vm4351 = vweird.f32 %v4344
        %vm4352 = vmor %vm4350, %vm4351
        %v4353 = vsel %vm4352, %v4344, %v4349
        %v4354 = vmul.f32 %v4098, %v4203
        %v4355 = vmul.f32 %v4099, %v4213
        %v4356 = vmul.f32 %v4100, %v4223
        %v4357 = vmul.f32 %v4101, %v4233
        %v4358 = vmul.f32 %v4102, %v4243
        %v4359 = vmul.f32 %v4103, %v4253
        %v4360 = vmul.f32 %v4104, %v4263
        %v4361 = vmul.f32 %v4105, %v4273
        %v4362 = vmul.f32 %v4106, %v4283
        %v4363 = vmul.f32 %v4107, %v4293
        %v4364 = vmul.f32 %v4108, %v4303
        %v4365 = vmul.f32 %v4109, %v4313
        %v4366 = vmul.f32 %v4110, %v4323
        %v4367 = vmul.f32 %v4111, %v4333
        %v4368 = vmul.f32 %v4112, %v4343
        %v4369 = vmul.f32 %v4113, %v4353
        %v4370 = vld [vmem:[%s897] sm:$0x1]
        %v4372 = vperm.slane %v4370, 0
        %v4374 = vmul.f32 %v4354, %v4372
        %v4375 = vmul.f32 %v4355, %v4372
        %v4376 = vmul.f32 %v4356, %v4372
        %v4377 = vmul.f32 %v4357, %v4372
        %v4378 = vmul.f32 %v4358, %v4372
        %v4379 = vmul.f32 %v4359, %v4372
        %v4380 = vmul.f32 %v4360, %v4372
        %v4381 = vmul.f32 %v4361, %v4372
        %v4382 = vmul.f32 %v4362, %v4372
        %v4383 = vmul.f32 %v4363, %v4372
        %v4384 = vmul.f32 %v4364, %v4372
        %v4385 = vmul.f32 %v4365, %v4372
        %v4386 = vmul.f32 %v4366, %v4372
        %v4387 = vmul.f32 %v4367, %v4372
        %v4388 = vmul.f32 %v4368, %v4372
        %v4389 = vmul.f32 %v4369, %v4372
        %v4390 = vld [vmem:[%s900] sm:$0x1]
        %v4392 = vperm.slane %v4390, 0
        %v4394 = vadd.f32 %v4374, %v4392
        %v4395 = vadd.f32 %v4375, %v4392
        %v4396 = vadd.f32 %v4376, %v4392
        %v4397 = vadd.f32 %v4377, %v4392
        %v4398 = vadd.f32 %v4378, %v4392
        %v4399 = vadd.f32 %v4379, %v4392
        %v4400 = vadd.f32 %v4380, %v4392
        %v4401 = vadd.f32 %v4381, %v4392
        %v4402 = vadd.f32 %v4382, %v4392
        %v4403 = vadd.f32 %v4383, %v4392
        %v4404 = vadd.f32 %v4384, %v4392
        %v4405 = vadd.f32 %v4385, %v4392
        %v4406 = vadd.f32 %v4386, %v4392
        %v4407 = vadd.f32 %v4387, %v4392
        %v4408 = vadd.f32 %v4388, %v4392
        %v4409 = vadd.f32 %v4389, %v4392
        %4410 = vst [vmem:[#allocation2] sm:$0xff] %v4394
        %4411 = vst [vmem:[#allocation2 + $0x8] sm:$0xff] %v4395
        %4412 = vst [vmem:[#allocation2 + $0x10] sm:$0xff] %v4396
        %4413 = vst [vmem:[#allocation2 + $0x18] sm:$0xff] %v4397
        %4414 = vst [vmem:[#allocation2 + $0x20] sm:$0xff] %v4398
        %4415 = vst [vmem:[#allocation2 + $0x28] sm:$0xff] %v4399
        %4416 = vst [vmem:[#allocation2 + $0x30] sm:$0xff] %v4400
        %4417 = vst [vmem:[#allocation2 + $0x38] sm:$0xff] %v4401
        %4418 = vst [vmem:[#allocation2 + $0x40] sm:$0xff] %v4402
        %4419 = vst [vmem:[#allocation2 + $0x48] sm:$0xff] %v4403
        %4420 = vst [vmem:[#allocation2 + $0x50] sm:$0xff] %v4404
        %4421 = vst [vmem:[#allocation2 + $0x58] sm:$0xff] %v4405
        %4422 = vst [vmem:[#allocation2 + $0x60] sm:$0xff] %v4406
        %4423 = vst [vmem:[#allocation2 + $0x68] sm:$0xff] %v4407
        %4424 = vst [vmem:[#allocation2 + $0x70] sm:$0xff] %v4408
        %4425 = vst [vmem:[#allocation2 + $0x78] sm:$0xff] %v4409
        %p4426 = scmp.eq.s32.totalorder %s35, 1
        // Predicated region
        $region129: #{tpu_custom_call.1} parent=83 // pred_check
          %p4427 = pneg %p4426
        $region130: #{tpu_custom_call.1} parent=83 // pred_check_branch
          %4429 = sbr.rel (%p4427) target = $region132
        $region131: #{tpu_custom_call.1} parent=83 // pred_region
          %v4430 = vld [vmem:[#allocation2] ss:$8 sm:$0xf]
          %v4431 = vld [vmem:[#allocation2] ss:$8 sm:$0xf0]
          %v4432 = vor.u32 %v4430, %v4431
          %s4433 = scalar_lea.vmem [#allocation2], 64
          %v4434 = vld [vmem:[%s4433] ss:$8 sm:$0xf]
          %v4435 = vld [vmem:[%s4433] ss:$8 sm:$0xf0]
          %v4436 = vor.u32 %v4434, %v4435
          %v4437 = vpack.c.bf16 %v4436, %v4432
          %v4438 = vld [vmem:[#allocation15] sm:$0xf]
          %v4439 = vld [vmem:[#allocation15 + $0x4] sm:$0xf]
          %v4440 = vld [vmem:[#allocation15 + $0x8] sm:$0xf]
          %v4441 = vld [vmem:[#allocation15 + $0xc] sm:$0xf]
          %v4442 = vld [vmem:[#allocation15 + $0x10] sm:$0xf]
          %v4443 = vld [vmem:[#allocation15 + $0x14] sm:$0xf]
          %v4444 = vld [vmem:[#allocation15 + $0x18] sm:$0xf]
          %v4445 = vld [vmem:[#allocation15 + $0x1c] sm:$0xf]
          %v4446 = vld [vmem:[#allocation15 + $0x20] sm:$0xf]
          %v4447 = vld [vmem:[#allocation15 + $0x24] sm:$0xf]
          %v4448 = vld [vmem:[#allocation15 + $0x28] sm:$0xf]
          %v4449 = vld [vmem:[#allocation15 + $0x2c] sm:$0xf]
          %v4450 = vld [vmem:[#allocation15 + $0x30] sm:$0xf]
          %v4451 = vld [vmem:[#allocation15 + $0x34] sm:$0xf]
          %v4452 = vld [vmem:[#allocation15 + $0x38] sm:$0xf]
          %v4453 = vld [vmem:[#allocation15 + $0x3c] sm:$0xf]
          %v4454 = vld [vmem:[%s15] sm:$0x1]
          %v4456 = vperm.slane %v4454, 0
          %v4474 = vunpack.c.l.b16 %v4438
          %v4475 = vunpack.c.l.b16 %v4439
          %v4476 = vunpack.c.l.b16 %v4440
          %v4477 = vunpack.c.l.b16 %v4441
          %v4478 = vunpack.c.l.b16 %v4442
          %v4479 = vunpack.c.l.b16 %v4443
          %v4480 = vunpack.c.l.b16 %v4444
          %v4481 = vunpack.c.l.b16 %v4445
          %v4482 = vunpack.c.l.b16 %v4446
          %v4483 = vunpack.c.l.b16 %v4447
          %v4484 = vunpack.c.l.b16 %v4448
          %v4485 = vunpack.c.l.b16 %v4449
          %v4486 = vunpack.c.l.b16 %v4450
          %v4487 = vunpack.c.l.b16 %v4451
          %v4488 = vunpack.c.l.b16 %v4452
          %v4489 = vunpack.c.l.b16 %v4453
          %v4490 = vpack.c.b16 %v4475, %v4474
          %v4491 = vpack.c.b16 %v4477, %v4476
          %v4492 = vpack.c.b16 %v4479, %v4478
          %v4493 = vpack.c.b16 %v4481, %v4480
          %v4494 = vpack.c.b16 %v4483, %v4482
          %v4495 = vpack.c.b16 %v4485, %v4484
          %v4496 = vpack.c.b16 %v4487, %v4486
          %v4497 = vpack.c.b16 %v4489, %v4488
          %4506 = vmatpush.bf16.msra.mxu0 %v4497
          %4507 = vmatpush.bf16.msra.mxu0 %v4496
          %4508 = vmatpush.bf16.msra.mxu0 %v4495
          %4509 = vmatpush.bf16.msra.mxu0 %v4494
          %4510 = vmatpush.bf16.msra.mxu0 %v4493
          %4511 = vmatpush.bf16.msra.mxu0 %v4492
          %4512 = vmatpush.bf16.msra.mxu0 %v4491
          %4513 = vmatpush.bf16.msra.mxu0 %v4490
          %4514 = vmatmul.bf16.gmra.mxu0 %v4437
          %v4515 = vpop.f32.mrf.mxu0
          %v4516 = vadd.f32 %v4456, %v4515
          %v4517 = vpop.f32.mrf.mxu0
          %v4518 = vadd.f32 %v4456, %v4517
          %4519 = vdwg.mxu0
          %4520 = vst [vmem:[#allocation16] sm:$0xff] %v4516
          %4521 = vst [vmem:[#allocation16 + $0x8] sm:$0xff] %v4518
        $region132: #{tpu_custom_call.1} parent=83 // pred_fallthru
          _
        // Predicated region
        $region133: #{tpu_custom_call.1} parent=83 // pred_check
          %p4522 = pneg %p466
        $region134: #{tpu_custom_call.1} parent=83 // pred_check_branch
          %4524 = sbr.rel (%p4522) target = $region136
        $region135: #{tpu_custom_call.1} parent=83 // pred_region
          %s4525 = smul.u32 2, %s34
          %4527 = vsyncadd [#allocation5], 0
          %s4528 = smul.addr %s4525, 8
          %s4529 = scalar_lea.hbm %s16, %s4528
          %s4530 = sshll.u32 [#allocation16], 4
          %s4531 = int_to_ptr.vmem [resolvable:$true] %s4530
          %s4532 = sshll.u32 %s4529, 4
          %s4533 = int_to_ptr.hbm [resolvable:$true] %s4532
          %4538 = dma.vmem_to_hbm [thread:$0]  %s4531, 256, %s4533, [#allocation5], 128, 128, 8
        $region136: #{tpu_custom_call.1} parent=83 // pred_fallthru
          _
        // Predicated region
        $region137: #{tpu_custom_call.1} parent=83 // pred_check
          %p4539 = pneg %p466
        $region138: #{tpu_custom_call.1} parent=83 // pred_check_branch
          %4541 = sbr.rel (%p4539) target = $region140
        $region139: #{tpu_custom_call.1} parent=83 // pred_region
          %4543 = dma.done [#allocation5], 256
        $region140: #{tpu_custom_call.1} parent=83 // pred_fallthru
          _
      $region84: #{tpu_custom_call.1} parent=5 // pred_fallthru
        _
      %p4544 = scmp.le.s32.totalorder 2, %s25
      // Predicated region
      $region141: #{tpu_custom_call.1} parent=5 // pred_check
        %p4545 = pneg %p4544
      $region142: #{tpu_custom_call.1} parent=5 // pred_check_branch
        %4547 = sbr.rel (%p4545) target = $region144
      $region143: #{tpu_custom_call.1} parent=5 // pred_region
        %s4548 = ssub.s32 %s25, 2
      $region144: #{tpu_custom_call.1} parent=5 // pred_fallthru
        _
    $region6: #{tpu_custom_call.1} parent=1 // loop_footer
      %s29 = sadd.s32 1, %s25
    $region7: #{tpu_custom_call.1} parent=1 // loop_footer_branch
      %24 = sbr.rel target = $region3
    $region8: #{tpu_custom_call.1} parent=1 // loop_exit
      _
    %4549 = vsyncpa [#allocation4], 1
    %s4550 = scalar_lea.sflag [#allocation4], 1
    %4551 = vsyncpa %s4550, 1
    %4552 = vsyncpa [#allocation7], 1
    %4553 = vsyncpa [#allocation5], 1
    %s4554 = scalar_lea.sflag [#allocation5], 1
    %4555 = vsyncpa %s4554, 1

</llo_original>
